<compile_context>
chip_gen: v6e
topology: v6e:2x2x1
jax: 0.10.0
libtpu: 0.0.40
codegen_flags: <defaults>
</compile_context>

<pallas_src>
import functools

import jax
import jax.numpy as jnp
from jax.experimental import pallas as pl
from jax.experimental.pallas import tpu as pltpu

# ----------------------------- problem sizes -----------------------------
NUM_CLASSES = 34          # from label_init(): 15 B- + 15 I- + O + [CLS] + [SEP] + [PAD]
C_PAD = 128               # classes padded to one lane-width
P_DROP = 0.1
DROP_THRESH = int(P_DROP * (2 ** 32))   # keep iff hashed uint32 bits >= thresh


def _round_up(x, m):
    return (x + m - 1) // m * m


def _dropout_keep(shape, row_offset, n_cols, seed):
    """Counter-based hash dropout keep-mask (True = keep).

    Pure jnp integer ops (iota, mul, xor, shift, compare) so it lowers both
    through Mosaic on TPU and through the Pallas interpreter — the hardware
    PRNG primitives (pltpu.prng_seed / prng_random_bits) have no CPU lowering.
    Deterministic per (global element index, seed), independent of tiling.
    """
    r = jax.lax.broadcasted_iota(jnp.int32, shape, 0) + row_offset
    c = jax.lax.broadcasted_iota(jnp.int32, shape, 1)
    z = (r * n_cols + c).astype(jnp.uint32)
    z = z + jnp.uint32((int(seed) * 2654435761) & 0xFFFFFFFF)
    # murmur3 finalizer
    z = z ^ (z >> 16)
    z = z * jnp.uint32(0x85EBCA6B)
    z = z ^ (z >> 13)
    z = z * jnp.uint32(0xC2B2AE35)
    z = z ^ (z >> 16)
    return z >= jnp.uint32(DROP_THRESH)


def _svm_kernel(x_ref, w_ref, b_ref, y_ref, preds_ref, lpart_ref, *,
                seed, tm, hidden, n_valid):
    i = pl.program_id(0)
    row0 = i * tm

    # ---- dropout (inverted dropout; the 1/(1-p) rescale is folded into W) ----
    x = x_ref[...]                                            # (tm, H) bf16
    keep = _dropout_keep((tm, hidden), row0, hidden, seed)
    x = jnp.where(keep, x, 0).astype(x_ref.dtype)

    # ---- linear SVM scores on the MXU: bf16 x bf16 -> f32 accumulate ----
    scores = jnp.dot(x, w_ref[...], preferred_element_type=jnp.float32)
    scores = scores + b_ref[...]                              # (tm, C_PAD) f32

    cls = jax.lax.broadcasted_iota(jnp.int32, (tm, C_PAD), 1)
    rows = jax.lax.broadcasted_iota(jnp.int32, (tm, C_PAD), 0) + row0
    valid_cls = cls < NUM_CLASSES
    valid_row = rows < n_valid                                # mask padded tokens

    # ---- predict_index: argmax over real classes (first max on ties),
    #      stored lane-dense as one (1, tm) row per block ----
    masked = jnp.where(valid_cls, scores, jnp.float32(-1e30))
    smax = jnp.max(masked, axis=-1, keepdims=True)            # (tm, 1)
    first_max = jnp.where(masked >= smax, cls, C_PAD)
    preds = jnp.min(first_max, axis=-1)                       # (tm,) int32
    preds_ref[...] = preds[None, :].astype(jnp.int32)         # (1, tm)

    # ---- multi-class (Weston-Watkins) hinge loss, C=0.0 -> no weight penalty.
    #      Per-block per-class partial sums (lane-dense (1, C_PAD)); the final
    #      reduce + single /N divide happen in JAX so the grid is race-free
    #      under "parallel" semantics (v7x dual TensorCore). ----
    y = y_ref[...]                                            # (tm, 1) int32
    onehot = (cls == y).astype(jnp.float32)
    s_y = jnp.sum(scores * onehot, axis=-1, keepdims=True)    # (tm, 1)
    margins = jnp.maximum(jnp.float32(0.0), 1.0 + scores - s_y)
    margins = jnp.where(valid_cls & valid_row & (cls != y), margins,
                        jnp.float32(0.0))
    lpart_ref[...] = jnp.sum(margins, axis=0, keepdims=True)  # (1, C_PAD)


def svm_head_forward(x, labels, w, b, seed=0, *, tm=None):
    """x: (B, S, H) f32/bf16 'sentence_output'; labels: (B, S) int.
    w: (H, num_classes); b: (1, num_classes) or (num_classes,).

    Returns (loss scalar f32, predict_index (B, S) int32)."""
    B, S, H = x.shape
    N = B * S
    NC = w.shape[1]
    assert NC <= C_PAD

    # Mem-bound kernel: use big row tiles (default 1024) when N allows.
    if tm is None:
        tm = 1024 if N >= 1024 else _round_up(N, 8)
    tm = max(8, _round_up(min(tm, _round_up(N, 8)), 8))
    n_pad = _round_up(N, tm)
    g = n_pad // tm

    # x is ~all of the HBM traffic -> feed it as bf16 (in production the BERT
    # encoder would emit bf16 directly; this cast stands in for that).
    x2 = x.reshape(N, H).astype(jnp.bfloat16)
    y2 = labels.reshape(N, 1).astype(jnp.int32)
    if n_pad != N:
        x2 = jnp.pad(x2, ((0, n_pad - N), (0, 0)))
        y2 = jnp.pad(y2, ((0, n_pad - N), (0, 0)))

    # Fold the dropout 1/(1-p) rescale into W once; pad classes to a lane width.
    w_s = (w.astype(jnp.float32) / (1.0 - P_DROP)).astype(jnp.bfloat16)
    w_p = jnp.zeros((H, C_PAD), jnp.bfloat16).at[:, :NC].set(w_s)
    b_p = jnp.zeros((1, C_PAD), jnp.float32).at[:, :NC].set(
        jnp.asarray(b, jnp.float32).reshape(1, NC))

    kernel = functools.partial(_svm_kernel, seed=int(seed), tm=tm,
                               hidden=H, n_valid=N)

    bytes_accessed = (n_pad * H * 2 + H * C_PAD * 2 + C_PAD * 4 +
                      n_pad * 4 + g * tm * 4 + g * C_PAD * 4)

    preds_blk, loss_parts = pl.pallas_call(
        kernel,
        out_shape=(
            jax.ShapeDtypeStruct((g, tm), jnp.int32),        # predict_index rows
            jax.ShapeDtypeStruct((g, C_PAD), jnp.float32),   # hinge partial sums
        ),
        grid=(g,),
        in_specs=[
            pl.BlockSpec((tm, H), lambda i: (i, 0)),         # hidden states (bf16)
            pl.BlockSpec((H, C_PAD), lambda i: (0, 0)),      # SVM weight (resident)
            pl.BlockSpec((1, C_PAD), lambda i: (0, 0)),      # SVM bias (resident)
            pl.BlockSpec((tm, 1), lambda i: (i, 0)),         # labels
        ],
        out_specs=(
            pl.BlockSpec((1, tm), lambda i: (i, 0)),         # lane-dense preds
            pl.BlockSpec((1, C_PAD), lambda i: (i, 0)),      # lane-dense loss parts
        ),
        compiler_params=pltpu.CompilerParams(
            dimension_semantics=("parallel",),               # no cross-block accumulator
            vmem_limit_bytes=48 * 1024 * 1024,
        ),
        cost_estimate=pl.CostEstimate(
            flops=2 * n_pad * H * C_PAD,
            transcendentals=0,
            bytes_accessed=bytes_accessed,
        ),
    )(x2, w_p, b_p, y2)

    loss = jnp.sum(loss_parts) / jnp.float32(N)
    preds = preds_blk.reshape(-1)[:N].reshape(B, S)
    return loss, preds


def ner_bert_svm_forward(sentence_output, labels, w, b, seed=0):
    """Mirrors NERBertSVM.forward post-BERT: dropout -> svm.forward (loss) and
    svm.predict_index (argmax on the same dropout output). Returns
    (loss, labels, outputs)."""
    # TODO(synk): tokenizer, KoBERT encoder and tagging() are external model
    # components with no Pallas equivalent; `sentence_output`/`labels` stand in
    # for their outputs.
    loss, preds = svm_head_forward(sentence_output, labels, w, b, seed)
    return loss, labels, preds


def _reference_forward(x, labels, w, b, seed=0):
    """Pure-JAX reference of the SVM head (same hash dropout), for checking."""
    B, S, H = x.shape
    N = B * S
    xb = x.reshape(N, H).astype(jnp.bfloat16)
    keep = _dropout_keep((N, H), 0, H, int(seed))
    xd = jnp.where(keep, xb, 0).astype(jnp.bfloat16)
    w_s = (w.astype(jnp.float32) / (1.0 - P_DROP)).astype(jnp.bfloat16)
    scores = jnp.dot(xd, w_s, preferred_element_type=jnp.float32)
    scores = scores + jnp.asarray(b, jnp.float32).reshape(1, -1)
    preds = jnp.argmax(scores, axis=-1).astype(jnp.int32)
    onehot = jax.nn.one_hot(labels.reshape(N), w.shape[1], dtype=jnp.float32)
    s_y = jnp.sum(scores * onehot, axis=-1, keepdims=True)
    margins = jnp.maximum(0.0, 1.0 + scores - s_y)
    margins = jnp.where(onehot > 0, 0.0, margins)
    loss = jnp.sum(margins) / jnp.float32(N)
    return loss, preds.reshape(B, S)


if __name__ == "__main__":
    key = jax.random.PRNGKey(0)
    k_x, k_y, k_w, k_b = jax.random.split(key, 4)

    B, S, H = 2, 96, 256          # small synthetic "BERT" output (H=768 in prod)
    x = jax.random.normal(k_x, (B, S, H), dtype=jnp.float32)
    labels = jax.random.randint(k_y, (B, S), 0, NUM_CLASSES, dtype=jnp.int32)
    w = 0.05 * jax.random.normal(k_w, (H, NUM_CLASSES), dtype=jnp.float32)
    b = 0.01 * jax.random.normal(k_b, (1, NUM_CLASSES), dtype=jnp.float32)

    # Default (single big row tile).
    loss, labels_out, preds = ner_bert_svm_forward(x, labels, w, b, seed=0)
    jax.block_until_ready((loss, labels_out, preds))

    # Multi-block + row-padding path (N=192, tm=80 -> grid=3, 48 padded rows).
    loss2, preds2 = svm_head_forward(x, labels, w, b, seed=0, tm=80)
    jax.block_until_ready((loss2, preds2))

    ref_loss, ref_preds = _reference_forward(x, labels, w, b, seed=0)

    assert preds.shape == (B, S) and preds.dtype == jnp.int32
    assert labels_out.shape == (B, S)
    assert loss.shape == () and bool(jnp.isfinite(loss))
    assert int(jnp.min(preds)) >= 0 and int(jnp.max(preds)) < NUM_CLASSES
    assert bool(jnp.allclose(loss, loss2, rtol=1e-3, atol=1e-3))
    assert bool(jnp.allclose(loss, ref_loss, rtol=5e-2, atol=5e-2))
    assert float(jnp.mean((preds == preds2).astype(jnp.float32))) >= 0.99
    assert float(jnp.mean((preds == ref_preds).astype(jnp.float32))) >= 0.98

    print("KERNEL_OK")
</pallas_src>

<mosaic_0001>
module attributes {stable_mosaic.version = 11 : i64} {
  func.func @_svm_kernel(%arg0: i32, %arg1: memref<192x256xbf16, #tpu.memory_space<vmem>>, %arg2: memref<256x128xbf16, #tpu.memory_space<vmem>>, %arg3: memref<1x128xf32, #tpu.memory_space<vmem>>, %arg4: memref<192x1xi32, #tpu.memory_space<vmem>>, %arg5: memref<1x192xi32, #tpu.memory_space<vmem>>, %arg6: memref<1x128xf32, #tpu.memory_space<vmem>>) attributes {dimension_semantics = [#tpu.dimension_semantics<parallel>], iteration_bounds = array<i64: 1>, scalar_prefetch = 0 : i64, scratch_operands = 0 : i64, tpu.core_type = #tpu.core_type<tc>, window_params = [{transform_indices = @transform_0, window_bounds = array<i64: 192, 256>}, {pipeline_mode = #tpu.pipeline_mode<synchronous>, transform_indices = @transform_1, window_bounds = array<i64: 256, 128>}, {pipeline_mode = #tpu.pipeline_mode<synchronous>, transform_indices = @transform_2, window_bounds = array<i64: 1, 128>}, {transform_indices = @transform_3, window_bounds = array<i64: 192, 1>}, {transform_indices = @transform_4, window_bounds = array<i64: 1, 192>}, {transform_indices = @transform_5, window_bounds = array<i64: 1, 128>}]} {
    %c192_i32 = arith.constant 192 : i32
    %0 = arith.muli %arg0, %c192_i32 : i32
    %c0 = arith.constant 0 : index
    %c0_0 = arith.constant 0 : index
    %1 = vector.load %arg1[%c0, %c0_0] : memref<192x256xbf16, #tpu.memory_space<vmem>>, vector<192x256xbf16>
    %2 = tpu.iota {dimensions = array<i32: 0>} : vector<192x256xi32>
    %3 = vector.broadcast %0 : i32 to vector<192x256xi32>
    %4 = arith.addi %2, %3 : vector<192x256xi32>
    %5 = tpu.iota {dimensions = array<i32: 1>} : vector<192x256xi32>
    %c256_i32 = arith.constant 256 : i32
    %6 = vector.broadcast %c256_i32 : i32 to vector<192x256xi32>
    %7 = arith.muli %4, %6 : vector<192x256xi32>
    %8 = arith.addi %7, %5 : vector<192x256xi32>
    %c0_i32 = arith.constant 0 : i32
    %9 = vector.broadcast %c0_i32 : i32 to vector<192x256xi32>
    %10 = arith.addi %8, %9 : vector<192x256xi32>
    %c16_i32 = arith.constant 16 : i32
    %11 = vector.broadcast %c16_i32 : i32 to vector<192x256xi32>
    %12 = arith.shrui %10, %11 : vector<192x256xi32>
    %13 = arith.xori %10, %12 : vector<192x256xi32>
    %c-2048144789_i32 = arith.constant -2048144789 : i32
    %14 = vector.broadcast %c-2048144789_i32 : i32 to vector<192x256xi32>
    %15 = arith.muli %13, %14 : vector<192x256xi32>
    %c13_i32 = arith.constant 13 : i32
    %16 = vector.broadcast %c13_i32 : i32 to vector<192x256xi32>
    %17 = arith.shrui %15, %16 : vector<192x256xi32>
    %18 = arith.xori %15, %17 : vector<192x256xi32>
    %c-1028477387_i32 = arith.constant -1028477387 : i32
    %19 = vector.broadcast %c-1028477387_i32 : i32 to vector<192x256xi32>
    %20 = arith.muli %18, %19 : vector<192x256xi32>
    %c16_i32_1 = arith.constant 16 : i32
    %21 = vector.broadcast %c16_i32_1 : i32 to vector<192x256xi32>
    %22 = arith.shrui %20, %21 : vector<192x256xi32>
    %23 = arith.xori %20, %22 : vector<192x256xi32>
    %c429496729_i32 = arith.constant 429496729 : i32
    %24 = vector.broadcast %c429496729_i32 : i32 to vector<192x256xi32>
    %25 = arith.cmpi uge, %23, %24 : vector<192x256xi32>
    %c0_i32_2 = arith.constant 0 : i32
    %26 = arith.sitofp %c0_i32_2 : i32 to bf16
    %27 = vector.broadcast %26 : bf16 to vector<192x256xbf16>
    %28 = arith.select %25, %1, %27 : vector<192x256xi1>, vector<192x256xbf16>
    %c0_3 = arith.constant 0 : index
    %c0_4 = arith.constant 0 : index
    %29 = vector.load %arg2[%c0_3, %c0_4] : memref<256x128xbf16, #tpu.memory_space<vmem>>, vector<256x128xbf16>
    %cst = arith.constant dense<0.000000e+00> : vector<192x128xf32>
    %30 = tpu.matmul %28, %29, %cst {dimension_numbers = #tpu.dot_dimension_numbers<[1], [0], [0], [1], [0, 0, 1, 1], [], []>} : vector<192x256xbf16>, vector<256x128xbf16>, vector<192x128xf32> -> vector<192x128xf32>
    %c0_5 = arith.constant 0 : index
    %c0_6 = arith.constant 0 : index
    %31 = vector.load %arg3[%c0_5, %c0_6] : memref<1x128xf32, #tpu.memory_space<vmem>>, vector<1x128xf32>
    %32 = vector.broadcast %31 : vector<1x128xf32> to vector<192x128xf32>
    %33 = arith.addf %30, %32 : vector<192x128xf32>
    %34 = tpu.iota {dimensions = array<i32: 1>} : vector<192x128xi32>
    %35 = tpu.iota {dimensions = array<i32: 0>} : vector<192x128xi32>
    %36 = vector.broadcast %0 : i32 to vector<192x128xi32>
    %37 = arith.addi %35, %36 : vector<192x128xi32>
    %c34_i32 = arith.constant 34 : i32
    %38 = vector.broadcast %c34_i32 : i32 to vector<192x128xi32>
    %39 = arith.cmpi slt, %34, %38 : vector<192x128xi32>
    %c192_i32_7 = arith.constant 192 : i32
    %40 = vector.broadcast %c192_i32_7 : i32 to vector<192x128xi32>
    %41 = arith.cmpi slt, %37, %40 : vector<192x128xi32>
    %cst_8 = arith.constant -1.000000e+30 : f32
    %42 = vector.broadcast %cst_8 : f32 to vector<192x128xf32>
    %43 = arith.select %39, %33, %42 : vector<192x128xi1>, vector<192x128xf32>
    %cst_9 = arith.constant dense<0xFF800000> : vector<192xf32>
    %44 = vector.multi_reduction <maximumf>, %43, %cst_9 [1] : vector<192x128xf32> to vector<192xf32>
    %45 = vector.shape_cast %44 : vector<192xf32> to vector<192x1xf32>
    %46 = vector.broadcast %45 : vector<192x1xf32> to vector<192x128xf32>
    %47 = arith.cmpf oge, %43, %46 : vector<192x128xf32>
    %c128_i32 = arith.constant 128 : i32
    %48 = vector.broadcast %c128_i32 : i32 to vector<192x128xi32>
    %49 = arith.select %47, %34, %48 : vector<192x128xi1>, vector<192x128xi32>
    %cst_10 = arith.constant dense<2147483647> : vector<192xi32>
    %50 = vector.multi_reduction <minsi>, %49, %cst_10 [1] : vector<192x128xi32> to vector<192xi32>
    %51 = vector.shape_cast %50 : vector<192xi32> to vector<1x192xi32>
    %c0_11 = arith.constant 0 : index
    %c0_12 = arith.constant 0 : index
    %52 = vector.load %arg5[%c0_11, %c0_12] : memref<1x192xi32, #tpu.memory_space<vmem>>, vector<1x192xi32>
    tpu.vector_store %arg5[%c0_11, %c0_12], %51 {strides = array<i32>} : memref<1x192xi32, #tpu.memory_space<vmem>>, vector<1x192xi32>,
    %c0_13 = arith.constant 0 : index
    %c0_14 = arith.constant 0 : index
    %53 = vector.load %arg4[%c0_13, %c0_14] : memref<192x1xi32, #tpu.memory_space<vmem>>, vector<192x1xi32>
    %54 = vector.broadcast %53 : vector<192x1xi32> to vector<192x128xi32>
    %55 = arith.cmpi eq, %34, %54 : vector<192x128xi32>
    %56 = arith.extui %55 : vector<192x128xi1> to vector<192x128xi32>
    %57 = arith.sitofp %56 : vector<192x128xi32> to vector<192x128xf32>
    %58 = arith.mulf %33, %57 : vector<192x128xf32>
    %cst_15 = arith.constant dense<0.000000e+00> : vector<192xf32>
    %59 = vector.multi_reduction <add>, %58, %cst_15 [1] : vector<192x128xf32> to vector<192xf32>
    %60 = vector.shape_cast %59 : vector<192xf32> to vector<192x1xf32>
    %cst_16 = arith.constant 1.000000e+00 : f32
    %61 = vector.broadcast %cst_16 : f32 to vector<192x128xf32>
    %62 = arith.addf %61, %33 : vector<192x128xf32>
    %63 = vector.broadcast %60 : vector<192x1xf32> to vector<192x128xf32>
    %64 = arith.subf %62, %63 : vector<192x128xf32>
    %cst_17 = arith.constant 0.000000e+00 : f32
    %65 = vector.broadcast %cst_17 : f32 to vector<192x128xf32>
    %66 = arith.maximumf %65, %64 : vector<192x128xf32>
    %67 = arith.andi %39, %41 : vector<192x128xi1>
    %68 = vector.broadcast %53 : vector<192x1xi32> to vector<192x128xi32>
    %69 = arith.cmpi ne, %34, %68 : vector<192x128xi32>
    %70 = arith.andi %67, %69 : vector<192x128xi1>
    %cst_18 = arith.constant 0.000000e+00 : f32
    %71 = vector.broadcast %cst_18 : f32 to vector<192x128xf32>
    %72 = arith.select %70, %66, %71 : vector<192x128xi1>, vector<192x128xf32>
    %cst_19 = arith.constant dense<0.000000e+00> : vector<128xf32>
    %73 = vector.multi_reduction <add>, %72, %cst_19 [0] : vector<192x128xf32> to vector<128xf32>
    %74 = vector.shape_cast %73 : vector<128xf32> to vector<1x128xf32>
    %c0_20 = arith.constant 0 : index
    %c0_21 = arith.constant 0 : index
    %75 = vector.load %arg6[%c0_20, %c0_21] : memref<1x128xf32, #tpu.memory_space<vmem>>, vector<1x128xf32>
    tpu.vector_store %arg6[%c0_20, %c0_21], %74 {strides = array<i32>} : memref<1x128xf32, #tpu.memory_space<vmem>>, vector<1x128xf32>,
    return
  }
  func.func @transform_0(%arg0: i32) -> (i32, i32) {
    %c0_i32 = arith.constant 0 : i32
    %c0_i32_0 = arith.constant 0 : i32
    return %arg0, %c0_i32 : i32, i32
  }
  func.func @transform_1(%arg0: i32) -> (i32, i32) {
    %c0_i32 = arith.constant 0 : i32
    %c0_i32_0 = arith.constant 0 : i32
    %c0_i32_1 = arith.constant 0 : i32
    return %c0_i32, %c0_i32_0 : i32, i32
  }
  func.func @transform_2(%arg0: i32) -> (i32, i32) {
    %c0_i32 = arith.constant 0 : i32
    %c0_i32_0 = arith.constant 0 : i32
    %c0_i32_1 = arith.constant 0 : i32
    return %c0_i32, %c0_i32_0 : i32, i32
  }
  func.func @transform_3(%arg0: i32) -> (i32, i32) {
    %c0_i32 = arith.constant 0 : i32
    %c0_i32_0 = arith.constant 0 : i32
    return %arg0, %c0_i32 : i32, i32
  }
  func.func @transform_4(%arg0: i32) -> (i32, i32) {
    %c0_i32 = arith.constant 0 : i32
    %c0_i32_0 = arith.constant 0 : i32
    return %arg0, %c0_i32 : i32, i32
  }
  func.func @transform_5(%arg0: i32) -> (i32, i32) {
    %c0_i32 = arith.constant 0 : i32
    %c0_i32_0 = arith.constant 0 : i32
    return %arg0, %c0_i32 : i32, i32
  }
}

</mosaic_0001>

<llo_original>
// kernel: tpu_custom_call.1
$region0: #{tpu_custom_call.1}
  #allocation0 [shape = 'u32[]', space=smem, size = 0x4, offset = 0x4, fixed_abs, tag = 'smem constant byte address 0x4 - core index']
  #allocation1 [shape = 'u32[144,128]{1,0:T(1,128)}', space=vmem, size = 0x12000, scoped, tag = 'internal scratch']
  %s0 = inlined_call_operand.vmem [shape: bf16[192,256], index: 0, kind: input, shape index: {}]
  %s1 = inlined_call_operand.hbm [shape: bf16[256,128], index: 1, kind: input, shape index: {}]
  %s2 = inlined_call_operand.vmem [shape: f32[1,128], index: 2, kind: input, shape index: {}]
  %s3 = inlined_call_operand.vmem [shape: s32[192,1], index: 3, kind: input, shape index: {}]
  %s4 = inlined_call_operand.hbm [shape: s32[1,192], index: 4, kind: output, shape index: {0}]
  %s5 = inlined_call_operand.hbm [shape: f32[1,128], index: 5, kind: output, shape index: {1}]
  %6 = xla_tuple %s4, %s5
  %s7 = sld [smem:[#allocation0]]
  $region38: #{tpu_custom_call.1} parent=0
    _
  %s9 = ssub.s32 1, %s7
  %s10 = scalar_select 0, %s9, %s7
  $region1: #{tpu_custom_call.1} parent=0
    #allocation2 [shape = 'u8[65536]{0}', space=vmem, size = 0x10000, scoped, tag = 'input window, operand 1, single buffered']
    #allocation3 [shape = 's32[1]{0}', space=sflag, size = 0x4, scoped, tag = 'scoped memory for tpu_custom_call.1']
    #allocation4 [shape = 's32[1]{0}', space=sflag, size = 0x4, scoped, tag = 'scoped memory for tpu_custom_call.1']
    #allocation5 [shape = 'u8[1024]{0}', space=vmem, size = 0x400, scoped, tag = 'output window, operand 0, single buffered']
    #allocation6 [shape = 'u8[512]{0}', space=vmem, size = 0x400, scoped, tag = 'output window, operand 1, single buffered']
    #allocation7 [shape = 's32[1]{0}', space=sflag, size = 0x4, scoped, tag = 'scoped memory for tpu_custom_call.1']
    %11 = vsyncpa [#allocation3], 0
    %12 = vsyncpa [#allocation4], 0
    %13 = vsyncpa [#allocation7], 0
    // Predicated region
    $region2: #{tpu_custom_call.1} parent=1 // pred_check
      _
    $region3: #{tpu_custom_call.1} parent=1 // pred_check_branch
      %15 = sbr.rel (0) target = $region5
    $region4: #{tpu_custom_call.1} parent=1 // pred_region
      _
    $region5: #{tpu_custom_call.1} parent=1 // pred_fallthru
      _
    // Predicated region
    $region6: #{tpu_custom_call.1} parent=1 // pred_check
      _
    $region7: #{tpu_custom_call.1} parent=1 // pred_check_branch
      %17 = sbr.rel (0) target = $region9
    $region8: #{tpu_custom_call.1} parent=1 // pred_region
      %s19 = ssub.s32 2048, 2048
      %20 = vsyncadd [#allocation3], %s19
      %s21 = sshll.u32 [#allocation2], 4
      %s22 = int_to_ptr.vmem [resolvable:$true] %s21
      %27 = dma.hbm_to_vmem [thread:$0]  %s1, 2048, %s22, [#allocation3], 64, 64, 4
    $region9: #{tpu_custom_call.1} parent=1 // pred_fallthru
      _
    // Predicated region
    $region10: #{tpu_custom_call.1} parent=1 // pred_check
      _
    $region11: #{tpu_custom_call.1} parent=1 // pred_check_branch
      %29 = sbr.rel (0) target = $region13
    $region12: #{tpu_custom_call.1} parent=1 // pred_region
      _
    $region13: #{tpu_custom_call.1} parent=1 // pred_fallthru
      _
    // Predicated region
    $region14: #{tpu_custom_call.1} parent=1 // pred_check
      _
    $region15: #{tpu_custom_call.1} parent=1 // pred_check_branch
      %31 = sbr.rel (0) target = $region17
    $region16: #{tpu_custom_call.1} parent=1 // pred_region
      _
    $region17: #{tpu_custom_call.1} parent=1 // pred_fallthru
      _
    // Predicated region
    $region18: #{tpu_custom_call.1} parent=1 // pred_check
      _
    $region19: #{tpu_custom_call.1} parent=1 // pred_check_branch
      %33 = sbr.rel (0) target = $region21
    $region20: #{tpu_custom_call.1} parent=1 // pred_region
      %34 = dma.done [#allocation3], 2048
    $region21: #{tpu_custom_call.1} parent=1 // pred_fallthru
      _
    %s36 = smul.u32 0, 192
    %v37 = vld [vmem:[%s0] sm:$0xff]
    %v38 = vld [vmem:[%s0 + $0x8] sm:$0xff]
    %v39 = vld [vmem:[%s0 + $0x10] sm:$0xff]
    %v40 = vld [vmem:[%s0 + $0x18] sm:$0xff]
    %v41 = vld [vmem:[%s0 + $0x20] sm:$0xff]
    %v42 = vld [vmem:[%s0 + $0x28] sm:$0xff]
    %v43 = vld [vmem:[%s0 + $0x30] sm:$0xff]
    %v44 = vld [vmem:[%s0 + $0x38] sm:$0xff]
    %v45 = vld [vmem:[%s0 + $0x40] sm:$0xff]
    %v46 = vld [vmem:[%s0 + $0x48] sm:$0xff]
    %v47 = vld [vmem:[%s0 + $0x50] sm:$0xff]
    %v48 = vld [vmem:[%s0 + $0x58] sm:$0xff]
    %v49 = vld [vmem:[%s0 + $0x60] sm:$0xff]
    %v50 = vld [vmem:[%s0 + $0x68] sm:$0xff]
    %v51 = vld [vmem:[%s0 + $0x70] sm:$0xff]
    %v52 = vld [vmem:[%s0 + $0x78] sm:$0xff]
    %v53 = vld [vmem:[%s0 + $0x80] sm:$0xff]
    %v54 = vld [vmem:[%s0 + $0x88] sm:$0xff]
    %v55 = vld [vmem:[%s0 + $0x90] sm:$0xff]
    %v56 = vld [vmem:[%s0 + $0x98] sm:$0xff]
    %v57 = vld [vmem:[%s0 + $0xa0] sm:$0xff]
    %v58 = vld [vmem:[%s0 + $0xa8] sm:$0xff]
    %v59 = vld [vmem:[%s0 + $0xb0] sm:$0xff]
    %v60 = vld [vmem:[%s0 + $0xb8] sm:$0xff]
    %v61 = vlaneseq
    %v62 = vshrl.u32 %v61, 7
    %v63 = vadd.s32 %v62, 8
    %v64 = vadd.s32 %v62, 16
    %v65 = vadd.s32 %v62, 24
    %v66 = vadd.s32 %v62, 32
    %v67 = vadd.s32 %v62, 40
    %v68 = vadd.s32 %v62, 48
    %v69 = vadd.s32 %v62, 56
    %v70 = vadd.s32 %v62, 64
    %v71 = vadd.s32 %v62, 72
    %v72 = vadd.s32 %v62, 80
    %v73 = vadd.s32 %v62, 88
    %v74 = vadd.s32 %v62, 96
    %v75 = vadd.s32 %v62, 104
    %v76 = vadd.s32 %v62, 112
    %v77 = vadd.s32 %v62, 120
    %v78 = vadd.s32 %v62, 128
    %v79 = vadd.s32 %v62, 136
    %v80 = vadd.s32 %v62, 144
    %v81 = vadd.s32 %v62, 152
    %v82 = vadd.s32 %v62, 160
    %v83 = vadd.s32 %v62, 168
    %v84 = vadd.s32 %v62, 176
    %v85 = vadd.s32 %v62, 184
    %v86 = vstv %s36
    %v87 = vadd.s32 %v62, %v86
    %v88 = vadd.s32 %v63, %v86
    %v89 = vadd.s32 %v64, %v86
    %v90 = vadd.s32 %v65, %v86
    %v91 = vadd.s32 %v66, %v86
    %v92 = vadd.s32 %v67, %v86
    %v93 = vadd.s32 %v68, %v86
    %v94 = vadd.s32 %v69, %v86
    %v95 = vadd.s32 %v70, %v86
    %v96 = vadd.s32 %v71, %v86
    %v97 = vadd.s32 %v72, %v86
    %v98 = vadd.s32 %v73, %v86
    %v99 = vadd.s32 %v74, %v86
    %v100 = vadd.s32 %v75, %v86
    %v101 = vadd.s32 %v76, %v86
    %v102 = vadd.s32 %v77, %v86
    %v103 = vadd.s32 %v78, %v86
    %v104 = vadd.s32 %v79, %v86
    %v105 = vadd.s32 %v80, %v86
    %v106 = vadd.s32 %v81, %v86
    %v107 = vadd.s32 %v82, %v86
    %v108 = vadd.s32 %v83, %v86
    %v109 = vadd.s32 %v84, %v86
    %v110 = vadd.s32 %v85, %v86
    %v111 = vlaneseq
    %v112 = vand.u32 %v111, 127
    %v113 = vadd.s32 %v112, 128
    %v114 = vmul.u32 %v87, 256
    %v115 = vmul.u32 %v88, 256
    %v116 = vmul.u32 %v89, 256
    %v117 = vmul.u32 %v90, 256
    %v118 = vmul.u32 %v91, 256
    %v119 = vmul.u32 %v92, 256
    %v120 = vmul.u32 %v93, 256
    %v121 = vmul.u32 %v94, 256
    %v122 = vmul.u32 %v95, 256
    %v123 = vmul.u32 %v96, 256
    %v124 = vmul.u32 %v97, 256
    %v125 = vmul.u32 %v98, 256
    %v126 = vmul.u32 %v99, 256
    %v127 = vmul.u32 %v100, 256
    %v128 = vmul.u32 %v101, 256
    %v129 = vmul.u32 %v102, 256
    %v130 = vmul.u32 %v103, 256
    %v131 = vmul.u32 %v104, 256
    %v132 = vmul.u32 %v105, 256
    %v133 = vmul.u32 %v106, 256
    %v134 = vmul.u32 %v107, 256
    %v135 = vmul.u32 %v108, 256
    %v136 = vmul.u32 %v109, 256
    %v137 = vmul.u32 %v110, 256
    %v138 = vadd.s32 %v114, %v112
    %v139 = vadd.s32 %v114, %v113
    %v140 = vadd.s32 %v115, %v112
    %v141 = vadd.s32 %v115, %v113
    %v142 = vadd.s32 %v116, %v112
    %v143 = vadd.s32 %v116, %v113
    %v144 = vadd.s32 %v117, %v112
    %v145 = vadd.s32 %v117, %v113
    %v146 = vadd.s32 %v118, %v112
    %v147 = vadd.s32 %v118, %v113
    %v148 = vadd.s32 %v119, %v112
    %v149 = vadd.s32 %v119, %v113
    %v150 = vadd.s32 %v120, %v112
    %v151 = vadd.s32 %v120, %v113
    %v152 = vadd.s32 %v121, %v112
    %v153 = vadd.s32 %v121, %v113
    %v154 = vadd.s32 %v122, %v112
    %v155 = vadd.s32 %v122, %v113
    %v156 = vadd.s32 %v123, %v112
    %v157 = vadd.s32 %v123, %v113
    %v158 = vadd.s32 %v124, %v112
    %v159 = vadd.s32 %v124, %v113
    %v160 = vadd.s32 %v125, %v112
    %v161 = vadd.s32 %v125, %v113
    %v162 = vadd.s32 %v126, %v112
    %v163 = vadd.s32 %v126, %v113
    %v164 = vadd.s32 %v127, %v112
    %v165 = vadd.s32 %v127, %v113
    %v166 = vadd.s32 %v128, %v112
    %v167 = vadd.s32 %v128, %v113
    %v168 = vadd.s32 %v129, %v112
    %v169 = vadd.s32 %v129, %v113
    %v170 = vadd.s32 %v130, %v112
    %v171 = vadd.s32 %v130, %v113
    %v172 = vadd.s32 %v131, %v112
    %v173 = vadd.s32 %v131, %v113
    %v174 = vadd.s32 %v132, %v112
    %v175 = vadd.s32 %v132, %v113
    %v176 = vadd.s32 %v133, %v112
    %v177 = vadd.s32 %v133, %v113
    %v178 = vadd.s32 %v134, %v112
    %v179 = vadd.s32 %v134, %v113
    %v180 = vadd.s32 %v135, %v112
    %v181 = vadd.s32 %v135, %v113
    %v182 = vadd.s32 %v136, %v112
    %v183 = vadd.s32 %v136, %v113
    %v184 = vadd.s32 %v137, %v112
    %v185 = vadd.s32 %v137, %v113
    %v186 = vshrl.u32 %v138, 16
    %v187 = vshrl.u32 %v139, 16
    %v188 = vshrl.u32 %v140, 16
    %v189 = vshrl.u32 %v141, 16
    %v190 = vshrl.u32 %v142, 16
    %v191 = vshrl.u32 %v143, 16
    %v192 = vshrl.u32 %v144, 16
    %v193 = vshrl.u32 %v145, 16
    %v194 = vshrl.u32 %v146, 16
    %v195 = vshrl.u32 %v147, 16
    %v196 = vshrl.u32 %v148, 16
    %v197 = vshrl.u32 %v149, 16
    %v198 = vshrl.u32 %v150, 16
    %v199 = vshrl.u32 %v151, 16
    %v200 = vshrl.u32 %v152, 16
    %v201 = vshrl.u32 %v153, 16
    %v202 = vshrl.u32 %v154, 16
    %v203 = vshrl.u32 %v155, 16
    %v204 = vshrl.u32 %v156, 16
    %v205 = vshrl.u32 %v157, 16
    %v206 = vshrl.u32 %v158, 16
    %v207 = vshrl.u32 %v159, 16
    %v208 = vshrl.u32 %v160, 16
    %v209 = vshrl.u32 %v161, 16
    %v210 = vshrl.u32 %v162, 16
    %v211 = vshrl.u32 %v163, 16
    %v212 = vshrl.u32 %v164, 16
    %v213 = vshrl.u32 %v165, 16
    %v214 = vshrl.u32 %v166, 16
    %v215 = vshrl.u32 %v167, 16
    %v216 = vshrl.u32 %v168, 16
    %v217 = vshrl.u32 %v169, 16
    %v218 = vshrl.u32 %v170, 16
    %v219 = vshrl.u32 %v171, 16
    %v220 = vshrl.u32 %v172, 16
    %v221 = vshrl.u32 %v173, 16
    %v222 = vshrl.u32 %v174, 16
    %v223 = vshrl.u32 %v175, 16
    %v224 = vshrl.u32 %v176, 16
    %v225 = vshrl.u32 %v177, 16
    %v226 = vshrl.u32 %v178, 16
    %v227 = vshrl.u32 %v179, 16
    %v228 = vshrl.u32 %v180, 16
    %v229 = vshrl.u32 %v181, 16
    %v230 = vshrl.u32 %v182, 16
    %v231 = vshrl.u32 %v183, 16
    %v232 = vshrl.u32 %v184, 16
    %v233 = vshrl.u32 %v185, 16
    %v234 = vxor.u32 %v138, %v186
    %v235 = vxor.u32 %v139, %v187
    %v236 = vxor.u32 %v140, %v188
    %v237 = vxor.u32 %v141, %v189
    %v238 = vxor.u32 %v142, %v190
    %v239 = vxor.u32 %v143, %v191
    %v240 = vxor.u32 %v144, %v192
    %v241 = vxor.u32 %v145, %v193
    %v242 = vxor.u32 %v146, %v194
    %v243 = vxor.u32 %v147, %v195
    %v244 = vxor.u32 %v148, %v196
    %v245 = vxor.u32 %v149, %v197
    %v246 = vxor.u32 %v150, %v198
    %v247 = vxor.u32 %v151, %v199
    %v248 = vxor.u32 %v152, %v200
    %v249 = vxor.u32 %v153, %v201
    %v250 = vxor.u32 %v154, %v202
    %v251 = vxor.u32 %v155, %v203
    %v252 = vxor.u32 %v156, %v204
    %v253 = vxor.u32 %v157, %v205
    %v254 = vxor.u32 %v158, %v206
    %v255 = vxor.u32 %v159, %v207
    %v256 = vxor.u32 %v160, %v208
    %v257 = vxor.u32 %v161, %v209
    %v258 = vxor.u32 %v162, %v210
    %v259 = vxor.u32 %v163, %v211
    %v260 = vxor.u32 %v164, %v212
    %v261 = vxor.u32 %v165, %v213
    %v262 = vxor.u32 %v166, %v214
    %v263 = vxor.u32 %v167, %v215
    %v264 = vxor.u32 %v168, %v216
    %v265 = vxor.u32 %v169, %v217
    %v266 = vxor.u32 %v170, %v218
    %v267 = vxor.u32 %v171, %v219
    %v268 = vxor.u32 %v172, %v220
    %v269 = vxor.u32 %v173, %v221
    %v270 = vxor.u32 %v174, %v222
    %v271 = vxor.u32 %v175, %v223
    %v272 = vxor.u32 %v176, %v224
    %v273 = vxor.u32 %v177, %v225
    %v274 = vxor.u32 %v178, %v226
    %v275 = vxor.u32 %v179, %v227
    %v276 = vxor.u32 %v180, %v228
    %v277 = vxor.u32 %v181, %v229
    %v278 = vxor.u32 %v182, %v230
    %v279 = vxor.u32 %v183, %v231
    %v280 = vxor.u32 %v184, %v232
    %v281 = vxor.u32 %v185, %v233
    %v282 = vmul.u32 %v234, 2246822507
    %v283 = vmul.u32 %v235, 2246822507
    %v284 = vmul.u32 %v236, 2246822507
    %v285 = vmul.u32 %v237, 2246822507
    %v286 = vmul.u32 %v238, 2246822507
    %v287 = vmul.u32 %v239, 2246822507
    %v288 = vmul.u32 %v240, 2246822507
    %v289 = vmul.u32 %v241, 2246822507
    %v290 = vmul.u32 %v242, 2246822507
    %v291 = vmul.u32 %v243, 2246822507
    %v292 = vmul.u32 %v244, 2246822507
    %v293 = vmul.u32 %v245, 2246822507
    %v294 = vmul.u32 %v246, 2246822507
    %v295 = vmul.u32 %v247, 2246822507
    %v296 = vmul.u32 %v248, 2246822507
    %v297 = vmul.u32 %v249, 2246822507
    %v298 = vmul.u32 %v250, 2246822507
    %v299 = vmul.u32 %v251, 2246822507
    %v300 = vmul.u32 %v252, 2246822507
    %v301 = vmul.u32 %v253, 2246822507
    %v302 = vmul.u32 %v254, 2246822507
    %v303 = vmul.u32 %v255, 2246822507
    %v304 = vmul.u32 %v256, 2246822507
    %v305 = vmul.u32 %v257, 2246822507
    %v306 = vmul.u32 %v258, 2246822507
    %v307 = vmul.u32 %v259, 2246822507
    %v308 = vmul.u32 %v260, 2246822507
    %v309 = vmul.u32 %v261, 2246822507
    %v310 = vmul.u32 %v262, 2246822507
    %v311 = vmul.u32 %v263, 2246822507
    %v312 = vmul.u32 %v264, 2246822507
    %v313 = vmul.u32 %v265, 2246822507
    %v314 = vmul.u32 %v266, 2246822507
    %v315 = vmul.u32 %v267, 2246822507
    %v316 = vmul.u32 %v268, 2246822507
    %v317 = vmul.u32 %v269, 2246822507
    %v318 = vmul.u32 %v270, 2246822507
    %v319 = vmul.u32 %v271, 2246822507
    %v320 = vmul.u32 %v272, 2246822507
    %v321 = vmul.u32 %v273, 2246822507
    %v322 = vmul.u32 %v274, 2246822507
    %v323 = vmul.u32 %v275, 2246822507
    %v324 = vmul.u32 %v276, 2246822507
    %v325 = vmul.u32 %v277, 2246822507
    %v326 = vmul.u32 %v278, 2246822507
    %v327 = vmul.u32 %v279, 2246822507
    %v328 = vmul.u32 %v280, 2246822507
    %v329 = vmul.u32 %v281, 2246822507
    %v330 = vshrl.u32 %v282, 13
    %v331 = vshrl.u32 %v283, 13
    %v332 = vshrl.u32 %v284, 13
    %v333 = vshrl.u32 %v285, 13
    %v334 = vshrl.u32 %v286, 13
    %v335 = vshrl.u32 %v287, 13
    %v336 = vshrl.u32 %v288, 13
    %v337 = vshrl.u32 %v289, 13
    %v338 = vshrl.u32 %v290, 13
    %v339 = vshrl.u32 %v291, 13
    %v340 = vshrl.u32 %v292, 13
    %v341 = vshrl.u32 %v293, 13
    %v342 = vshrl.u32 %v294, 13
    %v343 = vshrl.u32 %v295, 13
    %v344 = vshrl.u32 %v296, 13
    %v345 = vshrl.u32 %v297, 13
    %v346 = vshrl.u32 %v298, 13
    %v347 = vshrl.u32 %v299, 13
    %v348 = vshrl.u32 %v300, 13
    %v349 = vshrl.u32 %v301, 13
    %v350 = vshrl.u32 %v302, 13
    %v351 = vshrl.u32 %v303, 13
    %v352 = vshrl.u32 %v304, 13
    %v353 = vshrl.u32 %v305, 13
    %v354 = vshrl.u32 %v306, 13
    %v355 = vshrl.u32 %v307, 13
    %v356 = vshrl.u32 %v308, 13
    %v357 = vshrl.u32 %v309, 13
    %v358 = vshrl.u32 %v310, 13
    %v359 = vshrl.u32 %v311, 13
    %v360 = vshrl.u32 %v312, 13
    %v361 = vshrl.u32 %v313, 13
    %v362 = vshrl.u32 %v314, 13
    %v363 = vshrl.u32 %v315, 13
    %v364 = vshrl.u32 %v316, 13
    %v365 = vshrl.u32 %v317, 13
    %v366 = vshrl.u32 %v318, 13
    %v367 = vshrl.u32 %v319, 13
    %v368 = vshrl.u32 %v320, 13
    %v369 = vshrl.u32 %v321, 13
    %v370 = vshrl.u32 %v322, 13
    %v371 = vshrl.u32 %v323, 13
    %v372 = vshrl.u32 %v324, 13
    %v373 = vshrl.u32 %v325, 13
    %v374 = vshrl.u32 %v326, 13
    %v375 = vshrl.u32 %v327, 13
    %v376 = vshrl.u32 %v328, 13
    %v377 = vshrl.u32 %v329, 13
    %v378 = vxor.u32 %v282, %v330
    %v379 = vxor.u32 %v283, %v331
    %v380 = vxor.u32 %v284, %v332
    %v381 = vxor.u32 %v285, %v333
    %v382 = vxor.u32 %v286, %v334
    %v383 = vxor.u32 %v287, %v335
    %v384 = vxor.u32 %v288, %v336
    %v385 = vxor.u32 %v289, %v337
    %v386 = vxor.u32 %v290, %v338
    %v387 = vxor.u32 %v291, %v339
    %v388 = vxor.u32 %v292, %v340
    %v389 = vxor.u32 %v293, %v341
    %v390 = vxor.u32 %v294, %v342
    %v391 = vxor.u32 %v295, %v343
    %v392 = vxor.u32 %v296, %v344
    %v393 = vxor.u32 %v297, %v345
    %v394 = vxor.u32 %v298, %v346
    %v395 = vxor.u32 %v299, %v347
    %v396 = vxor.u32 %v300, %v348
    %v397 = vxor.u32 %v301, %v349
    %v398 = vxor.u32 %v302, %v350
    %v399 = vxor.u32 %v303, %v351
    %v400 = vxor.u32 %v304, %v352
    %v401 = vxor.u32 %v305, %v353
    %v402 = vxor.u32 %v306, %v354
    %v403 = vxor.u32 %v307, %v355
    %v404 = vxor.u32 %v308, %v356
    %v405 = vxor.u32 %v309, %v357
    %v406 = vxor.u32 %v310, %v358
    %v407 = vxor.u32 %v311, %v359
    %v408 = vxor.u32 %v312, %v360
    %v409 = vxor.u32 %v313, %v361
    %v410 = vxor.u32 %v314, %v362
    %v411 = vxor.u32 %v315, %v363
    %v412 = vxor.u32 %v316, %v364
    %v413 = vxor.u32 %v317, %v365
    %v414 = vxor.u32 %v318, %v366
    %v415 = vxor.u32 %v319, %v367
    %v416 = vxor.u32 %v320, %v368
    %v417 = vxor.u32 %v321, %v369
    %v418 = vxor.u32 %v322, %v370
    %v419 = vxor.u32 %v323, %v371
    %v420 = vxor.u32 %v324, %v372
    %v421 = vxor.u32 %v325, %v373
    %v422 = vxor.u32 %v326, %v374
    %v423 = vxor.u32 %v327, %v375
    %v424 = vxor.u32 %v328, %v376
    %v425 = vxor.u32 %v329, %v377
    %v426 = vmul.u32 %v378, 3266489909
    %v427 = vmul.u32 %v379, 3266489909
    %v428 = vmul.u32 %v380, 3266489909
    %v429 = vmul.u32 %v381, 3266489909
    %v430 = vmul.u32 %v382, 3266489909
    %v431 = vmul.u32 %v383, 3266489909
    %v432 = vmul.u32 %v384, 3266489909
    %v433 = vmul.u32 %v385, 3266489909
    %v434 = vmul.u32 %v386, 3266489909
    %v435 = vmul.u32 %v387, 3266489909
    %v436 = vmul.u32 %v388, 3266489909
    %v437 = vmul.u32 %v389, 3266489909
    %v438 = vmul.u32 %v390, 3266489909
    %v439 = vmul.u32 %v391, 3266489909
    %v440 = vmul.u32 %v392, 3266489909
    %v441 = vmul.u32 %v393, 3266489909
    %v442 = vmul.u32 %v394, 3266489909
    %v443 = vmul.u32 %v395, 3266489909
    %v444 = vmul.u32 %v396, 3266489909
    %v445 = vmul.u32 %v397, 3266489909
    %v446 = vmul.u32 %v398, 3266489909
    %v447 = vmul.u32 %v399, 3266489909
    %v448 = vmul.u32 %v400, 3266489909
    %v449 = vmul.u32 %v401, 3266489909
    %v450 = vmul.u32 %v402, 3266489909
    %v451 = vmul.u32 %v403, 3266489909
    %v452 = vmul.u32 %v404, 3266489909
    %v453 = vmul.u32 %v405, 3266489909
    %v454 = vmul.u32 %v406, 3266489909
    %v455 = vmul.u32 %v407, 3266489909
    %v456 = vmul.u32 %v408, 3266489909
    %v457 = vmul.u32 %v409, 3266489909
    %v458 = vmul.u32 %v410, 3266489909
    %v459 = vmul.u32 %v411, 3266489909
    %v460 = vmul.u32 %v412, 3266489909
    %v461 = vmul.u32 %v413, 3266489909
    %v462 = vmul.u32 %v414, 3266489909
    %v463 = vmul.u32 %v415, 3266489909
    %v464 = vmul.u32 %v416, 3266489909
    %v465 = vmul.u32 %v417, 3266489909
    %v466 = vmul.u32 %v418, 3266489909
    %v467 = vmul.u32 %v419, 3266489909
    %v468 = vmul.u32 %v420, 3266489909
    %v469 = vmul.u32 %v421, 3266489909
    %v470 = vmul.u32 %v422, 3266489909
    %v471 = vmul.u32 %v423, 3266489909
    %v472 = vmul.u32 %v424, 3266489909
    %v473 = vmul.u32 %v425, 3266489909
    %v474 = vshrl.u32 %v426, 16
    %v475 = vshrl.u32 %v427, 16
    %v476 = vshrl.u32 %v428, 16
    %v477 = vshrl.u32 %v429, 16
    %v478 = vshrl.u32 %v430, 16
    %v479 = vshrl.u32 %v431, 16
    %v480 = vshrl.u32 %v432, 16
    %v481 = vshrl.u32 %v433, 16
    %v482 = vshrl.u32 %v434, 16
    %v483 = vshrl.u32 %v435, 16
    %v484 = vshrl.u32 %v436, 16
    %v485 = vshrl.u32 %v437, 16
    %v486 = vshrl.u32 %v438, 16
    %v487 = vshrl.u32 %v439, 16
    %v488 = vshrl.u32 %v440, 16
    %v489 = vshrl.u32 %v441, 16
    %v490 = vshrl.u32 %v442, 16
    %v491 = vshrl.u32 %v443, 16
    %v492 = vshrl.u32 %v444, 16
    %v493 = vshrl.u32 %v445, 16
    %v494 = vshrl.u32 %v446, 16
    %v495 = vshrl.u32 %v447, 16
    %v496 = vshrl.u32 %v448, 16
    %v497 = vshrl.u32 %v449, 16
    %v498 = vshrl.u32 %v450, 16
    %v499 = vshrl.u32 %v451, 16
    %v500 = vshrl.u32 %v452, 16
    %v501 = vshrl.u32 %v453, 16
    %v502 = vshrl.u32 %v454, 16
    %v503 = vshrl.u32 %v455, 16
    %v504 = vshrl.u32 %v456, 16
    %v505 = vshrl.u32 %v457, 16
    %v506 = vshrl.u32 %v458, 16
    %v507 = vshrl.u32 %v459, 16
    %v508 = vshrl.u32 %v460, 16
    %v509 = vshrl.u32 %v461, 16
    %v510 = vshrl.u32 %v462, 16
    %v511 = vshrl.u32 %v463, 16
    %v512 = vshrl.u32 %v464, 16
    %v513 = vshrl.u32 %v465, 16
    %v514 = vshrl.u32 %v466, 16
    %v515 = vshrl.u32 %v467, 16
    %v516 = vshrl.u32 %v468, 16
    %v517 = vshrl.u32 %v469, 16
    %v518 = vshrl.u32 %v470, 16
    %v519 = vshrl.u32 %v471, 16
    %v520 = vshrl.u32 %v472, 16
    %v521 = vshrl.u32 %v473, 16
    %v522 = vxor.u32 %v426, %v474
    %v523 = vxor.u32 %v427, %v475
    %v524 = vxor.u32 %v428, %v476
    %v525 = vxor.u32 %v429, %v477
    %v526 = vxor.u32 %v430, %v478
    %v527 = vxor.u32 %v431, %v479
    %v528 = vxor.u32 %v432, %v480
    %v529 = vxor.u32 %v433, %v481
    %v530 = vxor.u32 %v434, %v482
    %v531 = vxor.u32 %v435, %v483
    %v532 = vxor.u32 %v436, %v484
    %v533 = vxor.u32 %v437, %v485
    %v534 = vxor.u32 %v438, %v486
    %v535 = vxor.u32 %v439, %v487
    %v536 = vxor.u32 %v440, %v488
    %v537 = vxor.u32 %v441, %v489
    %v538 = vxor.u32 %v442, %v490
    %v539 = vxor.u32 %v443, %v491
    %v540 = vxor.u32 %v444, %v492
    %v541 = vxor.u32 %v445, %v493
    %v542 = vxor.u32 %v446, %v494
    %v543 = vxor.u32 %v447, %v495
    %v544 = vxor.u32 %v448, %v496
    %v545 = vxor.u32 %v449, %v497
    %v546 = vxor.u32 %v450, %v498
    %v547 = vxor.u32 %v451, %v499
    %v548 = vxor.u32 %v452, %v500
    %v549 = vxor.u32 %v453, %v501
    %v550 = vxor.u32 %v454, %v502
    %v551 = vxor.u32 %v455, %v503
    %v552 = vxor.u32 %v456, %v504
    %v553 = vxor.u32 %v457, %v505
    %v554 = vxor.u32 %v458, %v506
    %v555 = vxor.u32 %v459, %v507
    %v556 = vxor.u32 %v460, %v508
    %v557 = vxor.u32 %v461, %v509
    %v558 = vxor.u32 %v462, %v510
    %v559 = vxor.u32 %v463, %v511
    %v560 = vxor.u32 %v464, %v512
    %v561 = vxor.u32 %v465, %v513
    %v562 = vxor.u32 %v466, %v514
    %v563 = vxor.u32 %v467, %v515
    %v564 = vxor.u32 %v468, %v516
    %v565 = vxor.u32 %v469, %v517
    %v566 = vxor.u32 %v470, %v518
    %v567 = vxor.u32 %v471, %v519
    %v568 = vxor.u32 %v472, %v520
    %v569 = vxor.u32 %v473, %v521
    %vm570 = vcmp.ge.u32.totalorder %v522, 429496729
    %vm571 = vcmp.ge.u32.totalorder %v523, 429496729
    %vm572 = vcmp.ge.u32.totalorder %v524, 429496729
    %vm573 = vcmp.ge.u32.totalorder %v525, 429496729
    %vm574 = vcmp.ge.u32.totalorder %v526, 429496729
    %vm575 = vcmp.ge.u32.totalorder %v527, 429496729
    %vm576 = vcmp.ge.u32.totalorder %v528, 429496729
    %vm577 = vcmp.ge.u32.totalorder %v529, 429496729
    %vm578 = vcmp.ge.u32.totalorder %v530, 429496729
    %vm579 = vcmp.ge.u32.totalorder %v531, 429496729
    %vm580 = vcmp.ge.u32.totalorder %v532, 429496729
    %vm581 = vcmp.ge.u32.totalorder %v533, 429496729
    %vm582 = vcmp.ge.u32.totalorder %v534, 429496729
    %vm583 = vcmp.ge.u32.totalorder %v535, 429496729
    %vm584 = vcmp.ge.u32.totalorder %v536, 429496729
    %vm585 = vcmp.ge.u32.totalorder %v537, 429496729
    %vm586 = vcmp.ge.u32.totalorder %v538, 429496729
    %vm587 = vcmp.ge.u32.totalorder %v539, 429496729
    %vm588 = vcmp.ge.u32.totalorder %v540, 429496729
    %vm589 = vcmp.ge.u32.totalorder %v541, 429496729
    %vm590 = vcmp.ge.u32.totalorder %v542, 429496729
    %vm591 = vcmp.ge.u32.totalorder %v543, 429496729
    %vm592 = vcmp.ge.u32.totalorder %v544, 429496729
    %vm593 = vcmp.ge.u32.totalorder %v545, 429496729
    %vm594 = vcmp.ge.u32.totalorder %v546, 429496729
    %vm595 = vcmp.ge.u32.totalorder %v547, 429496729
    %vm596 = vcmp.ge.u32.totalorder %v548, 429496729
    %vm597 = vcmp.ge.u32.totalorder %v549, 429496729
    %vm598 = vcmp.ge.u32.totalorder %v550, 429496729
    %vm599 = vcmp.ge.u32.totalorder %v551, 429496729
    %vm600 = vcmp.ge.u32.totalorder %v552, 429496729
    %vm601 = vcmp.ge.u32.totalorder %v553, 429496729
    %vm602 = vcmp.ge.u32.totalorder %v554, 429496729
    %vm603 = vcmp.ge.u32.totalorder %v555, 429496729
    %vm604 = vcmp.ge.u32.totalorder %v556, 429496729
    %vm605 = vcmp.ge.u32.totalorder %v557, 429496729
    %vm606 = vcmp.ge.u32.totalorder %v558, 429496729
    %vm607 = vcmp.ge.u32.totalorder %v559, 429496729
    %vm608 = vcmp.ge.u32.totalorder %v560, 429496729
    %vm609 = vcmp.ge.u32.totalorder %v561, 429496729
    %vm610 = vcmp.ge.u32.totalorder %v562, 429496729
    %vm611 = vcmp.ge.u32.totalorder %v563, 429496729
    %vm612 = vcmp.ge.u32.totalorder %v564, 429496729
    %vm613 = vcmp.ge.u32.totalorder %v565, 429496729
    %vm614 = vcmp.ge.u32.totalorder %v566, 429496729
    %vm615 = vcmp.ge.u32.totalorder %v567, 429496729
    %vm616 = vcmp.ge.u32.totalorder %v568, 429496729
    %vm617 = vcmp.ge.u32.totalorder %v569, 429496729
    %vm618 = vmpackc.low %vm571, %vm570
    %vm619 = vmpackc.low %vm573, %vm572
    %vm620 = vmpackc.low %vm575, %vm574
    %vm621 = vmpackc.low %vm577, %vm576
    %vm622 = vmpackc.low %vm579, %vm578
    %vm623 = vmpackc.low %vm581, %vm580
    %vm624 = vmpackc.low %vm583, %vm582
    %vm625 = vmpackc.low %vm585, %vm584
    %vm626 = vmpackc.low %vm587, %vm586
    %vm627 = vmpackc.low %vm589, %vm588
    %vm628 = vmpackc.low %vm591, %vm590
    %vm629 = vmpackc.low %vm593, %vm592
    %vm630 = vmpackc.low %vm595, %vm594
    %vm631 = vmpackc.low %vm597, %vm596
    %vm632 = vmpackc.low %vm599, %vm598
    %vm633 = vmpackc.low %vm601, %vm600
    %vm634 = vmpackc.low %vm603, %vm602
    %vm635 = vmpackc.low %vm605, %vm604
    %vm636 = vmpackc.low %vm607, %vm606
    %vm637 = vmpackc.low %vm609, %vm608
    %vm638 = vmpackc.low %vm611, %vm610
    %vm639 = vmpackc.low %vm613, %vm612
    %vm640 = vmpackc.low %vm615, %vm614
    %vm641 = vmpackc.low %vm617, %vm616
    %v642 = vsel %vm618, %v37, 0
    %v643 = vsel %vm619, %v38, 0
    %v644 = vsel %vm620, %v39, 0
    %v645 = vsel %vm621, %v40, 0
    %v646 = vsel %vm622, %v41, 0
    %v647 = vsel %vm623, %v42, 0
    %v648 = vsel %vm624, %v43, 0
    %v649 = vsel %vm625, %v44, 0
    %v650 = vsel %vm626, %v45, 0
    %v651 = vsel %vm627, %v46, 0
    %v652 = vsel %vm628, %v47, 0
    %v653 = vsel %vm629, %v48, 0
    %v654 = vsel %vm630, %v49, 0
    %v655 = vsel %vm631, %v50, 0
    %v656 = vsel %vm632, %v51, 0
    %v657 = vsel %vm633, %v52, 0
    %v658 = vsel %vm634, %v53, 0
    %v659 = vsel %vm635, %v54, 0
    %v660 = vsel %vm636, %v55, 0
    %v661 = vsel %vm637, %v56, 0
    %v662 = vsel %vm638, %v57, 0
    %v663 = vsel %vm639, %v58, 0
    %v664 = vsel %vm640, %v59, 0
    %v665 = vsel %vm641, %v60, 0
    %v666 = vld [vmem:[#allocation2] sm:$0xf]
    %v667 = vld [vmem:[#allocation2 + $0x4] sm:$0xf]
    %v668 = vld [vmem:[#allocation2 + $0x8] sm:$0xf]
    %v669 = vld [vmem:[#allocation2 + $0xc] sm:$0xf]
    %v670 = vld [vmem:[#allocation2 + $0x10] sm:$0xf]
    %v671 = vld [vmem:[#allocation2 + $0x14] sm:$0xf]
    %v672 = vld [vmem:[#allocation2 + $0x18] sm:$0xf]
    %v673 = vld [vmem:[#allocation2 + $0x1c] sm:$0xf]
    %v674 = vld [vmem:[#allocation2 + $0x20] sm:$0xf]
    %v675 = vld [vmem:[#allocation2 + $0x24] sm:$0xf]
    %v676 = vld [vmem:[#allocation2 + $0x28] sm:$0xf]
    %v677 = vld [vmem:[#allocation2 + $0x2c] sm:$0xf]
    %v678 = vld [vmem:[#allocation2 + $0x30] sm:$0xf]
    %v679 = vld [vmem:[#allocation2 + $0x34] sm:$0xf]
    %v680 = vld [vmem:[#allocation2 + $0x38] sm:$0xf]
    %v681 = vld [vmem:[#allocation2 + $0x3c] sm:$0xf]
    %v682 = vld [vmem:[#allocation2 + $0x40] sm:$0xf]
    %v683 = vld [vmem:[#allocation2 + $0x44] sm:$0xf]
    %v684 = vld [vmem:[#allocation2 + $0x48] sm:$0xf]
    %v685 = vld [vmem:[#allocation2 + $0x4c] sm:$0xf]
    %v686 = vld [vmem:[#allocation2 + $0x50] sm:$0xf]
    %v687 = vld [vmem:[#allocation2 + $0x54] sm:$0xf]
    %v688 = vld [vmem:[#allocation2 + $0x58] sm:$0xf]
    %v689 = vld [vmem:[#allocation2 + $0x5c] sm:$0xf]
    %v690 = vld [vmem:[#allocation2 + $0x60] sm:$0xf]
    %v691 = vld [vmem:[#allocation2 + $0x64] sm:$0xf]
    %v692 = vld [vmem:[#allocation2 + $0x68] sm:$0xf]
    %v693 = vld [vmem:[#allocation2 + $0x6c] sm:$0xf]
    %v694 = vld [vmem:[#allocation2 + $0x70] sm:$0xf]
    %v695 = vld [vmem:[#allocation2 + $0x74] sm:$0xf]
    %v696 = vld [vmem:[#allocation2 + $0x78] sm:$0xf]
    %v697 = vld [vmem:[#allocation2 + $0x7c] sm:$0xf]
    %v698 = vld [vmem:[%s2] sm:$0x1]
    %v700 = vlaneseq
    %v701 = vshrl.u32 %v700, 7
    %v702 = vsub.s32 0, %v701
    %v703 = vrot.slane %v698, %v702
    %v729 = vunpack.c.l.b16 %v642
    %v730 = vunpack.c.h.b16 %v642
    %v731 = vunpack.c.l.b16 %v643
    %v732 = vunpack.c.h.b16 %v643
    %v733 = vunpack.c.l.b16 %v644
    %v734 = vunpack.c.h.b16 %v644
    %v735 = vunpack.c.l.b16 %v645
    %v736 = vunpack.c.h.b16 %v645
    %v737 = vunpack.c.l.b16 %v646
    %v738 = vunpack.c.h.b16 %v646
    %v739 = vunpack.c.l.b16 %v647
    %v740 = vunpack.c.h.b16 %v647
    %v741 = vunpack.c.l.b16 %v648
    %v742 = vunpack.c.h.b16 %v648
    %v743 = vunpack.c.l.b16 %v649
    %v744 = vunpack.c.h.b16 %v649
    %v745 = vunpack.c.l.b16 %v650
    %v746 = vunpack.c.h.b16 %v650
    %v747 = vunpack.c.l.b16 %v651
    %v748 = vunpack.c.h.b16 %v651
    %v749 = vunpack.c.l.b16 %v652
    %v750 = vunpack.c.h.b16 %v652
    %v751 = vunpack.c.l.b16 %v653
    %v752 = vunpack.c.h.b16 %v653
    %v753 = vunpack.c.l.b16 %v654
    %v754 = vunpack.c.h.b16 %v654
    %v755 = vunpack.c.l.b16 %v655
    %v756 = vunpack.c.h.b16 %v655
    %v757 = vunpack.c.l.b16 %v656
    %v758 = vunpack.c.h.b16 %v656
    %v759 = vunpack.c.l.b16 %v657
    %v760 = vunpack.c.h.b16 %v657
    %v761 = vunpack.c.l.b16 %v658
    %v762 = vunpack.c.h.b16 %v658
    %v763 = vunpack.c.l.b16 %v659
    %v764 = vunpack.c.h.b16 %v659
    %v765 = vunpack.c.l.b16 %v660
    %v766 = vunpack.c.h.b16 %v660
    %v767 = vunpack.c.l.b16 %v661
    %v768 = vunpack.c.h.b16 %v661
    %v769 = vunpack.c.l.b16 %v662
    %v770 = vunpack.c.h.b16 %v662
    %v771 = vunpack.c.l.b16 %v663
    %v772 = vunpack.c.h.b16 %v663
    %v773 = vunpack.c.l.b16 %v664
    %v774 = vunpack.c.h.b16 %v664
    %v775 = vunpack.c.l.b16 %v665
    %v776 = vunpack.c.h.b16 %v665
    %v777 = vpack.c.b16 %v731, %v729
    %v778 = vpack.c.b16 %v732, %v730
    %v779 = vpack.c.b16 %v735, %v733
    %v780 = vpack.c.b16 %v736, %v734
    %v781 = vpack.c.b16 %v739, %v737
    %v782 = vpack.c.b16 %v740, %v738
    %v783 = vpack.c.b16 %v743, %v741
    %v784 = vpack.c.b16 %v744, %v742
    %v785 = vpack.c.b16 %v747, %v745
    %v786 = vpack.c.b16 %v748, %v746
    %v787 = vpack.c.b16 %v751, %v749
    %v788 = vpack.c.b16 %v752, %v750
    %v789 = vpack.c.b16 %v755, %v753
    %v790 = vpack.c.b16 %v756, %v754
    %v791 = vpack.c.b16 %v759, %v757
    %v792 = vpack.c.b16 %v760, %v758
    %v793 = vpack.c.b16 %v763, %v761
    %v794 = vpack.c.b16 %v764, %v762
    %v795 = vpack.c.b16 %v767, %v765
    %v796 = vpack.c.b16 %v768, %v766
    %v797 = vpack.c.b16 %v771, %v769
    %v798 = vpack.c.b16 %v772, %v770
    %v799 = vpack.c.b16 %v775, %v773
    %v800 = vpack.c.b16 %v776, %v774
    %v857 = vunpack.c.l.b16 %v666
    %v858 = vunpack.c.l.b16 %v667
    %v859 = vunpack.c.l.b16 %v668
    %v860 = vunpack.c.l.b16 %v669
    %v861 = vunpack.c.l.b16 %v670
    %v862 = vunpack.c.l.b16 %v671
    %v863 = vunpack.c.l.b16 %v672
    %v864 = vunpack.c.l.b16 %v673
    %v865 = vunpack.c.l.b16 %v674
    %v866 = vunpack.c.l.b16 %v675
    %v867 = vunpack.c.l.b16 %v676
    %v868 = vunpack.c.l.b16 %v677
    %v869 = vunpack.c.l.b16 %v678
    %v870 = vunpack.c.l.b16 %v679
    %v871 = vunpack.c.l.b16 %v680
    %v872 = vunpack.c.l.b16 %v681
    %v873 = vunpack.c.l.b16 %v682
    %v874 = vunpack.c.l.b16 %v683
    %v875 = vunpack.c.l.b16 %v684
    %v876 = vunpack.c.l.b16 %v685
    %v877 = vunpack.c.l.b16 %v686
    %v878 = vunpack.c.l.b16 %v687
    %v879 = vunpack.c.l.b16 %v688
    %v880 = vunpack.c.l.b16 %v689
    %v881 = vunpack.c.l.b16 %v690
    %v882 = vunpack.c.l.b16 %v691
    %v883 = vunpack.c.l.b16 %v692
    %v884 = vunpack.c.l.b16 %v693
    %v885 = vunpack.c.l.b16 %v694
    %v886 = vunpack.c.l.b16 %v695
    %v887 = vunpack.c.l.b16 %v696
    %v888 = vunpack.c.l.b16 %v697
    %v889 = vpack.c.b16 %v858, %v857
    %v890 = vpack.c.b16 %v860, %v859
    %v891 = vpack.c.b16 %v862, %v861
    %v892 = vpack.c.b16 %v864, %v863
    %v893 = vpack.c.b16 %v866, %v865
    %v894 = vpack.c.b16 %v868, %v867
    %v895 = vpack.c.b16 %v870, %v869
    %v896 = vpack.c.b16 %v872, %v871
    %v897 = vpack.c.b16 %v874, %v873
    %v898 = vpack.c.b16 %v876, %v875
    %v899 = vpack.c.b16 %v878, %v877
    %v900 = vpack.c.b16 %v880, %v879
    %v901 = vpack.c.b16 %v882, %v881
    %v902 = vpack.c.b16 %v884, %v883
    %v903 = vpack.c.b16 %v886, %v885
    %v904 = vpack.c.b16 %v888, %v887
    %921 = vmatprep.subr.bf16.mxu0 0
    %922 = vmatpush1.bf16.msra.mxu0 %v896
    %923 = vmatprep.subr.bf16.mxu0 0
    %924 = vmatpush1.bf16.msra.mxu0 %v895
    %925 = vmatprep.subr.bf16.mxu0 0
    %926 = vmatpush1.bf16.msra.mxu0 %v894
    %927 = vmatprep.subr.bf16.mxu0 0
    %928 = vmatpush1.bf16.msra.mxu0 %v893
    %929 = vmatprep.subr.bf16.mxu0 0
    %930 = vmatpush1.bf16.msra.mxu0 %v892
    %931 = vmatprep.subr.bf16.mxu0 0
    %932 = vmatpush1.bf16.msra.mxu0 %v891
    %933 = vmatprep.subr.bf16.mxu0 0
    %934 = vmatpush1.bf16.msra.mxu0 %v890
    %935 = vmatprep.subr.bf16.mxu0 0
    %936 = vmatpush1.bf16.msra.mxu0 %v889
    %937 = vmatprep.subr.bf16.mxu0 0
    %938 = vmatpush2.bf16.msra.mxu0 %v904
    %939 = vmatprep.subr.bf16.mxu0 0
    %940 = vmatpush2.bf16.msra.mxu0 %v903
    %941 = vmatprep.subr.bf16.mxu0 0
    %942 = vmatpush2.bf16.msra.mxu0 %v902
    %943 = vmatprep.subr.bf16.mxu0 0
    %944 = vmatpush2.bf16.msra.mxu0 %v901
    %945 = vmatprep.subr.bf16.mxu0 0
    %946 = vmatpush2.bf16.msra.mxu0 %v900
    %947 = vmatprep.subr.bf16.mxu0 0
    %948 = vmatpush2.bf16.msra.mxu0 %v899
    %949 = vmatprep.subr.bf16.mxu0 0
    %950 = vmatpush2.bf16.msra.mxu0 %v898
    %951 = vmatprep.subr.bf16.mxu0 0
    %952 = vmatpush2.bf16.msra.mxu0 %v897
    %953 = vmatprep.mubr.bf16.mxu0 %v778
    %954 = vmatmul.mubr.bf16.gmra.mxu0 %v777
    %v955 = vpop.f32.mrf.mxu0
    %v956 = vadd.f32 %v703, %v955
    %v957 = vpop.f32.mrf.mxu0
    %v958 = vpop.f32.mrf.mxu0
    %v959 = vadd.f32 %v703, %v958
    %v960 = vpop.f32.mrf.mxu0
    %961 = vmatprep.mubr.bf16.mxu0 %v780
    %962 = vmatmul.mubr.bf16.gmra.mxu0 %v779
    %v963 = vpop.f32.mrf.mxu0
    %v964 = vadd.f32 %v703, %v963
    %v965 = vpop.f32.mrf.mxu0
    %v966 = vpop.f32.mrf.mxu0
    %v967 = vadd.f32 %v703, %v966
    %v968 = vpop.f32.mrf.mxu0
    %969 = vmatprep.mubr.bf16.mxu0 %v782
    %970 = vmatmul.mubr.bf16.gmra.mxu0 %v781
    %v971 = vpop.f32.mrf.mxu0
    %v972 = vadd.f32 %v703, %v971
    %v973 = vpop.f32.mrf.mxu0
    %v974 = vpop.f32.mrf.mxu0
    %v975 = vadd.f32 %v703, %v974
    %v976 = vpop.f32.mrf.mxu0
    %977 = vmatprep.mubr.bf16.mxu0 %v784
    %978 = vmatmul.mubr.bf16.gmra.mxu0 %v783
    %v979 = vpop.f32.mrf.mxu0
    %v980 = vadd.f32 %v703, %v979
    %v981 = vpop.f32.mrf.mxu0
    %v982 = vpop.f32.mrf.mxu0
    %v983 = vadd.f32 %v703, %v982
    %v984 = vpop.f32.mrf.mxu0
    %985 = vmatprep.mubr.bf16.mxu0 %v786
    %986 = vmatmul.mubr.bf16.gmra.mxu0 %v785
    %v987 = vpop.f32.mrf.mxu0
    %v988 = vadd.f32 %v703, %v987
    %v989 = vpop.f32.mrf.mxu0
    %v990 = vpop.f32.mrf.mxu0
    %v991 = vadd.f32 %v703, %v990
    %v992 = vpop.f32.mrf.mxu0
    %993 = vmatprep.mubr.bf16.mxu0 %v788
    %994 = vmatmul.mubr.bf16.gmra.mxu0 %v787
    %v995 = vpop.f32.mrf.mxu0
    %v996 = vadd.f32 %v703, %v995
    %v997 = vpop.f32.mrf.mxu0
    %v998 = vpop.f32.mrf.mxu0
    %v999 = vadd.f32 %v703, %v998
    %v1000 = vpop.f32.mrf.mxu0
    %1001 = vmatprep.mubr.bf16.mxu0 %v790
    %1002 = vmatmul.mubr.bf16.gmra.mxu0 %v789
    %v1003 = vpop.f32.mrf.mxu0
    %v1004 = vadd.f32 %v703, %v1003
    %v1005 = vpop.f32.mrf.mxu0
    %v1006 = vpop.f32.mrf.mxu0
    %v1007 = vadd.f32 %v703, %v1006
    %v1008 = vpop.f32.mrf.mxu0
    %1009 = vmatprep.mubr.bf16.mxu0 %v792
    %1010 = vmatmul.mubr.bf16.gmra.mxu0 %v791
    %v1011 = vpop.f32.mrf.mxu0
    %v1012 = vadd.f32 %v703, %v1011
    %v1013 = vpop.f32.mrf.mxu0
    %v1014 = vpop.f32.mrf.mxu0
    %v1015 = vadd.f32 %v703, %v1014
    %v1016 = vpop.f32.mrf.mxu0
    %1017 = vmatprep.mubr.bf16.mxu0 %v794
    %1018 = vmatmul.mubr.bf16.gmra.mxu0 %v793
    %v1019 = vpop.f32.mrf.mxu0
    %v1020 = vadd.f32 %v703, %v1019
    %v1021 = vpop.f32.mrf.mxu0
    %v1022 = vpop.f32.mrf.mxu0
    %v1023 = vadd.f32 %v703, %v1022
    %v1024 = vpop.f32.mrf.mxu0
    %1025 = vmatprep.mubr.bf16.mxu0 %v796
    %1026 = vmatmul.mubr.bf16.gmra.mxu0 %v795
    %v1027 = vpop.f32.mrf.mxu0
    %v1028 = vadd.f32 %v703, %v1027
    %v1029 = vpop.f32.mrf.mxu0
    %v1030 = vpop.f32.mrf.mxu0
    %v1031 = vadd.f32 %v703, %v1030
    %v1032 = vpop.f32.mrf.mxu0
    %1033 = vmatprep.mubr.bf16.mxu0 %v798
    %1034 = vmatmul.mubr.bf16.gmra.mxu0 %v797
    %v1035 = vpop.f32.mrf.mxu0
    %v1036 = vadd.f32 %v703, %v1035
    %v1037 = vpop.f32.mrf.mxu0
    %v1038 = vpop.f32.mrf.mxu0
    %v1039 = vadd.f32 %v703, %v1038
    %v1040 = vpop.f32.mrf.mxu0
    %1041 = vmatprep.mubr.bf16.mxu0 %v800
    %1042 = vmatmul.mubr.bf16.gmra.mxu0 %v799
    %v1043 = vpop.f32.mrf.mxu0
    %v1044 = vadd.f32 %v703, %v1043
    %v1045 = vpop.f32.mrf.mxu0
    %v1046 = vpop.f32.mrf.mxu0
    %v1047 = vadd.f32 %v703, %v1046
    %v1048 = vpop.f32.mrf.mxu0
    %1049 = vdwg.mxu0
    %vm1050 = vcmp.lt.s32.totalorder %v112, 34
    %vm1051 = vcmp.lt.s32.totalorder %v87, 192
    %vm1052 = vcmp.lt.s32.totalorder %v88, 192
    %vm1053 = vcmp.lt.s32.totalorder %v89, 192
    %vm1054 = vcmp.lt.s32.totalorder %v90, 192
    %vm1055 = vcmp.lt.s32.totalorder %v91, 192
    %vm1056 = vcmp.lt.s32.totalorder %v92, 192
    %vm1057 = vcmp.lt.s32.totalorder %v93, 192
    %vm1058 = vcmp.lt.s32.totalorder %v94, 192
    %vm1059 = vcmp.lt.s32.totalorder %v95, 192
    %vm1060 = vcmp.lt.s32.totalorder %v96, 192
    %vm1061 = vcmp.lt.s32.totalorder %v97, 192
    %vm1062 = vcmp.lt.s32.totalorder %v98, 192
    %vm1063 = vcmp.lt.s32.totalorder %v99, 192
    %vm1064 = vcmp.lt.s32.totalorder %v100, 192
    %vm1065 = vcmp.lt.s32.totalorder %v101, 192
    %vm1066 = vcmp.lt.s32.totalorder %v102, 192
    %vm1067 = vcmp.lt.s32.totalorder %v103, 192
    %vm1068 = vcmp.lt.s32.totalorder %v104, 192
    %vm1069 = vcmp.lt.s32.totalorder %v105, 192
    %vm1070 = vcmp.lt.s32.totalorder %v106, 192
    %vm1071 = vcmp.lt.s32.totalorder %v107, 192
    %vm1072 = vcmp.lt.s32.totalorder %v108, 192
    %vm1073 = vcmp.lt.s32.totalorder %v109, 192
    %vm1074 = vcmp.lt.s32.totalorder %v110, 192
    %v1075 = vsel %vm1050, %v956, -1e+30
    %v1076 = vsel %vm1050, %v959, -1e+30
    %v1077 = vsel %vm1050, %v964, -1e+30
    %v1078 = vsel %vm1050, %v967, -1e+30
    %v1079 = vsel %vm1050, %v972, -1e+30
    %v1080 = vsel %vm1050, %v975, -1e+30
    %v1081 = vsel %vm1050, %v980, -1e+30
    %v1082 = vsel %vm1050, %v983, -1e+30
    %v1083 = vsel %vm1050, %v988, -1e+30
    %v1084 = vsel %vm1050, %v991, -1e+30
    %v1085 = vsel %vm1050, %v996, -1e+30
    %v1086 = vsel %vm1050, %v999, -1e+30
    %v1087 = vsel %vm1050, %v1004, -1e+30
    %v1088 = vsel %vm1050, %v1007, -1e+30
    %v1089 = vsel %vm1050, %v1012, -1e+30
    %v1090 = vsel %vm1050, %v1015, -1e+30
    %v1091 = vsel %vm1050, %v1020, -1e+30
    %v1092 = vsel %vm1050, %v1023, -1e+30
    %v1093 = vsel %vm1050, %v1028, -1e+30
    %v1094 = vsel %vm1050, %v1031, -1e+30
    %v1095 = vsel %vm1050, %v1036, -1e+30
    %v1096 = vsel %vm1050, %v1039, -1e+30
    %v1097 = vsel %vm1050, %v1044, -1e+30
    %v1098 = vsel %vm1050, %v1047, -1e+30
    %1099 = vmax.xlane.f32.xlu0 %v1075
    %v1100 = vpop.xlane.xlu0 %1099
    %1101 = vmax.xlane.f32.xlu0 %v1076
    %v1102 = vpop.xlane.xlu0 %1101
    %1103 = vmax.xlane.f32.xlu0 %v1077
    %v1104 = vpop.xlane.xlu0 %1103
    %1105 = vmax.xlane.f32.xlu0 %v1078
    %v1106 = vpop.xlane.xlu0 %1105
    %1107 = vmax.xlane.f32.xlu0 %v1079
    %v1108 = vpop.xlane.xlu0 %1107
    %1109 = vmax.xlane.f32.xlu0 %v1080
    %v1110 = vpop.xlane.xlu0 %1109
    %1111 = vmax.xlane.f32.xlu0 %v1081
    %v1112 = vpop.xlane.xlu0 %1111
    %1113 = vmax.xlane.f32.xlu0 %v1082
    %v1114 = vpop.xlane.xlu0 %1113
    %1115 = vmax.xlane.f32.xlu0 %v1083
    %v1116 = vpop.xlane.xlu0 %1115
    %1117 = vmax.xlane.f32.xlu0 %v1084
    %v1118 = vpop.xlane.xlu0 %1117
    %1119 = vmax.xlane.f32.xlu0 %v1085
    %v1120 = vpop.xlane.xlu0 %1119
    %1121 = vmax.xlane.f32.xlu0 %v1086
    %v1122 = vpop.xlane.xlu0 %1121
    %1123 = vmax.xlane.f32.xlu0 %v1087
    %v1124 = vpop.xlane.xlu0 %1123
    %1125 = vmax.xlane.f32.xlu0 %v1088
    %v1126 = vpop.xlane.xlu0 %1125
    %1127 = vmax.xlane.f32.xlu0 %v1089
    %v1128 = vpop.xlane.xlu0 %1127
    %1129 = vmax.xlane.f32.xlu0 %v1090
    %v1130 = vpop.xlane.xlu0 %1129
    %1131 = vmax.xlane.f32.xlu0 %v1091
    %v1132 = vpop.xlane.xlu0 %1131
    %1133 = vmax.xlane.f32.xlu0 %v1092
    %v1134 = vpop.xlane.xlu0 %1133
    %1135 = vmax.xlane.f32.xlu0 %v1093
    %v1136 = vpop.xlane.xlu0 %1135
    %1137 = vmax.xlane.f32.xlu0 %v1094
    %v1138 = vpop.xlane.xlu0 %1137
    %1139 = vmax.xlane.f32.xlu0 %v1095
    %v1140 = vpop.xlane.xlu0 %1139
    %1141 = vmax.xlane.f32.xlu0 %v1096
    %v1142 = vpop.xlane.xlu0 %1141
    %1143 = vmax.xlane.f32.xlu0 %v1097
    %v1144 = vpop.xlane.xlu0 %1143
    %1145 = vmax.xlane.f32.xlu0 %v1098
    %v1146 = vpop.xlane.xlu0 %1145
    %vm1147 = vcmp.ge.f32.partialorder %v1075, %v1100
    %vm1148 = vcmp.ge.f32.partialorder %v1076, %v1102
    %vm1149 = vcmp.ge.f32.partialorder %v1077, %v1104
    %vm1150 = vcmp.ge.f32.partialorder %v1078, %v1106
    %vm1151 = vcmp.ge.f32.partialorder %v1079, %v1108
    %vm1152 = vcmp.ge.f32.partialorder %v1080, %v1110
    %vm1153 = vcmp.ge.f32.partialorder %v1081, %v1112
    %vm1154 = vcmp.ge.f32.partialorder %v1082, %v1114
    %vm1155 = vcmp.ge.f32.partialorder %v1083, %v1116
    %vm1156 = vcmp.ge.f32.partialorder %v1084, %v1118
    %vm1157 = vcmp.ge.f32.partialorder %v1085, %v1120
    %vm1158 = vcmp.ge.f32.partialorder %v1086, %v1122
    %vm1159 = vcmp.ge.f32.partialorder %v1087, %v1124
    %vm1160 = vcmp.ge.f32.partialorder %v1088, %v1126
    %vm1161 = vcmp.ge.f32.partialorder %v1089, %v1128
    %vm1162 = vcmp.ge.f32.partialorder %v1090, %v1130
    %vm1163 = vcmp.ge.f32.partialorder %v1091, %v1132
    %vm1164 = vcmp.ge.f32.partialorder %v1092, %v1134
    %vm1165 = vcmp.ge.f32.partialorder %v1093, %v1136
    %vm1166 = vcmp.ge.f32.partialorder %v1094, %v1138
    %vm1167 = vcmp.ge.f32.partialorder %v1095, %v1140
    %vm1168 = vcmp.ge.f32.partialorder %v1096, %v1142
    %vm1169 = vcmp.ge.f32.partialorder %v1097, %v1144
    %vm1170 = vcmp.ge.f32.partialorder %v1098, %v1146
    %v1171 = vsel %vm1147, %v112, 128
    %v1172 = vsel %vm1148, %v112, 128
    %v1173 = vsel %vm1149, %v112, 128
    %v1174 = vsel %vm1150, %v112, 128
    %v1175 = vsel %vm1151, %v112, 128
    %v1176 = vsel %vm1152, %v112, 128
    %v1177 = vsel %vm1153, %v112, 128
    %v1178 = vsel %vm1154, %v112, 128
    %v1179 = vsel %vm1155, %v112, 128
    %v1180 = vsel %vm1156, %v112, 128
    %v1181 = vsel %vm1157, %v112, 128
    %v1182 = vsel %vm1158, %v112, 128
    %v1183 = vsel %vm1159, %v112, 128
    %v1184 = vsel %vm1160, %v112, 128
    %v1185 = vsel %vm1161, %v112, 128
    %v1186 = vsel %vm1162, %v112, 128
    %v1187 = vsel %vm1163, %v112, 128
    %v1188 = vsel %vm1164, %v112, 128
    %v1189 = vsel %vm1165, %v112, 128
    %v1190 = vsel %vm1166, %v112, 128
    %v1191 = vsel %vm1167, %v112, 128
    %v1192 = vsel %vm1168, %v112, 128
    %v1193 = vsel %vm1169, %v112, 128
    %v1194 = vsel %vm1170, %v112, 128
    %v1195 = vand.u32 %v1171, 65535
    %v1196 = vshra.s32 %v1171, 16
    %v1197 = vcvt.s32.f32 %v1195
    %v1198 = vcvt.s32.f32 %v1196
    %1199 = vmin.xlane.f32.xlu0 %v1198
    %v1200 = vpop.xlane.xlu0 %1199
    %vm1201 = vcmp.eq.f32.partialorder %v1198, %v1200
    %v1202 = vsel %vm1201, %v1197, inf
    %1203 = vmin.xlane.f32.xlu0 %v1202
    %v1204 = vpop.xlane.xlu0 %1203
    %v1205 = vcvt.f32.s32 %v1204
    %v1206 = vcvt.f32.s32 %v1200
    %v1207 = vshll.u32 %v1206, 16
    %v1208 = vadd.s32 %v1207, %v1205
    %v1209 = vand.u32 %v1172, 65535
    %v1210 = vshra.s32 %v1172, 16
    %v1211 = vcvt.s32.f32 %v1209
    %v1212 = vcvt.s32.f32 %v1210
    %1213 = vmin.xlane.f32.xlu0 %v1212
    %v1214 = vpop.xlane.xlu0 %1213
    %vm1215 = vcmp.eq.f32.partialorder %v1212, %v1214
    %v1216 = vsel %vm1215, %v1211, inf
    %1217 = vmin.xlane.f32.xlu0 %v1216
    %v1218 = vpop.xlane.xlu0 %1217
    %v1219 = vcvt.f32.s32 %v1218
    %v1220 = vcvt.f32.s32 %v1214
    %v1221 = vshll.u32 %v1220, 16
    %v1222 = vadd.s32 %v1221, %v1219
    %v1223 = vand.u32 %v1173, 65535
    %v1224 = vshra.s32 %v1173, 16
    %v1225 = vcvt.s32.f32 %v1223
    %v1226 = vcvt.s32.f32 %v1224
    %1227 = vmin.xlane.f32.xlu0 %v1226
    %v1228 = vpop.xlane.xlu0 %1227
    %vm1229 = vcmp.eq.f32.partialorder %v1226, %v1228
    %v1230 = vsel %vm1229, %v1225, inf
    %1231 = vmin.xlane.f32.xlu0 %v1230
    %v1232 = vpop.xlane.xlu0 %1231
    %v1233 = vcvt.f32.s32 %v1232
    %v1234 = vcvt.f32.s32 %v1228
    %v1235 = vshll.u32 %v1234, 16
    %v1236 = vadd.s32 %v1235, %v1233
    %v1237 = vand.u32 %v1174, 65535
    %v1238 = vshra.s32 %v1174, 16
    %v1239 = vcvt.s32.f32 %v1237
    %v1240 = vcvt.s32.f32 %v1238
    %1241 = vmin.xlane.f32.xlu0 %v1240
    %v1242 = vpop.xlane.xlu0 %1241
    %vm1243 = vcmp.eq.f32.partialorder %v1240, %v1242
    %v1244 = vsel %vm1243, %v1239, inf
    %1245 = vmin.xlane.f32.xlu0 %v1244
    %v1246 = vpop.xlane.xlu0 %1245
    %v1247 = vcvt.f32.s32 %v1246
    %v1248 = vcvt.f32.s32 %v1242
    %v1249 = vshll.u32 %v1248, 16
    %v1250 = vadd.s32 %v1249, %v1247
    %v1251 = vand.u32 %v1175, 65535
    %v1252 = vshra.s32 %v1175, 16
    %v1253 = vcvt.s32.f32 %v1251
    %v1254 = vcvt.s32.f32 %v1252
    %1255 = vmin.xlane.f32.xlu0 %v1254
    %v1256 = vpop.xlane.xlu0 %1255
    %vm1257 = vcmp.eq.f32.partialorder %v1254, %v1256
    %v1258 = vsel %vm1257, %v1253, inf
    %1259 = vmin.xlane.f32.xlu0 %v1258
    %v1260 = vpop.xlane.xlu0 %1259
    %v1261 = vcvt.f32.s32 %v1260
    %v1262 = vcvt.f32.s32 %v1256
    %v1263 = vshll.u32 %v1262, 16
    %v1264 = vadd.s32 %v1263, %v1261
    %v1265 = vand.u32 %v1176, 65535
    %v1266 = vshra.s32 %v1176, 16
    %v1267 = vcvt.s32.f32 %v1265
    %v1268 = vcvt.s32.f32 %v1266
    %1269 = vmin.xlane.f32.xlu0 %v1268
    %v1270 = vpop.xlane.xlu0 %1269
    %vm1271 = vcmp.eq.f32.partialorder %v1268, %v1270
    %v1272 = vsel %vm1271, %v1267, inf
    %1273 = vmin.xlane.f32.xlu0 %v1272
    %v1274 = vpop.xlane.xlu0 %1273
    %v1275 = vcvt.f32.s32 %v1274
    %v1276 = vcvt.f32.s32 %v1270
    %v1277 = vshll.u32 %v1276, 16
    %v1278 = vadd.s32 %v1277, %v1275
    %v1279 = vand.u32 %v1177, 65535
    %v1280 = vshra.s32 %v1177, 16
    %v1281 = vcvt.s32.f32 %v1279
    %v1282 = vcvt.s32.f32 %v1280
    %1283 = vmin.xlane.f32.xlu0 %v1282
    %v1284 = vpop.xlane.xlu0 %1283
    %vm1285 = vcmp.eq.f32.partialorder %v1282, %v1284
    %v1286 = vsel %vm1285, %v1281, inf
    %1287 = vmin.xlane.f32.xlu0 %v1286
    %v1288 = vpop.xlane.xlu0 %1287
    %v1289 = vcvt.f32.s32 %v1288
    %v1290 = vcvt.f32.s32 %v1284
    %v1291 = vshll.u32 %v1290, 16
    %v1292 = vadd.s32 %v1291, %v1289
    %v1293 = vand.u32 %v1178, 65535
    %v1294 = vshra.s32 %v1178, 16
    %v1295 = vcvt.s32.f32 %v1293
    %v1296 = vcvt.s32.f32 %v1294
    %1297 = vmin.xlane.f32.xlu0 %v1296
    %v1298 = vpop.xlane.xlu0 %1297
    %vm1299 = vcmp.eq.f32.partialorder %v1296, %v1298
    %v1300 = vsel %vm1299, %v1295, inf
    %1301 = vmin.xlane.f32.xlu0 %v1300
    %v1302 = vpop.xlane.xlu0 %1301
    %v1303 = vcvt.f32.s32 %v1302
    %v1304 = vcvt.f32.s32 %v1298
    %v1305 = vshll.u32 %v1304, 16
    %v1306 = vadd.s32 %v1305, %v1303
    %v1307 = vand.u32 %v1179, 65535
    %v1308 = vshra.s32 %v1179, 16
    %v1309 = vcvt.s32.f32 %v1307
    %v1310 = vcvt.s32.f32 %v1308
    %1311 = vmin.xlane.f32.xlu0 %v1310
    %v1312 = vpop.xlane.xlu0 %1311
    %vm1313 = vcmp.eq.f32.partialorder %v1310, %v1312
    %v1314 = vsel %vm1313, %v1309, inf
    %1315 = vmin.xlane.f32.xlu0 %v1314
    %v1316 = vpop.xlane.xlu0 %1315
    %v1317 = vcvt.f32.s32 %v1316
    %v1318 = vcvt.f32.s32 %v1312
    %v1319 = vshll.u32 %v1318, 16
    %v1320 = vadd.s32 %v1319, %v1317
    %v1321 = vand.u32 %v1180, 65535
    %v1322 = vshra.s32 %v1180, 16
    %v1323 = vcvt.s32.f32 %v1321
    %v1324 = vcvt.s32.f32 %v1322
    %1325 = vmin.xlane.f32.xlu0 %v1324
    %v1326 = vpop.xlane.xlu0 %1325
    %vm1327 = vcmp.eq.f32.partialorder %v1324, %v1326
    %v1328 = vsel %vm1327, %v1323, inf
    %1329 = vmin.xlane.f32.xlu0 %v1328
    %v1330 = vpop.xlane.xlu0 %1329
    %v1331 = vcvt.f32.s32 %v1330
    %v1332 = vcvt.f32.s32 %v1326
    %v1333 = vshll.u32 %v1332, 16
    %v1334 = vadd.s32 %v1333, %v1331
    %v1335 = vand.u32 %v1181, 65535
    %v1336 = vshra.s32 %v1181, 16
    %v1337 = vcvt.s32.f32 %v1335
    %v1338 = vcvt.s32.f32 %v1336
    %1339 = vmin.xlane.f32.xlu0 %v1338
    %v1340 = vpop.xlane.xlu0 %1339
    %vm1341 = vcmp.eq.f32.partialorder %v1338, %v1340
    %v1342 = vsel %vm1341, %v1337, inf
    %1343 = vmin.xlane.f32.xlu0 %v1342
    %v1344 = vpop.xlane.xlu0 %1343
    %v1345 = vcvt.f32.s32 %v1344
    %v1346 = vcvt.f32.s32 %v1340
    %v1347 = vshll.u32 %v1346, 16
    %v1348 = vadd.s32 %v1347, %v1345
    %v1349 = vand.u32 %v1182, 65535
    %v1350 = vshra.s32 %v1182, 16
    %v1351 = vcvt.s32.f32 %v1349
    %v1352 = vcvt.s32.f32 %v1350
    %1353 = vmin.xlane.f32.xlu0 %v1352
    %v1354 = vpop.xlane.xlu0 %1353
    %vm1355 = vcmp.eq.f32.partialorder %v1352, %v1354
    %v1356 = vsel %vm1355, %v1351, inf
    %1357 = vmin.xlane.f32.xlu0 %v1356
    %v1358 = vpop.xlane.xlu0 %1357
    %v1359 = vcvt.f32.s32 %v1358
    %v1360 = vcvt.f32.s32 %v1354
    %v1361 = vshll.u32 %v1360, 16
    %v1362 = vadd.s32 %v1361, %v1359
    %v1363 = vand.u32 %v1183, 65535
    %v1364 = vshra.s32 %v1183, 16
    %v1365 = vcvt.s32.f32 %v1363
    %v1366 = vcvt.s32.f32 %v1364
    %1367 = vmin.xlane.f32.xlu0 %v1366
    %v1368 = vpop.xlane.xlu0 %1367
    %vm1369 = vcmp.eq.f32.partialorder %v1366, %v1368
    %v1370 = vsel %vm1369, %v1365, inf
    %1371 = vmin.xlane.f32.xlu0 %v1370
    %v1372 = vpop.xlane.xlu0 %1371
    %v1373 = vcvt.f32.s32 %v1372
    %v1374 = vcvt.f32.s32 %v1368
    %v1375 = vshll.u32 %v1374, 16
    %v1376 = vadd.s32 %v1375, %v1373
    %v1377 = vand.u32 %v1184, 65535
    %v1378 = vshra.s32 %v1184, 16
    %v1379 = vcvt.s32.f32 %v1377
    %v1380 = vcvt.s32.f32 %v1378
    %1381 = vmin.xlane.f32.xlu0 %v1380
    %v1382 = vpop.xlane.xlu0 %1381
    %vm1383 = vcmp.eq.f32.partialorder %v1380, %v1382
    %v1384 = vsel %vm1383, %v1379, inf
    %1385 = vmin.xlane.f32.xlu0 %v1384
    %v1386 = vpop.xlane.xlu0 %1385
    %v1387 = vcvt.f32.s32 %v1386
    %v1388 = vcvt.f32.s32 %v1382
    %v1389 = vshll.u32 %v1388, 16
    %v1390 = vadd.s32 %v1389, %v1387
    %v1391 = vand.u32 %v1185, 65535
    %v1392 = vshra.s32 %v1185, 16
    %v1393 = vcvt.s32.f32 %v1391
    %v1394 = vcvt.s32.f32 %v1392
    %1395 = vmin.xlane.f32.xlu0 %v1394
    %v1396 = vpop.xlane.xlu0 %1395
    %vm1397 = vcmp.eq.f32.partialorder %v1394, %v1396
    %v1398 = vsel %vm1397, %v1393, inf
    %1399 = vmin.xlane.f32.xlu0 %v1398
    %v1400 = vpop.xlane.xlu0 %1399
    %v1401 = vcvt.f32.s32 %v1400
    %v1402 = vcvt.f32.s32 %v1396
    %v1403 = vshll.u32 %v1402, 16
    %v1404 = vadd.s32 %v1403, %v1401
    %v1405 = vand.u32 %v1186, 65535
    %v1406 = vshra.s32 %v1186, 16
    %v1407 = vcvt.s32.f32 %v1405
    %v1408 = vcvt.s32.f32 %v1406
    %1409 = vmin.xlane.f32.xlu0 %v1408
    %v1410 = vpop.xlane.xlu0 %1409
    %vm1411 = vcmp.eq.f32.partialorder %v1408, %v1410
    %v1412 = vsel %vm1411, %v1407, inf
    %1413 = vmin.xlane.f32.xlu0 %v1412
    %v1414 = vpop.xlane.xlu0 %1413
    %v1415 = vcvt.f32.s32 %v1414
    %v1416 = vcvt.f32.s32 %v1410
    %v1417 = vshll.u32 %v1416, 16
    %v1418 = vadd.s32 %v1417, %v1415
    %v1419 = vand.u32 %v1187, 65535
    %v1420 = vshra.s32 %v1187, 16
    %v1421 = vcvt.s32.f32 %v1419
    %v1422 = vcvt.s32.f32 %v1420
    %1423 = vmin.xlane.f32.xlu0 %v1422
    %v1424 = vpop.xlane.xlu0 %1423
    %vm1425 = vcmp.eq.f32.partialorder %v1422, %v1424
    %v1426 = vsel %vm1425, %v1421, inf
    %1427 = vmin.xlane.f32.xlu0 %v1426
    %v1428 = vpop.xlane.xlu0 %1427
    %v1429 = vcvt.f32.s32 %v1428
    %v1430 = vcvt.f32.s32 %v1424
    %v1431 = vshll.u32 %v1430, 16
    %v1432 = vadd.s32 %v1431, %v1429
    %v1433 = vand.u32 %v1188, 65535
    %v1434 = vshra.s32 %v1188, 16
    %v1435 = vcvt.s32.f32 %v1433
    %v1436 = vcvt.s32.f32 %v1434
    %1437 = vmin.xlane.f32.xlu0 %v1436
    %v1438 = vpop.xlane.xlu0 %1437
    %vm1439 = vcmp.eq.f32.partialorder %v1436, %v1438
    %v1440 = vsel %vm1439, %v1435, inf
    %1441 = vmin.xlane.f32.xlu0 %v1440
    %v1442 = vpop.xlane.xlu0 %1441
    %v1443 = vcvt.f32.s32 %v1442
    %v1444 = vcvt.f32.s32 %v1438
    %v1445 = vshll.u32 %v1444, 16
    %v1446 = vadd.s32 %v1445, %v1443
    %v1447 = vand.u32 %v1189, 65535
    %v1448 = vshra.s32 %v1189, 16
    %v1449 = vcvt.s32.f32 %v1447
    %v1450 = vcvt.s32.f32 %v1448
    %1451 = vmin.xlane.f32.xlu0 %v1450
    %v1452 = vpop.xlane.xlu0 %1451
    %vm1453 = vcmp.eq.f32.partialorder %v1450, %v1452
    %v1454 = vsel %vm1453, %v1449, inf
    %1455 = vmin.xlane.f32.xlu0 %v1454
    %v1456 = vpop.xlane.xlu0 %1455
    %v1457 = vcvt.f32.s32 %v1456
    %v1458 = vcvt.f32.s32 %v1452
    %v1459 = vshll.u32 %v1458, 16
    %v1460 = vadd.s32 %v1459, %v1457
    %v1461 = vand.u32 %v1190, 65535
    %v1462 = vshra.s32 %v1190, 16
    %v1463 = vcvt.s32.f32 %v1461
    %v1464 = vcvt.s32.f32 %v1462
    %1465 = vmin.xlane.f32.xlu0 %v1464
    %v1466 = vpop.xlane.xlu0 %1465
    %vm1467 = vcmp.eq.f32.partialorder %v1464, %v1466
    %v1468 = vsel %vm1467, %v1463, inf
    %1469 = vmin.xlane.f32.xlu0 %v1468
    %v1470 = vpop.xlane.xlu0 %1469
    %v1471 = vcvt.f32.s32 %v1470
    %v1472 = vcvt.f32.s32 %v1466
    %v1473 = vshll.u32 %v1472, 16
    %v1474 = vadd.s32 %v1473, %v1471
    %v1475 = vand.u32 %v1191, 65535
    %v1476 = vshra.s32 %v1191, 16
    %v1477 = vcvt.s32.f32 %v1475
    %v1478 = vcvt.s32.f32 %v1476
    %1479 = vmin.xlane.f32.xlu0 %v1478
    %v1480 = vpop.xlane.xlu0 %1479
    %vm1481 = vcmp.eq.f32.partialorder %v1478, %v1480
    %v1482 = vsel %vm1481, %v1477, inf
    %1483 = vmin.xlane.f32.xlu0 %v1482
    %v1484 = vpop.xlane.xlu0 %1483
    %v1485 = vcvt.f32.s32 %v1484
    %v1486 = vcvt.f32.s32 %v1480
    %v1487 = vshll.u32 %v1486, 16
    %v1488 = vadd.s32 %v1487, %v1485
    %v1489 = vand.u32 %v1192, 65535
    %v1490 = vshra.s32 %v1192, 16
    %v1491 = vcvt.s32.f32 %v1489
    %v1492 = vcvt.s32.f32 %v1490
    %1493 = vmin.xlane.f32.xlu0 %v1492
    %v1494 = vpop.xlane.xlu0 %1493
    %vm1495 = vcmp.eq.f32.partialorder %v1492, %v1494
    %v1496 = vsel %vm1495, %v1491, inf
    %1497 = vmin.xlane.f32.xlu0 %v1496
    %v1498 = vpop.xlane.xlu0 %1497
    %v1499 = vcvt.f32.s32 %v1498
    %v1500 = vcvt.f32.s32 %v1494
    %v1501 = vshll.u32 %v1500, 16
    %v1502 = vadd.s32 %v1501, %v1499
    %v1503 = vand.u32 %v1193, 65535
    %v1504 = vshra.s32 %v1193, 16
    %v1505 = vcvt.s32.f32 %v1503
    %v1506 = vcvt.s32.f32 %v1504
    %1507 = vmin.xlane.f32.xlu0 %v1506
    %v1508 = vpop.xlane.xlu0 %1507
    %vm1509 = vcmp.eq.f32.partialorder %v1506, %v1508
    %v1510 = vsel %vm1509, %v1505, inf
    %1511 = vmin.xlane.f32.xlu0 %v1510
    %v1512 = vpop.xlane.xlu0 %1511
    %v1513 = vcvt.f32.s32 %v1512
    %v1514 = vcvt.f32.s32 %v1508
    %v1515 = vshll.u32 %v1514, 16
    %v1516 = vadd.s32 %v1515, %v1513
    %v1517 = vand.u32 %v1194, 65535
    %v1518 = vshra.s32 %v1194, 16
    %v1519 = vcvt.s32.f32 %v1517
    %v1520 = vcvt.s32.f32 %v1518
    %1521 = vmin.xlane.f32.xlu0 %v1520
    %v1522 = vpop.xlane.xlu0 %1521
    %vm1523 = vcmp.eq.f32.partialorder %v1520, %v1522
    %v1524 = vsel %vm1523, %v1519, inf
    %1525 = vmin.xlane.f32.xlu0 %v1524
    %v1526 = vpop.xlane.xlu0 %1525
    %v1527 = vcvt.f32.s32 %v1526
    %v1528 = vcvt.f32.s32 %v1522
    %v1529 = vshll.u32 %v1528, 16
    %v1530 = vadd.s32 %v1529, %v1527
    %v1531 = vlaneseq
    %v1532 = vshrl.u32 %v1531, 7
    %v1533 = vsub.s32 0, %v1532
    %v1534 = vrot.slane %v1208, %v1533
    %v1535 = vlaneseq
    %v1536 = vshrl.u32 %v1535, 7
    %v1537 = vsub.s32 1, %v1536
    %v1538 = vrot.slane %v1208, %v1537
    %v1539 = vlaneseq
    %v1540 = vshrl.u32 %v1539, 7
    %v1541 = vsub.s32 2, %v1540
    %v1542 = vrot.slane %v1208, %v1541
    %v1543 = vlaneseq
    %v1544 = vshrl.u32 %v1543, 7
    %v1545 = vsub.s32 3, %v1544
    %v1546 = vrot.slane %v1208, %v1545
    %v1547 = vlaneseq
    %v1548 = vshrl.u32 %v1547, 7
    %v1549 = vsub.s32 4, %v1548
    %v1550 = vrot.slane %v1208, %v1549
    %v1551 = vlaneseq
    %v1552 = vshrl.u32 %v1551, 7
    %v1553 = vsub.s32 5, %v1552
    %v1554 = vrot.slane %v1208, %v1553
    %v1555 = vlaneseq
    %v1556 = vshrl.u32 %v1555, 7
    %v1557 = vsub.s32 6, %v1556
    %v1558 = vrot.slane %v1208, %v1557
    %v1559 = vlaneseq
    %v1560 = vshrl.u32 %v1559, 7
    %v1561 = vsub.s32 7, %v1560
    %v1562 = vrot.slane %v1208, %v1561
    %v1563 = vlaneseq
    %v1564 = vshrl.u32 %v1563, 7
    %v1565 = vsub.s32 0, %v1564
    %v1566 = vrot.slane %v1222, %v1565
    %v1567 = vlaneseq
    %v1568 = vshrl.u32 %v1567, 7
    %v1569 = vsub.s32 1, %v1568
    %v1570 = vrot.slane %v1222, %v1569
    %v1571 = vlaneseq
    %v1572 = vshrl.u32 %v1571, 7
    %v1573 = vsub.s32 2, %v1572
    %v1574 = vrot.slane %v1222, %v1573
    %v1575 = vlaneseq
    %v1576 = vshrl.u32 %v1575, 7
    %v1577 = vsub.s32 3, %v1576
    %v1578 = vrot.slane %v1222, %v1577
    %v1579 = vlaneseq
    %v1580 = vshrl.u32 %v1579, 7
    %v1581 = vsub.s32 4, %v1580
    %v1582 = vrot.slane %v1222, %v1581
    %v1583 = vlaneseq
    %v1584 = vshrl.u32 %v1583, 7
    %v1585 = vsub.s32 5, %v1584
    %v1586 = vrot.slane %v1222, %v1585
    %v1587 = vlaneseq
    %v1588 = vshrl.u32 %v1587, 7
    %v1589 = vsub.s32 6, %v1588
    %v1590 = vrot.slane %v1222, %v1589
    %v1591 = vlaneseq
    %v1592 = vshrl.u32 %v1591, 7
    %v1593 = vsub.s32 7, %v1592
    %v1594 = vrot.slane %v1222, %v1593
    %v1595 = vlaneseq
    %v1596 = vshrl.u32 %v1595, 7
    %v1597 = vsub.s32 0, %v1596
    %v1598 = vrot.slane %v1236, %v1597
    %v1599 = vlaneseq
    %v1600 = vshrl.u32 %v1599, 7
    %v1601 = vsub.s32 1, %v1600
    %v1602 = vrot.slane %v1236, %v1601
    %v1603 = vlaneseq
    %v1604 = vshrl.u32 %v1603, 7
    %v1605 = vsub.s32 2, %v1604
    %v1606 = vrot.slane %v1236, %v1605
    %v1607 = vlaneseq
    %v1608 = vshrl.u32 %v1607, 7
    %v1609 = vsub.s32 3, %v1608
    %v1610 = vrot.slane %v1236, %v1609
    %v1611 = vlaneseq
    %v1612 = vshrl.u32 %v1611, 7
    %v1613 = vsub.s32 4, %v1612
    %v1614 = vrot.slane %v1236, %v1613
    %v1615 = vlaneseq
    %v1616 = vshrl.u32 %v1615, 7
    %v1617 = vsub.s32 5, %v1616
    %v1618 = vrot.slane %v1236, %v1617
    %v1619 = vlaneseq
    %v1620 = vshrl.u32 %v1619, 7
    %v1621 = vsub.s32 6, %v1620
    %v1622 = vrot.slane %v1236, %v1621
    %v1623 = vlaneseq
    %v1624 = vshrl.u32 %v1623, 7
    %v1625 = vsub.s32 7, %v1624
    %v1626 = vrot.slane %v1236, %v1625
    %v1627 = vlaneseq
    %v1628 = vshrl.u32 %v1627, 7
    %v1629 = vsub.s32 0, %v1628
    %v1630 = vrot.slane %v1250, %v1629
    %v1631 = vlaneseq
    %v1632 = vshrl.u32 %v1631, 7
    %v1633 = vsub.s32 1, %v1632
    %v1634 = vrot.slane %v1250, %v1633
    %v1635 = vlaneseq
    %v1636 = vshrl.u32 %v1635, 7
    %v1637 = vsub.s32 2, %v1636
    %v1638 = vrot.slane %v1250, %v1637
    %v1639 = vlaneseq
    %v1640 = vshrl.u32 %v1639, 7
    %v1641 = vsub.s32 3, %v1640
    %v1642 = vrot.slane %v1250, %v1641
    %v1643 = vlaneseq
    %v1644 = vshrl.u32 %v1643, 7
    %v1645 = vsub.s32 4, %v1644
    %v1646 = vrot.slane %v1250, %v1645
    %v1647 = vlaneseq
    %v1648 = vshrl.u32 %v1647, 7
    %v1649 = vsub.s32 5, %v1648
    %v1650 = vrot.slane %v1250, %v1649
    %v1651 = vlaneseq
    %v1652 = vshrl.u32 %v1651, 7
    %v1653 = vsub.s32 6, %v1652
    %v1654 = vrot.slane %v1250, %v1653
    %v1655 = vlaneseq
    %v1656 = vshrl.u32 %v1655, 7
    %v1657 = vsub.s32 7, %v1656
    %v1658 = vrot.slane %v1250, %v1657
    %v1659 = vlaneseq
    %v1660 = vshrl.u32 %v1659, 7
    %v1661 = vsub.s32 0, %v1660
    %v1662 = vrot.slane %v1264, %v1661
    %v1663 = vlaneseq
    %v1664 = vshrl.u32 %v1663, 7
    %v1665 = vsub.s32 1, %v1664
    %v1666 = vrot.slane %v1264, %v1665
    %v1667 = vlaneseq
    %v1668 = vshrl.u32 %v1667, 7
    %v1669 = vsub.s32 2, %v1668
    %v1670 = vrot.slane %v1264, %v1669
    %v1671 = vlaneseq
    %v1672 = vshrl.u32 %v1671, 7
    %v1673 = vsub.s32 3, %v1672
    %v1674 = vrot.slane %v1264, %v1673
    %v1675 = vlaneseq
    %v1676 = vshrl.u32 %v1675, 7
    %v1677 = vsub.s32 4, %v1676
    %v1678 = vrot.slane %v1264, %v1677
    %v1679 = vlaneseq
    %v1680 = vshrl.u32 %v1679, 7
    %v1681 = vsub.s32 5, %v1680
    %v1682 = vrot.slane %v1264, %v1681
    %v1683 = vlaneseq
    %v1684 = vshrl.u32 %v1683, 7
    %v1685 = vsub.s32 6, %v1684
    %v1686 = vrot.slane %v1264, %v1685
    %v1687 = vlaneseq
    %v1688 = vshrl.u32 %v1687, 7
    %v1689 = vsub.s32 7, %v1688
    %v1690 = vrot.slane %v1264, %v1689
    %v1691 = vlaneseq
    %v1692 = vshrl.u32 %v1691, 7
    %v1693 = vsub.s32 0, %v1692
    %v1694 = vrot.slane %v1278, %v1693
    %v1695 = vlaneseq
    %v1696 = vshrl.u32 %v1695, 7
    %v1697 = vsub.s32 1, %v1696
    %v1698 = vrot.slane %v1278, %v1697
    %v1699 = vlaneseq
    %v1700 = vshrl.u32 %v1699, 7
    %v1701 = vsub.s32 2, %v1700
    %v1702 = vrot.slane %v1278, %v1701
    %v1703 = vlaneseq
    %v1704 = vshrl.u32 %v1703, 7
    %v1705 = vsub.s32 3, %v1704
    %v1706 = vrot.slane %v1278, %v1705
    %v1707 = vlaneseq
    %v1708 = vshrl.u32 %v1707, 7
    %v1709 = vsub.s32 4, %v1708
    %v1710 = vrot.slane %v1278, %v1709
    %v1711 = vlaneseq
    %v1712 = vshrl.u32 %v1711, 7
    %v1713 = vsub.s32 5, %v1712
    %v1714 = vrot.slane %v1278, %v1713
    %v1715 = vlaneseq
    %v1716 = vshrl.u32 %v1715, 7
    %v1717 = vsub.s32 6, %v1716
    %v1718 = vrot.slane %v1278, %v1717
    %v1719 = vlaneseq
    %v1720 = vshrl.u32 %v1719, 7
    %v1721 = vsub.s32 7, %v1720
    %v1722 = vrot.slane %v1278, %v1721
    %v1723 = vlaneseq
    %v1724 = vshrl.u32 %v1723, 7
    %v1725 = vsub.s32 0, %v1724
    %v1726 = vrot.slane %v1292, %v1725
    %v1727 = vlaneseq
    %v1728 = vshrl.u32 %v1727, 7
    %v1729 = vsub.s32 1, %v1728
    %v1730 = vrot.slane %v1292, %v1729
    %v1731 = vlaneseq
    %v1732 = vshrl.u32 %v1731, 7
    %v1733 = vsub.s32 2, %v1732
    %v1734 = vrot.slane %v1292, %v1733
    %v1735 = vlaneseq
    %v1736 = vshrl.u32 %v1735, 7
    %v1737 = vsub.s32 3, %v1736
    %v1738 = vrot.slane %v1292, %v1737
    %v1739 = vlaneseq
    %v1740 = vshrl.u32 %v1739, 7
    %v1741 = vsub.s32 4, %v1740
    %v1742 = vrot.slane %v1292, %v1741
    %v1743 = vlaneseq
    %v1744 = vshrl.u32 %v1743, 7
    %v1745 = vsub.s32 5, %v1744
    %v1746 = vrot.slane %v1292, %v1745
    %v1747 = vlaneseq
    %v1748 = vshrl.u32 %v1747, 7
    %v1749 = vsub.s32 6, %v1748
    %v1750 = vrot.slane %v1292, %v1749
    %v1751 = vlaneseq
    %v1752 = vshrl.u32 %v1751, 7
    %v1753 = vsub.s32 7, %v1752
    %v1754 = vrot.slane %v1292, %v1753
    %v1755 = vlaneseq
    %v1756 = vshrl.u32 %v1755, 7
    %v1757 = vsub.s32 0, %v1756
    %v1758 = vrot.slane %v1306, %v1757
    %v1759 = vlaneseq
    %v1760 = vshrl.u32 %v1759, 7
    %v1761 = vsub.s32 1, %v1760
    %v1762 = vrot.slane %v1306, %v1761
    %v1763 = vlaneseq
    %v1764 = vshrl.u32 %v1763, 7
    %v1765 = vsub.s32 2, %v1764
    %v1766 = vrot.slane %v1306, %v1765
    %v1767 = vlaneseq
    %v1768 = vshrl.u32 %v1767, 7
    %v1769 = vsub.s32 3, %v1768
    %v1770 = vrot.slane %v1306, %v1769
    %v1771 = vlaneseq
    %v1772 = vshrl.u32 %v1771, 7
    %v1773 = vsub.s32 4, %v1772
    %v1774 = vrot.slane %v1306, %v1773
    %v1775 = vlaneseq
    %v1776 = vshrl.u32 %v1775, 7
    %v1777 = vsub.s32 5, %v1776
    %v1778 = vrot.slane %v1306, %v1777
    %v1779 = vlaneseq
    %v1780 = vshrl.u32 %v1779, 7
    %v1781 = vsub.s32 6, %v1780
    %v1782 = vrot.slane %v1306, %v1781
    %v1783 = vlaneseq
    %v1784 = vshrl.u32 %v1783, 7
    %v1785 = vsub.s32 7, %v1784
    %v1786 = vrot.slane %v1306, %v1785
    %v1787 = vlaneseq
    %v1788 = vshrl.u32 %v1787, 7
    %v1789 = vsub.s32 0, %v1788
    %v1790 = vrot.slane %v1320, %v1789
    %v1791 = vlaneseq
    %v1792 = vshrl.u32 %v1791, 7
    %v1793 = vsub.s32 1, %v1792
    %v1794 = vrot.slane %v1320, %v1793
    %v1795 = vlaneseq
    %v1796 = vshrl.u32 %v1795, 7
    %v1797 = vsub.s32 2, %v1796
    %v1798 = vrot.slane %v1320, %v1797
    %v1799 = vlaneseq
    %v1800 = vshrl.u32 %v1799, 7
    %v1801 = vsub.s32 3, %v1800
    %v1802 = vrot.slane %v1320, %v1801
    %v1803 = vlaneseq
    %v1804 = vshrl.u32 %v1803, 7
    %v1805 = vsub.s32 4, %v1804
    %v1806 = vrot.slane %v1320, %v1805
    %v1807 = vlaneseq
    %v1808 = vshrl.u32 %v1807, 7
    %v1809 = vsub.s32 5, %v1808
    %v1810 = vrot.slane %v1320, %v1809
    %v1811 = vlaneseq
    %v1812 = vshrl.u32 %v1811, 7
    %v1813 = vsub.s32 6, %v1812
    %v1814 = vrot.slane %v1320, %v1813
    %v1815 = vlaneseq
    %v1816 = vshrl.u32 %v1815, 7
    %v1817 = vsub.s32 7, %v1816
    %v1818 = vrot.slane %v1320, %v1817
    %v1819 = vlaneseq
    %v1820 = vshrl.u32 %v1819, 7
    %v1821 = vsub.s32 0, %v1820
    %v1822 = vrot.slane %v1334, %v1821
    %v1823 = vlaneseq
    %v1824 = vshrl.u32 %v1823, 7
    %v1825 = vsub.s32 1, %v1824
    %v1826 = vrot.slane %v1334, %v1825
    %v1827 = vlaneseq
    %v1828 = vshrl.u32 %v1827, 7
    %v1829 = vsub.s32 2, %v1828
    %v1830 = vrot.slane %v1334, %v1829
    %v1831 = vlaneseq
    %v1832 = vshrl.u32 %v1831, 7
    %v1833 = vsub.s32 3, %v1832
    %v1834 = vrot.slane %v1334, %v1833
    %v1835 = vlaneseq
    %v1836 = vshrl.u32 %v1835, 7
    %v1837 = vsub.s32 4, %v1836
    %v1838 = vrot.slane %v1334, %v1837
    %v1839 = vlaneseq
    %v1840 = vshrl.u32 %v1839, 7
    %v1841 = vsub.s32 5, %v1840
    %v1842 = vrot.slane %v1334, %v1841
    %v1843 = vlaneseq
    %v1844 = vshrl.u32 %v1843, 7
    %v1845 = vsub.s32 6, %v1844
    %v1846 = vrot.slane %v1334, %v1845
    %v1847 = vlaneseq
    %v1848 = vshrl.u32 %v1847, 7
    %v1849 = vsub.s32 7, %v1848
    %v1850 = vrot.slane %v1334, %v1849
    %v1851 = vlaneseq
    %v1852 = vshrl.u32 %v1851, 7
    %v1853 = vsub.s32 0, %v1852
    %v1854 = vrot.slane %v1348, %v1853
    %v1855 = vlaneseq
    %v1856 = vshrl.u32 %v1855, 7
    %v1857 = vsub.s32 1, %v1856
    %v1858 = vrot.slane %v1348, %v1857
    %v1859 = vlaneseq
    %v1860 = vshrl.u32 %v1859, 7
    %v1861 = vsub.s32 2, %v1860
    %v1862 = vrot.slane %v1348, %v1861
    %v1863 = vlaneseq
    %v1864 = vshrl.u32 %v1863, 7
    %v1865 = vsub.s32 3, %v1864
    %v1866 = vrot.slane %v1348, %v1865
    %v1867 = vlaneseq
    %v1868 = vshrl.u32 %v1867, 7
    %v1869 = vsub.s32 4, %v1868
    %v1870 = vrot.slane %v1348, %v1869
    %v1871 = vlaneseq
    %v1872 = vshrl.u32 %v1871, 7
    %v1873 = vsub.s32 5, %v1872
    %v1874 = vrot.slane %v1348, %v1873
    %v1875 = vlaneseq
    %v1876 = vshrl.u32 %v1875, 7
    %v1877 = vsub.s32 6, %v1876
    %v1878 = vrot.slane %v1348, %v1877
    %v1879 = vlaneseq
    %v1880 = vshrl.u32 %v1879, 7
    %v1881 = vsub.s32 7, %v1880
    %v1882 = vrot.slane %v1348, %v1881
    %v1883 = vlaneseq
    %v1884 = vshrl.u32 %v1883, 7
    %v1885 = vsub.s32 0, %v1884
    %v1886 = vrot.slane %v1362, %v1885
    %v1887 = vlaneseq
    %v1888 = vshrl.u32 %v1887, 7
    %v1889 = vsub.s32 1, %v1888
    %v1890 = vrot.slane %v1362, %v1889
    %v1891 = vlaneseq
    %v1892 = vshrl.u32 %v1891, 7
    %v1893 = vsub.s32 2, %v1892
    %v1894 = vrot.slane %v1362, %v1893
    %v1895 = vlaneseq
    %v1896 = vshrl.u32 %v1895, 7
    %v1897 = vsub.s32 3, %v1896
    %v1898 = vrot.slane %v1362, %v1897
    %v1899 = vlaneseq
    %v1900 = vshrl.u32 %v1899, 7
    %v1901 = vsub.s32 4, %v1900
    %v1902 = vrot.slane %v1362, %v1901
    %v1903 = vlaneseq
    %v1904 = vshrl.u32 %v1903, 7
    %v1905 = vsub.s32 5, %v1904
    %v1906 = vrot.slane %v1362, %v1905
    %v1907 = vlaneseq
    %v1908 = vshrl.u32 %v1907, 7
    %v1909 = vsub.s32 6, %v1908
    %v1910 = vrot.slane %v1362, %v1909
    %v1911 = vlaneseq
    %v1912 = vshrl.u32 %v1911, 7
    %v1913 = vsub.s32 7, %v1912
    %v1914 = vrot.slane %v1362, %v1913
    %v1915 = vlaneseq
    %v1916 = vshrl.u32 %v1915, 7
    %v1917 = vsub.s32 0, %v1916
    %v1918 = vrot.slane %v1376, %v1917
    %v1919 = vlaneseq
    %v1920 = vshrl.u32 %v1919, 7
    %v1921 = vsub.s32 1, %v1920
    %v1922 = vrot.slane %v1376, %v1921
    %v1923 = vlaneseq
    %v1924 = vshrl.u32 %v1923, 7
    %v1925 = vsub.s32 2, %v1924
    %v1926 = vrot.slane %v1376, %v1925
    %v1927 = vlaneseq
    %v1928 = vshrl.u32 %v1927, 7
    %v1929 = vsub.s32 3, %v1928
    %v1930 = vrot.slane %v1376, %v1929
    %v1931 = vlaneseq
    %v1932 = vshrl.u32 %v1931, 7
    %v1933 = vsub.s32 4, %v1932
    %v1934 = vrot.slane %v1376, %v1933
    %v1935 = vlaneseq
    %v1936 = vshrl.u32 %v1935, 7
    %v1937 = vsub.s32 5, %v1936
    %v1938 = vrot.slane %v1376, %v1937
    %v1939 = vlaneseq
    %v1940 = vshrl.u32 %v1939, 7
    %v1941 = vsub.s32 6, %v1940
    %v1942 = vrot.slane %v1376, %v1941
    %v1943 = vlaneseq
    %v1944 = vshrl.u32 %v1943, 7
    %v1945 = vsub.s32 7, %v1944
    %v1946 = vrot.slane %v1376, %v1945
    %v1947 = vlaneseq
    %v1948 = vshrl.u32 %v1947, 7
    %v1949 = vsub.s32 0, %v1948
    %v1950 = vrot.slane %v1390, %v1949
    %v1951 = vlaneseq
    %v1952 = vshrl.u32 %v1951, 7
    %v1953 = vsub.s32 1, %v1952
    %v1954 = vrot.slane %v1390, %v1953
    %v1955 = vlaneseq
    %v1956 = vshrl.u32 %v1955, 7
    %v1957 = vsub.s32 2, %v1956
    %v1958 = vrot.slane %v1390, %v1957
    %v1959 = vlaneseq
    %v1960 = vshrl.u32 %v1959, 7
    %v1961 = vsub.s32 3, %v1960
    %v1962 = vrot.slane %v1390, %v1961
    %v1963 = vlaneseq
    %v1964 = vshrl.u32 %v1963, 7
    %v1965 = vsub.s32 4, %v1964
    %v1966 = vrot.slane %v1390, %v1965
    %v1967 = vlaneseq
    %v1968 = vshrl.u32 %v1967, 7
    %v1969 = vsub.s32 5, %v1968
    %v1970 = vrot.slane %v1390, %v1969
    %v1971 = vlaneseq
    %v1972 = vshrl.u32 %v1971, 7
    %v1973 = vsub.s32 6, %v1972
    %v1974 = vrot.slane %v1390, %v1973
    %v1975 = vlaneseq
    %v1976 = vshrl.u32 %v1975, 7
    %v1977 = vsub.s32 7, %v1976
    %v1978 = vrot.slane %v1390, %v1977
    %v1979 = vlaneseq
    %v1980 = vshrl.u32 %v1979, 7
    %v1981 = vsub.s32 0, %v1980
    %v1982 = vrot.slane %v1404, %v1981
    %v1983 = vlaneseq
    %v1984 = vshrl.u32 %v1983, 7
    %v1985 = vsub.s32 1, %v1984
    %v1986 = vrot.slane %v1404, %v1985
    %v1987 = vlaneseq
    %v1988 = vshrl.u32 %v1987, 7
    %v1989 = vsub.s32 2, %v1988
    %v1990 = vrot.slane %v1404, %v1989
    %v1991 = vlaneseq
    %v1992 = vshrl.u32 %v1991, 7
    %v1993 = vsub.s32 3, %v1992
    %v1994 = vrot.slane %v1404, %v1993
    %v1995 = vlaneseq
    %v1996 = vshrl.u32 %v1995, 7
    %v1997 = vsub.s32 4, %v1996
    %v1998 = vrot.slane %v1404, %v1997
    %v1999 = vlaneseq
    %v2000 = vshrl.u32 %v1999, 7
    %v2001 = vsub.s32 5, %v2000
    %v2002 = vrot.slane %v1404, %v2001
    %v2003 = vlaneseq
    %v2004 = vshrl.u32 %v2003, 7
    %v2005 = vsub.s32 6, %v2004
    %v2006 = vrot.slane %v1404, %v2005
    %v2007 = vlaneseq
    %v2008 = vshrl.u32 %v2007, 7
    %v2009 = vsub.s32 7, %v2008
    %v2010 = vrot.slane %v1404, %v2009
    %v2011 = vlaneseq
    %v2012 = vshrl.u32 %v2011, 7
    %v2013 = vsub.s32 0, %v2012
    %v2014 = vrot.slane %v1418, %v2013
    %v2015 = vlaneseq
    %v2016 = vshrl.u32 %v2015, 7
    %v2017 = vsub.s32 1, %v2016
    %v2018 = vrot.slane %v1418, %v2017
    %v2019 = vlaneseq
    %v2020 = vshrl.u32 %v2019, 7
    %v2021 = vsub.s32 2, %v2020
    %v2022 = vrot.slane %v1418, %v2021
    %v2023 = vlaneseq
    %v2024 = vshrl.u32 %v2023, 7
    %v2025 = vsub.s32 3, %v2024
    %v2026 = vrot.slane %v1418, %v2025
    %v2027 = vlaneseq
    %v2028 = vshrl.u32 %v2027, 7
    %v2029 = vsub.s32 4, %v2028
    %v2030 = vrot.slane %v1418, %v2029
    %v2031 = vlaneseq
    %v2032 = vshrl.u32 %v2031, 7
    %v2033 = vsub.s32 5, %v2032
    %v2034 = vrot.slane %v1418, %v2033
    %v2035 = vlaneseq
    %v2036 = vshrl.u32 %v2035, 7
    %v2037 = vsub.s32 6, %v2036
    %v2038 = vrot.slane %v1418, %v2037
    %v2039 = vlaneseq
    %v2040 = vshrl.u32 %v2039, 7
    %v2041 = vsub.s32 7, %v2040
    %v2042 = vrot.slane %v1418, %v2041
    %v2043 = vlaneseq
    %v2044 = vshrl.u32 %v2043, 7
    %v2045 = vsub.s32 0, %v2044
    %v2046 = vrot.slane %v1432, %v2045
    %v2047 = vlaneseq
    %v2048 = vshrl.u32 %v2047, 7
    %v2049 = vsub.s32 1, %v2048
    %v2050 = vrot.slane %v1432, %v2049
    %v2051 = vlaneseq
    %v2052 = vshrl.u32 %v2051, 7
    %v2053 = vsub.s32 2, %v2052
    %v2054 = vrot.slane %v1432, %v2053
    %v2055 = vlaneseq
    %v2056 = vshrl.u32 %v2055, 7
    %v2057 = vsub.s32 3, %v2056
    %v2058 = vrot.slane %v1432, %v2057
    %v2059 = vlaneseq
    %v2060 = vshrl.u32 %v2059, 7
    %v2061 = vsub.s32 4, %v2060
    %v2062 = vrot.slane %v1432, %v2061
    %v2063 = vlaneseq
    %v2064 = vshrl.u32 %v2063, 7
    %v2065 = vsub.s32 5, %v2064
    %v2066 = vrot.slane %v1432, %v2065
    %v2067 = vlaneseq
    %v2068 = vshrl.u32 %v2067, 7
    %v2069 = vsub.s32 6, %v2068
    %v2070 = vrot.slane %v1432, %v2069
    %v2071 = vlaneseq
    %v2072 = vshrl.u32 %v2071, 7
    %v2073 = vsub.s32 7, %v2072
    %v2074 = vrot.slane %v1432, %v2073
    %v2075 = vlaneseq
    %v2076 = vshrl.u32 %v2075, 7
    %v2077 = vsub.s32 0, %v2076
    %v2078 = vrot.slane %v1446, %v2077
    %v2079 = vlaneseq
    %v2080 = vshrl.u32 %v2079, 7
    %v2081 = vsub.s32 1, %v2080
    %v2082 = vrot.slane %v1446, %v2081
    %v2083 = vlaneseq
    %v2084 = vshrl.u32 %v2083, 7
    %v2085 = vsub.s32 2, %v2084
    %v2086 = vrot.slane %v1446, %v2085
    %v2087 = vlaneseq
    %v2088 = vshrl.u32 %v2087, 7
    %v2089 = vsub.s32 3, %v2088
    %v2090 = vrot.slane %v1446, %v2089
    %v2091 = vlaneseq
    %v2092 = vshrl.u32 %v2091, 7
    %v2093 = vsub.s32 4, %v2092
    %v2094 = vrot.slane %v1446, %v2093
    %v2095 = vlaneseq
    %v2096 = vshrl.u32 %v2095, 7
    %v2097 = vsub.s32 5, %v2096
    %v2098 = vrot.slane %v1446, %v2097
    %v2099 = vlaneseq
    %v2100 = vshrl.u32 %v2099, 7
    %v2101 = vsub.s32 6, %v2100
    %v2102 = vrot.slane %v1446, %v2101
    %v2103 = vlaneseq
    %v2104 = vshrl.u32 %v2103, 7
    %v2105 = vsub.s32 7, %v2104
    %v2106 = vrot.slane %v1446, %v2105
    %v2107 = vlaneseq
    %v2108 = vshrl.u32 %v2107, 7
    %v2109 = vsub.s32 0, %v2108
    %v2110 = vrot.slane %v1460, %v2109
    %v2111 = vlaneseq
    %v2112 = vshrl.u32 %v2111, 7
    %v2113 = vsub.s32 1, %v2112
    %v2114 = vrot.slane %v1460, %v2113
    %v2115 = vlaneseq
    %v2116 = vshrl.u32 %v2115, 7
    %v2117 = vsub.s32 2, %v2116
    %v2118 = vrot.slane %v1460, %v2117
    %v2119 = vlaneseq
    %v2120 = vshrl.u32 %v2119, 7
    %v2121 = vsub.s32 3, %v2120
    %v2122 = vrot.slane %v1460, %v2121
    %v2123 = vlaneseq
    %v2124 = vshrl.u32 %v2123, 7
    %v2125 = vsub.s32 4, %v2124
    %v2126 = vrot.slane %v1460, %v2125
    %v2127 = vlaneseq
    %v2128 = vshrl.u32 %v2127, 7
    %v2129 = vsub.s32 5, %v2128
    %v2130 = vrot.slane %v1460, %v2129
    %v2131 = vlaneseq
    %v2132 = vshrl.u32 %v2131, 7
    %v2133 = vsub.s32 6, %v2132
    %v2134 = vrot.slane %v1460, %v2133
    %v2135 = vlaneseq
    %v2136 = vshrl.u32 %v2135, 7
    %v2137 = vsub.s32 7, %v2136
    %v2138 = vrot.slane %v1460, %v2137
    %v2139 = vlaneseq
    %v2140 = vshrl.u32 %v2139, 7
    %v2141 = vsub.s32 0, %v2140
    %v2142 = vrot.slane %v1474, %v2141
    %v2143 = vlaneseq
    %v2144 = vshrl.u32 %v2143, 7
    %v2145 = vsub.s32 1, %v2144
    %v2146 = vrot.slane %v1474, %v2145
    %v2147 = vlaneseq
    %v2148 = vshrl.u32 %v2147, 7
    %v2149 = vsub.s32 2, %v2148
    %v2150 = vrot.slane %v1474, %v2149
    %v2151 = vlaneseq
    %v2152 = vshrl.u32 %v2151, 7
    %v2153 = vsub.s32 3, %v2152
    %v2154 = vrot.slane %v1474, %v2153
    %v2155 = vlaneseq
    %v2156 = vshrl.u32 %v2155, 7
    %v2157 = vsub.s32 4, %v2156
    %v2158 = vrot.slane %v1474, %v2157
    %v2159 = vlaneseq
    %v2160 = vshrl.u32 %v2159, 7
    %v2161 = vsub.s32 5, %v2160
    %v2162 = vrot.slane %v1474, %v2161
    %v2163 = vlaneseq
    %v2164 = vshrl.u32 %v2163, 7
    %v2165 = vsub.s32 6, %v2164
    %v2166 = vrot.slane %v1474, %v2165
    %v2167 = vlaneseq
    %v2168 = vshrl.u32 %v2167, 7
    %v2169 = vsub.s32 7, %v2168
    %v2170 = vrot.slane %v1474, %v2169
    %v2171 = vlaneseq
    %v2172 = vshrl.u32 %v2171, 7
    %v2173 = vsub.s32 0, %v2172
    %v2174 = vrot.slane %v1488, %v2173
    %v2175 = vlaneseq
    %v2176 = vshrl.u32 %v2175, 7
    %v2177 = vsub.s32 1, %v2176
    %v2178 = vrot.slane %v1488, %v2177
    %v2179 = vlaneseq
    %v2180 = vshrl.u32 %v2179, 7
    %v2181 = vsub.s32 2, %v2180
    %v2182 = vrot.slane %v1488, %v2181
    %v2183 = vlaneseq
    %v2184 = vshrl.u32 %v2183, 7
    %v2185 = vsub.s32 3, %v2184
    %v2186 = vrot.slane %v1488, %v2185
    %v2187 = vlaneseq
    %v2188 = vshrl.u32 %v2187, 7
    %v2189 = vsub.s32 4, %v2188
    %v2190 = vrot.slane %v1488, %v2189
    %v2191 = vlaneseq
    %v2192 = vshrl.u32 %v2191, 7
    %v2193 = vsub.s32 5, %v2192
    %v2194 = vrot.slane %v1488, %v2193
    %v2195 = vlaneseq
    %v2196 = vshrl.u32 %v2195, 7
    %v2197 = vsub.s32 6, %v2196
    %v2198 = vrot.slane %v1488, %v2197
    %v2199 = vlaneseq
    %v2200 = vshrl.u32 %v2199, 7
    %v2201 = vsub.s32 7, %v2200
    %v2202 = vrot.slane %v1488, %v2201
    %v2203 = vlaneseq
    %v2204 = vshrl.u32 %v2203, 7
    %v2205 = vsub.s32 0, %v2204
    %v2206 = vrot.slane %v1502, %v2205
    %v2207 = vlaneseq
    %v2208 = vshrl.u32 %v2207, 7
    %v2209 = vsub.s32 1, %v2208
    %v2210 = vrot.slane %v1502, %v2209
    %v2211 = vlaneseq
    %v2212 = vshrl.u32 %v2211, 7
    %v2213 = vsub.s32 2, %v2212
    %v2214 = vrot.slane %v1502, %v2213
    %v2215 = vlaneseq
    %v2216 = vshrl.u32 %v2215, 7
    %v2217 = vsub.s32 3, %v2216
    %v2218 = vrot.slane %v1502, %v2217
    %v2219 = vlaneseq
    %v2220 = vshrl.u32 %v2219, 7
    %v2221 = vsub.s32 4, %v2220
    %v2222 = vrot.slane %v1502, %v2221
    %v2223 = vlaneseq
    %v2224 = vshrl.u32 %v2223, 7
    %v2225 = vsub.s32 5, %v2224
    %v2226 = vrot.slane %v1502, %v2225
    %v2227 = vlaneseq
    %v2228 = vshrl.u32 %v2227, 7
    %v2229 = vsub.s32 6, %v2228
    %v2230 = vrot.slane %v1502, %v2229
    %v2231 = vlaneseq
    %v2232 = vshrl.u32 %v2231, 7
    %v2233 = vsub.s32 7, %v2232
    %v2234 = vrot.slane %v1502, %v2233
    %v2235 = vlaneseq
    %v2236 = vshrl.u32 %v2235, 7
    %v2237 = vsub.s32 0, %v2236
    %v2238 = vrot.slane %v1516, %v2237
    %v2239 = vlaneseq
    %v2240 = vshrl.u32 %v2239, 7
    %v2241 = vsub.s32 1, %v2240
    %v2242 = vrot.slane %v1516, %v2241
    %v2243 = vlaneseq
    %v2244 = vshrl.u32 %v2243, 7
    %v2245 = vsub.s32 2, %v2244
    %v2246 = vrot.slane %v1516, %v2245
    %v2247 = vlaneseq
    %v2248 = vshrl.u32 %v2247, 7
    %v2249 = vsub.s32 3, %v2248
    %v2250 = vrot.slane %v1516, %v2249
    %v2251 = vlaneseq
    %v2252 = vshrl.u32 %v2251, 7
    %v2253 = vsub.s32 4, %v2252
    %v2254 = vrot.slane %v1516, %v2253
    %v2255 = vlaneseq
    %v2256 = vshrl.u32 %v2255, 7
    %v2257 = vsub.s32 5, %v2256
    %v2258 = vrot.slane %v1516, %v2257
    %v2259 = vlaneseq
    %v2260 = vshrl.u32 %v2259, 7
    %v2261 = vsub.s32 6, %v2260
    %v2262 = vrot.slane %v1516, %v2261
    %v2263 = vlaneseq
    %v2264 = vshrl.u32 %v2263, 7
    %v2265 = vsub.s32 7, %v2264
    %v2266 = vrot.slane %v1516, %v2265
    %v2267 = vlaneseq
    %v2268 = vshrl.u32 %v2267, 7
    %v2269 = vsub.s32 0, %v2268
    %v2270 = vrot.slane %v1530, %v2269
    %v2271 = vlaneseq
    %v2272 = vshrl.u32 %v2271, 7
    %v2273 = vsub.s32 1, %v2272
    %v2274 = vrot.slane %v1530, %v2273
    %v2275 = vlaneseq
    %v2276 = vshrl.u32 %v2275, 7
    %v2277 = vsub.s32 2, %v2276
    %v2278 = vrot.slane %v1530, %v2277
    %v2279 = vlaneseq
    %v2280 = vshrl.u32 %v2279, 7
    %v2281 = vsub.s32 3, %v2280
    %v2282 = vrot.slane %v1530, %v2281
    %v2283 = vlaneseq
    %v2284 = vshrl.u32 %v2283, 7
    %v2285 = vsub.s32 4, %v2284
    %v2286 = vrot.slane %v1530, %v2285
    %v2287 = vlaneseq
    %v2288 = vshrl.u32 %v2287, 7
    %v2289 = vsub.s32 5, %v2288
    %v2290 = vrot.slane %v1530, %v2289
    %v2291 = vlaneseq
    %v2292 = vshrl.u32 %v2291, 7
    %v2293 = vsub.s32 6, %v2292
    %v2294 = vrot.slane %v1530, %v2293
    %v2295 = vlaneseq
    %v2296 = vshrl.u32 %v2295, 7
    %v2297 = vsub.s32 7, %v2296
    %v2298 = vrot.slane %v1530, %v2297
    %v2299 = vcombine.low %v1534, %v1538
    %v2300 = vcombine.low %v1542, %v1546
    %v2301 = vcombine.low %v1550, %v1554
    %v2302 = vcombine.low %v1558, %v1562
    %v2304 = vunpack.c.l.s4 1966171168
    %v2305 = vunpack.c.0.s8 %v2304
    %v2306 = vlaneseq
    %v2307 = vshrl.u32 %v2306, 7
    %v2308 = vsub.s32 %v2305, %v2307
    %v2309 = vrot.slane %v2299, %v2308
    %v2311 = vunpack.c.l.s4 1966171168
    %v2312 = vunpack.c.0.s8 %v2311
    %v2313 = vlaneseq
    %v2314 = vshrl.u32 %v2313, 7
    %v2315 = vsub.s32 %v2312, %v2314
    %v2316 = vrot.slane %v2300, %v2315
    %v2318 = vunpack.c.l.s4 1966171168
    %v2319 = vunpack.c.0.s8 %v2318
    %v2320 = vlaneseq
    %v2321 = vshrl.u32 %v2320, 7
    %v2322 = vsub.s32 %v2319, %v2321
    %v2323 = vrot.slane %v2301, %v2322
    %v2325 = vunpack.c.l.s4 1966171168
    %v2326 = vunpack.c.0.s8 %v2325
    %v2327 = vlaneseq
    %v2328 = vshrl.u32 %v2327, 7
    %v2329 = vsub.s32 %v2326, %v2328
    %v2330 = vrot.slane %v2302, %v2329
    %v2331 = vcombine.low %v2309, %v2316
    %v2332 = vcombine.low %v2323, %v2330
    %v2334 = vunpack.c.l.s4 1966171168
    %v2335 = vunpack.c.0.s8 %v2334
    %v2336 = vlaneseq
    %v2337 = vshrl.u32 %v2336, 7
    %v2338 = vsub.s32 %v2335, %v2337
    %v2339 = vrot.slane %v2331, %v2338
    %v2341 = vunpack.c.l.s4 1966171168
    %v2342 = vunpack.c.0.s8 %v2341
    %v2343 = vlaneseq
    %v2344 = vshrl.u32 %v2343, 7
    %v2345 = vsub.s32 %v2342, %v2344
    %v2346 = vrot.slane %v2332, %v2345
    %v2347 = vcombine.low %v2339, %v2346
    %v2348 = vcombine.low %v1566, %v1570
    %v2349 = vcombine.low %v1574, %v1578
    %v2350 = vcombine.low %v1582, %v1586
    %v2351 = vcombine.low %v1590, %v1594
    %v2353 = vunpack.c.l.s4 1966171168
    %v2354 = vunpack.c.0.s8 %v2353
    %v2355 = vlaneseq
    %v2356 = vshrl.u32 %v2355, 7
    %v2357 = vsub.s32 %v2354, %v2356
    %v2358 = vrot.slane %v2348, %v2357
    %v2360 = vunpack.c.l.s4 1966171168
    %v2361 = vunpack.c.0.s8 %v2360
    %v2362 = vlaneseq
    %v2363 = vshrl.u32 %v2362, 7
    %v2364 = vsub.s32 %v2361, %v2363
    %v2365 = vrot.slane %v2349, %v2364
    %v2367 = vunpack.c.l.s4 1966171168
    %v2368 = vunpack.c.0.s8 %v2367
    %v2369 = vlaneseq
    %v2370 = vshrl.u32 %v2369, 7
    %v2371 = vsub.s32 %v2368, %v2370
    %v2372 = vrot.slane %v2350, %v2371
    %v2374 = vunpack.c.l.s4 1966171168
    %v2375 = vunpack.c.0.s8 %v2374
    %v2376 = vlaneseq
    %v2377 = vshrl.u32 %v2376, 7
    %v2378 = vsub.s32 %v2375, %v2377
    %v2379 = vrot.slane %v2351, %v2378
    %v2380 = vcombine.low %v2358, %v2365
    %v2381 = vcombine.low %v2372, %v2379
    %v2383 = vunpack.c.l.s4 1966171168
    %v2384 = vunpack.c.0.s8 %v2383
    %v2385 = vlaneseq
    %v2386 = vshrl.u32 %v2385, 7
    %v2387 = vsub.s32 %v2384, %v2386
    %v2388 = vrot.slane %v2380, %v2387
    %v2390 = vunpack.c.l.s4 1966171168
    %v2391 = vunpack.c.0.s8 %v2390
    %v2392 = vlaneseq
    %v2393 = vshrl.u32 %v2392, 7
    %v2394 = vsub.s32 %v2391, %v2393
    %v2395 = vrot.slane %v2381, %v2394
    %v2396 = vcombine.low %v2388, %v2395
    %v2397 = vcombine.low %v1598, %v1602
    %v2398 = vcombine.low %v1606, %v1610
    %v2399 = vcombine.low %v1614, %v1618
    %v2400 = vcombine.low %v1622, %v1626
    %v2402 = vunpack.c.l.s4 1966171168
    %v2403 = vunpack.c.0.s8 %v2402
    %v2404 = vlaneseq
    %v2405 = vshrl.u32 %v2404, 7
    %v2406 = vsub.s32 %v2403, %v2405
    %v2407 = vrot.slane %v2397, %v2406
    %v2409 = vunpack.c.l.s4 1966171168
    %v2410 = vunpack.c.0.s8 %v2409
    %v2411 = vlaneseq
    %v2412 = vshrl.u32 %v2411, 7
    %v2413 = vsub.s32 %v2410, %v2412
    %v2414 = vrot.slane %v2398, %v2413
    %v2416 = vunpack.c.l.s4 1966171168
    %v2417 = vunpack.c.0.s8 %v2416
    %v2418 = vlaneseq
    %v2419 = vshrl.u32 %v2418, 7
    %v2420 = vsub.s32 %v2417, %v2419
    %v2421 = vrot.slane %v2399, %v2420
    %v2423 = vunpack.c.l.s4 1966171168
    %v2424 = vunpack.c.0.s8 %v2423
    %v2425 = vlaneseq
    %v2426 = vshrl.u32 %v2425, 7
    %v2427 = vsub.s32 %v2424, %v2426
    %v2428 = vrot.slane %v2400, %v2427
    %v2429 = vcombine.low %v2407, %v2414
    %v2430 = vcombine.low %v2421, %v2428
    %v2432 = vunpack.c.l.s4 1966171168
    %v2433 = vunpack.c.0.s8 %v2432
    %v2434 = vlaneseq
    %v2435 = vshrl.u32 %v2434, 7
    %v2436 = vsub.s32 %v2433, %v2435
    %v2437 = vrot.slane %v2429, %v2436
    %v2439 = vunpack.c.l.s4 1966171168
    %v2440 = vunpack.c.0.s8 %v2439
    %v2441 = vlaneseq
    %v2442 = vshrl.u32 %v2441, 7
    %v2443 = vsub.s32 %v2440, %v2442
    %v2444 = vrot.slane %v2430, %v2443
    %v2445 = vcombine.low %v2437, %v2444
    %v2446 = vcombine.low %v1630, %v1634
    %v2447 = vcombine.low %v1638, %v1642
    %v2448 = vcombine.low %v1646, %v1650
    %v2449 = vcombine.low %v1654, %v1658
    %v2451 = vunpack.c.l.s4 1966171168
    %v2452 = vunpack.c.0.s8 %v2451
    %v2453 = vlaneseq
    %v2454 = vshrl.u32 %v2453, 7
    %v2455 = vsub.s32 %v2452, %v2454
    %v2456 = vrot.slane %v2446, %v2455
    %v2458 = vunpack.c.l.s4 1966171168
    %v2459 = vunpack.c.0.s8 %v2458
    %v2460 = vlaneseq
    %v2461 = vshrl.u32 %v2460, 7
    %v2462 = vsub.s32 %v2459, %v2461
    %v2463 = vrot.slane %v2447, %v2462
    %v2465 = vunpack.c.l.s4 1966171168
    %v2466 = vunpack.c.0.s8 %v2465
    %v2467 = vlaneseq
    %v2468 = vshrl.u32 %v2467, 7
    %v2469 = vsub.s32 %v2466, %v2468
    %v2470 = vrot.slane %v2448, %v2469
    %v2472 = vunpack.c.l.s4 1966171168
    %v2473 = vunpack.c.0.s8 %v2472
    %v2474 = vlaneseq
    %v2475 = vshrl.u32 %v2474, 7
    %v2476 = vsub.s32 %v2473, %v2475
    %v2477 = vrot.slane %v2449, %v2476
    %v2478 = vcombine.low %v2456, %v2463
    %v2479 = vcombine.low %v2470, %v2477
    %v2481 = vunpack.c.l.s4 1966171168
    %v2482 = vunpack.c.0.s8 %v2481
    %v2483 = vlaneseq
    %v2484 = vshrl.u32 %v2483, 7
    %v2485 = vsub.s32 %v2482, %v2484
    %v2486 = vrot.slane %v2478, %v2485
    %v2488 = vunpack.c.l.s4 1966171168
    %v2489 = vunpack.c.0.s8 %v2488
    %v2490 = vlaneseq
    %v2491 = vshrl.u32 %v2490, 7
    %v2492 = vsub.s32 %v2489, %v2491
    %v2493 = vrot.slane %v2479, %v2492
    %v2494 = vcombine.low %v2486, %v2493
    %v2495 = vcombine.low %v1662, %v1666
    %v2496 = vcombine.low %v1670, %v1674
    %v2497 = vcombine.low %v1678, %v1682
    %v2498 = vcombine.low %v1686, %v1690
    %v2500 = vunpack.c.l.s4 1966171168
    %v2501 = vunpack.c.0.s8 %v2500
    %v2502 = vlaneseq
    %v2503 = vshrl.u32 %v2502, 7
    %v2504 = vsub.s32 %v2501, %v2503
    %v2505 = vrot.slane %v2495, %v2504
    %v2507 = vunpack.c.l.s4 1966171168
    %v2508 = vunpack.c.0.s8 %v2507
    %v2509 = vlaneseq
    %v2510 = vshrl.u32 %v2509, 7
    %v2511 = vsub.s32 %v2508, %v2510
    %v2512 = vrot.slane %v2496, %v2511
    %v2514 = vunpack.c.l.s4 1966171168
    %v2515 = vunpack.c.0.s8 %v2514
    %v2516 = vlaneseq
    %v2517 = vshrl.u32 %v2516, 7
    %v2518 = vsub.s32 %v2515, %v2517
    %v2519 = vrot.slane %v2497, %v2518
    %v2521 = vunpack.c.l.s4 1966171168
    %v2522 = vunpack.c.0.s8 %v2521
    %v2523 = vlaneseq
    %v2524 = vshrl.u32 %v2523, 7
    %v2525 = vsub.s32 %v2522, %v2524
    %v2526 = vrot.slane %v2498, %v2525
    %v2527 = vcombine.low %v2505, %v2512
    %v2528 = vcombine.low %v2519, %v2526
    %v2530 = vunpack.c.l.s4 1966171168
    %v2531 = vunpack.c.0.s8 %v2530
    %v2532 = vlaneseq
    %v2533 = vshrl.u32 %v2532, 7
    %v2534 = vsub.s32 %v2531, %v2533
    %v2535 = vrot.slane %v2527, %v2534
    %v2537 = vunpack.c.l.s4 1966171168
    %v2538 = vunpack.c.0.s8 %v2537
    %v2539 = vlaneseq
    %v2540 = vshrl.u32 %v2539, 7
    %v2541 = vsub.s32 %v2538, %v2540
    %v2542 = vrot.slane %v2528, %v2541
    %v2543 = vcombine.low %v2535, %v2542
    %v2544 = vcombine.low %v1694, %v1698
    %v2545 = vcombine.low %v1702, %v1706
    %v2546 = vcombine.low %v1710, %v1714
    %v2547 = vcombine.low %v1718, %v1722
    %v2549 = vunpack.c.l.s4 1966171168
    %v2550 = vunpack.c.0.s8 %v2549
    %v2551 = vlaneseq
    %v2552 = vshrl.u32 %v2551, 7
    %v2553 = vsub.s32 %v2550, %v2552
    %v2554 = vrot.slane %v2544, %v2553
    %v2556 = vunpack.c.l.s4 1966171168
    %v2557 = vunpack.c.0.s8 %v2556
    %v2558 = vlaneseq
    %v2559 = vshrl.u32 %v2558, 7
    %v2560 = vsub.s32 %v2557, %v2559
    %v2561 = vrot.slane %v2545, %v2560
    %v2563 = vunpack.c.l.s4 1966171168
    %v2564 = vunpack.c.0.s8 %v2563
    %v2565 = vlaneseq
    %v2566 = vshrl.u32 %v2565, 7
    %v2567 = vsub.s32 %v2564, %v2566
    %v2568 = vrot.slane %v2546, %v2567
    %v2570 = vunpack.c.l.s4 1966171168
    %v2571 = vunpack.c.0.s8 %v2570
    %v2572 = vlaneseq
    %v2573 = vshrl.u32 %v2572, 7
    %v2574 = vsub.s32 %v2571, %v2573
    %v2575 = vrot.slane %v2547, %v2574
    %v2576 = vcombine.low %v2554, %v2561
    %v2577 = vcombine.low %v2568, %v2575
    %v2579 = vunpack.c.l.s4 1966171168
    %v2580 = vunpack.c.0.s8 %v2579
    %v2581 = vlaneseq
    %v2582 = vshrl.u32 %v2581, 7
    %v2583 = vsub.s32 %v2580, %v2582
    %v2584 = vrot.slane %v2576, %v2583
    %v2586 = vunpack.c.l.s4 1966171168
    %v2587 = vunpack.c.0.s8 %v2586
    %v2588 = vlaneseq
    %v2589 = vshrl.u32 %v2588, 7
    %v2590 = vsub.s32 %v2587, %v2589
    %v2591 = vrot.slane %v2577, %v2590
    %v2592 = vcombine.low %v2584, %v2591
    %v2593 = vcombine.low %v1726, %v1730
    %v2594 = vcombine.low %v1734, %v1738
    %v2595 = vcombine.low %v1742, %v1746
    %v2596 = vcombine.low %v1750, %v1754
    %v2598 = vunpack.c.l.s4 1966171168
    %v2599 = vunpack.c.0.s8 %v2598
    %v2600 = vlaneseq
    %v2601 = vshrl.u32 %v2600, 7
    %v2602 = vsub.s32 %v2599, %v2601
    %v2603 = vrot.slane %v2593, %v2602
    %v2605 = vunpack.c.l.s4 1966171168
    %v2606 = vunpack.c.0.s8 %v2605
    %v2607 = vlaneseq
    %v2608 = vshrl.u32 %v2607, 7
    %v2609 = vsub.s32 %v2606, %v2608
    %v2610 = vrot.slane %v2594, %v2609
    %v2612 = vunpack.c.l.s4 1966171168
    %v2613 = vunpack.c.0.s8 %v2612
    %v2614 = vlaneseq
    %v2615 = vshrl.u32 %v2614, 7
    %v2616 = vsub.s32 %v2613, %v2615
    %v2617 = vrot.slane %v2595, %v2616
    %v2619 = vunpack.c.l.s4 1966171168
    %v2620 = vunpack.c.0.s8 %v2619
    %v2621 = vlaneseq
    %v2622 = vshrl.u32 %v2621, 7
    %v2623 = vsub.s32 %v2620, %v2622
    %v2624 = vrot.slane %v2596, %v2623
    %v2625 = vcombine.low %v2603, %v2610
    %v2626 = vcombine.low %v2617, %v2624
    %v2628 = vunpack.c.l.s4 1966171168
    %v2629 = vunpack.c.0.s8 %v2628
    %v2630 = vlaneseq
    %v2631 = vshrl.u32 %v2630, 7
    %v2632 = vsub.s32 %v2629, %v2631
    %v2633 = vrot.slane %v2625, %v2632
    %v2635 = vunpack.c.l.s4 1966171168
    %v2636 = vunpack.c.0.s8 %v2635
    %v2637 = vlaneseq
    %v2638 = vshrl.u32 %v2637, 7
    %v2639 = vsub.s32 %v2636, %v2638
    %v2640 = vrot.slane %v2626, %v2639
    %v2641 = vcombine.low %v2633, %v2640
    %v2642 = vcombine.low %v1758, %v1762
    %v2643 = vcombine.low %v1766, %v1770
    %v2644 = vcombine.low %v1774, %v1778
    %v2645 = vcombine.low %v1782, %v1786
    %v2647 = vunpack.c.l.s4 1966171168
    %v2648 = vunpack.c.0.s8 %v2647
    %v2649 = vlaneseq
    %v2650 = vshrl.u32 %v2649, 7
    %v2651 = vsub.s32 %v2648, %v2650
    %v2652 = vrot.slane %v2642, %v2651
    %v2654 = vunpack.c.l.s4 1966171168
    %v2655 = vunpack.c.0.s8 %v2654
    %v2656 = vlaneseq
    %v2657 = vshrl.u32 %v2656, 7
    %v2658 = vsub.s32 %v2655, %v2657
    %v2659 = vrot.slane %v2643, %v2658
    %v2661 = vunpack.c.l.s4 1966171168
    %v2662 = vunpack.c.0.s8 %v2661
    %v2663 = vlaneseq
    %v2664 = vshrl.u32 %v2663, 7
    %v2665 = vsub.s32 %v2662, %v2664
    %v2666 = vrot.slane %v2644, %v2665
    %v2668 = vunpack.c.l.s4 1966171168
    %v2669 = vunpack.c.0.s8 %v2668
    %v2670 = vlaneseq
    %v2671 = vshrl.u32 %v2670, 7
    %v2672 = vsub.s32 %v2669, %v2671
    %v2673 = vrot.slane %v2645, %v2672
    %v2674 = vcombine.low %v2652, %v2659
    %v2675 = vcombine.low %v2666, %v2673
    %v2677 = vunpack.c.l.s4 1966171168
    %v2678 = vunpack.c.0.s8 %v2677
    %v2679 = vlaneseq
    %v2680 = vshrl.u32 %v2679, 7
    %v2681 = vsub.s32 %v2678, %v2680
    %v2682 = vrot.slane %v2674, %v2681
    %v2684 = vunpack.c.l.s4 1966171168
    %v2685 = vunpack.c.0.s8 %v2684
    %v2686 = vlaneseq
    %v2687 = vshrl.u32 %v2686, 7
    %v2688 = vsub.s32 %v2685, %v2687
    %v2689 = vrot.slane %v2675, %v2688
    %v2690 = vcombine.low %v2682, %v2689
    %v2691 = vcombine.low %v1790, %v1794
    %v2692 = vcombine.low %v1798, %v1802
    %v2693 = vcombine.low %v1806, %v1810
    %v2694 = vcombine.low %v1814, %v1818
    %v2696 = vunpack.c.l.s4 1966171168
    %v2697 = vunpack.c.0.s8 %v2696
    %v2698 = vlaneseq
    %v2699 = vshrl.u32 %v2698, 7
    %v2700 = vsub.s32 %v2697, %v2699
    %v2701 = vrot.slane %v2691, %v2700
    %v2703 = vunpack.c.l.s4 1966171168
    %v2704 = vunpack.c.0.s8 %v2703
    %v2705 = vlaneseq
    %v2706 = vshrl.u32 %v2705, 7
    %v2707 = vsub.s32 %v2704, %v2706
    %v2708 = vrot.slane %v2692, %v2707
    %v2710 = vunpack.c.l.s4 1966171168
    %v2711 = vunpack.c.0.s8 %v2710
    %v2712 = vlaneseq
    %v2713 = vshrl.u32 %v2712, 7
    %v2714 = vsub.s32 %v2711, %v2713
    %v2715 = vrot.slane %v2693, %v2714
    %v2717 = vunpack.c.l.s4 1966171168
    %v2718 = vunpack.c.0.s8 %v2717
    %v2719 = vlaneseq
    %v2720 = vshrl.u32 %v2719, 7
    %v2721 = vsub.s32 %v2718, %v2720
    %v2722 = vrot.slane %v2694, %v2721
    %v2723 = vcombine.low %v2701, %v2708
    %v2724 = vcombine.low %v2715, %v2722
    %v2726 = vunpack.c.l.s4 1966171168
    %v2727 = vunpack.c.0.s8 %v2726
    %v2728 = vlaneseq
    %v2729 = vshrl.u32 %v2728, 7
    %v2730 = vsub.s32 %v2727, %v2729
    %v2731 = vrot.slane %v2723, %v2730
    %v2733 = vunpack.c.l.s4 1966171168
    %v2734 = vunpack.c.0.s8 %v2733
    %v2735 = vlaneseq
    %v2736 = vshrl.u32 %v2735, 7
    %v2737 = vsub.s32 %v2734, %v2736
    %v2738 = vrot.slane %v2724, %v2737
    %v2739 = vcombine.low %v2731, %v2738
    %v2740 = vcombine.low %v1822, %v1826
    %v2741 = vcombine.low %v1830, %v1834
    %v2742 = vcombine.low %v1838, %v1842
    %v2743 = vcombine.low %v1846, %v1850
    %v2745 = vunpack.c.l.s4 1966171168
    %v2746 = vunpack.c.0.s8 %v2745
    %v2747 = vlaneseq
    %v2748 = vshrl.u32 %v2747, 7
    %v2749 = vsub.s32 %v2746, %v2748
    %v2750 = vrot.slane %v2740, %v2749
    %v2752 = vunpack.c.l.s4 1966171168
    %v2753 = vunpack.c.0.s8 %v2752
    %v2754 = vlaneseq
    %v2755 = vshrl.u32 %v2754, 7
    %v2756 = vsub.s32 %v2753, %v2755
    %v2757 = vrot.slane %v2741, %v2756
    %v2759 = vunpack.c.l.s4 1966171168
    %v2760 = vunpack.c.0.s8 %v2759
    %v2761 = vlaneseq
    %v2762 = vshrl.u32 %v2761, 7
    %v2763 = vsub.s32 %v2760, %v2762
    %v2764 = vrot.slane %v2742, %v2763
    %v2766 = vunpack.c.l.s4 1966171168
    %v2767 = vunpack.c.0.s8 %v2766
    %v2768 = vlaneseq
    %v2769 = vshrl.u32 %v2768, 7
    %v2770 = vsub.s32 %v2767, %v2769
    %v2771 = vrot.slane %v2743, %v2770
    %v2772 = vcombine.low %v2750, %v2757
    %v2773 = vcombine.low %v2764, %v2771
    %v2775 = vunpack.c.l.s4 1966171168
    %v2776 = vunpack.c.0.s8 %v2775
    %v2777 = vlaneseq
    %v2778 = vshrl.u32 %v2777, 7
    %v2779 = vsub.s32 %v2776, %v2778
    %v2780 = vrot.slane %v2772, %v2779
    %v2782 = vunpack.c.l.s4 1966171168
    %v2783 = vunpack.c.0.s8 %v2782
    %v2784 = vlaneseq
    %v2785 = vshrl.u32 %v2784, 7
    %v2786 = vsub.s32 %v2783, %v2785
    %v2787 = vrot.slane %v2773, %v2786
    %v2788 = vcombine.low %v2780, %v2787
    %v2789 = vcombine.low %v1854, %v1858
    %v2790 = vcombine.low %v1862, %v1866
    %v2791 = vcombine.low %v1870, %v1874
    %v2792 = vcombine.low %v1878, %v1882
    %v2794 = vunpack.c.l.s4 1966171168
    %v2795 = vunpack.c.0.s8 %v2794
    %v2796 = vlaneseq
    %v2797 = vshrl.u32 %v2796, 7
    %v2798 = vsub.s32 %v2795, %v2797
    %v2799 = vrot.slane %v2789, %v2798
    %v2801 = vunpack.c.l.s4 1966171168
    %v2802 = vunpack.c.0.s8 %v2801
    %v2803 = vlaneseq
    %v2804 = vshrl.u32 %v2803, 7
    %v2805 = vsub.s32 %v2802, %v2804
    %v2806 = vrot.slane %v2790, %v2805
    %v2808 = vunpack.c.l.s4 1966171168
    %v2809 = vunpack.c.0.s8 %v2808
    %v2810 = vlaneseq
    %v2811 = vshrl.u32 %v2810, 7
    %v2812 = vsub.s32 %v2809, %v2811
    %v2813 = vrot.slane %v2791, %v2812
    %v2815 = vunpack.c.l.s4 1966171168
    %v2816 = vunpack.c.0.s8 %v2815
    %v2817 = vlaneseq
    %v2818 = vshrl.u32 %v2817, 7
    %v2819 = vsub.s32 %v2816, %v2818
    %v2820 = vrot.slane %v2792, %v2819
    %v2821 = vcombine.low %v2799, %v2806
    %v2822 = vcombine.low %v2813, %v2820
    %v2824 = vunpack.c.l.s4 1966171168
    %v2825 = vunpack.c.0.s8 %v2824
    %v2826 = vlaneseq
    %v2827 = vshrl.u32 %v2826, 7
    %v2828 = vsub.s32 %v2825, %v2827
    %v2829 = vrot.slane %v2821, %v2828
    %v2831 = vunpack.c.l.s4 1966171168
    %v2832 = vunpack.c.0.s8 %v2831
    %v2833 = vlaneseq
    %v2834 = vshrl.u32 %v2833, 7
    %v2835 = vsub.s32 %v2832, %v2834
    %v2836 = vrot.slane %v2822, %v2835
    %v2837 = vcombine.low %v2829, %v2836
    %v2838 = vcombine.low %v1886, %v1890
    %v2839 = vcombine.low %v1894, %v1898
    %v2840 = vcombine.low %v1902, %v1906
    %v2841 = vcombine.low %v1910, %v1914
    %v2843 = vunpack.c.l.s4 1966171168
    %v2844 = vunpack.c.0.s8 %v2843
    %v2845 = vlaneseq
    %v2846 = vshrl.u32 %v2845, 7
    %v2847 = vsub.s32 %v2844, %v2846
    %v2848 = vrot.slane %v2838, %v2847
    %v2850 = vunpack.c.l.s4 1966171168
    %v2851 = vunpack.c.0.s8 %v2850
    %v2852 = vlaneseq
    %v2853 = vshrl.u32 %v2852, 7
    %v2854 = vsub.s32 %v2851, %v2853
    %v2855 = vrot.slane %v2839, %v2854
    %v2857 = vunpack.c.l.s4 1966171168
    %v2858 = vunpack.c.0.s8 %v2857
    %v2859 = vlaneseq
    %v2860 = vshrl.u32 %v2859, 7
    %v2861 = vsub.s32 %v2858, %v2860
    %v2862 = vrot.slane %v2840, %v2861
    %v2864 = vunpack.c.l.s4 1966171168
    %v2865 = vunpack.c.0.s8 %v2864
    %v2866 = vlaneseq
    %v2867 = vshrl.u32 %v2866, 7
    %v2868 = vsub.s32 %v2865, %v2867
    %v2869 = vrot.slane %v2841, %v2868
    %v2870 = vcombine.low %v2848, %v2855
    %v2871 = vcombine.low %v2862, %v2869
    %v2873 = vunpack.c.l.s4 1966171168
    %v2874 = vunpack.c.0.s8 %v2873
    %v2875 = vlaneseq
    %v2876 = vshrl.u32 %v2875, 7
    %v2877 = vsub.s32 %v2874, %v2876
    %v2878 = vrot.slane %v2870, %v2877
    %v2880 = vunpack.c.l.s4 1966171168
    %v2881 = vunpack.c.0.s8 %v2880
    %v2882 = vlaneseq
    %v2883 = vshrl.u32 %v2882, 7
    %v2884 = vsub.s32 %v2881, %v2883
    %v2885 = vrot.slane %v2871, %v2884
    %v2886 = vcombine.low %v2878, %v2885
    %v2887 = vcombine.low %v1918, %v1922
    %v2888 = vcombine.low %v1926, %v1930
    %v2889 = vcombine.low %v1934, %v1938
    %v2890 = vcombine.low %v1942, %v1946
    %v2892 = vunpack.c.l.s4 1966171168
    %v2893 = vunpack.c.0.s8 %v2892
    %v2894 = vlaneseq
    %v2895 = vshrl.u32 %v2894, 7
    %v2896 = vsub.s32 %v2893, %v2895
    %v2897 = vrot.slane %v2887, %v2896
    %v2899 = vunpack.c.l.s4 1966171168
    %v2900 = vunpack.c.0.s8 %v2899
    %v2901 = vlaneseq
    %v2902 = vshrl.u32 %v2901, 7
    %v2903 = vsub.s32 %v2900, %v2902
    %v2904 = vrot.slane %v2888, %v2903
    %v2906 = vunpack.c.l.s4 1966171168
    %v2907 = vunpack.c.0.s8 %v2906
    %v2908 = vlaneseq
    %v2909 = vshrl.u32 %v2908, 7
    %v2910 = vsub.s32 %v2907, %v2909
    %v2911 = vrot.slane %v2889, %v2910
    %v2913 = vunpack.c.l.s4 1966171168
    %v2914 = vunpack.c.0.s8 %v2913
    %v2915 = vlaneseq
    %v2916 = vshrl.u32 %v2915, 7
    %v2917 = vsub.s32 %v2914, %v2916
    %v2918 = vrot.slane %v2890, %v2917
    %v2919 = vcombine.low %v2897, %v2904
    %v2920 = vcombine.low %v2911, %v2918
    %v2922 = vunpack.c.l.s4 1966171168
    %v2923 = vunpack.c.0.s8 %v2922
    %v2924 = vlaneseq
    %v2925 = vshrl.u32 %v2924, 7
    %v2926 = vsub.s32 %v2923, %v2925
    %v2927 = vrot.slane %v2919, %v2926
    %v2929 = vunpack.c.l.s4 1966171168
    %v2930 = vunpack.c.0.s8 %v2929
    %v2931 = vlaneseq
    %v2932 = vshrl.u32 %v2931, 7
    %v2933 = vsub.s32 %v2930, %v2932
    %v2934 = vrot.slane %v2920, %v2933
    %v2935 = vcombine.low %v2927, %v2934
    %v2936 = vcombine.low %v1950, %v1954
    %v2937 = vcombine.low %v1958, %v1962
    %v2938 = vcombine.low %v1966, %v1970
    %v2939 = vcombine.low %v1974, %v1978
    %v2941 = vunpack.c.l.s4 1966171168
    %v2942 = vunpack.c.0.s8 %v2941
    %v2943 = vlaneseq
    %v2944 = vshrl.u32 %v2943, 7
    %v2945 = vsub.s32 %v2942, %v2944
    %v2946 = vrot.slane %v2936, %v2945
    %v2948 = vunpack.c.l.s4 1966171168
    %v2949 = vunpack.c.0.s8 %v2948
    %v2950 = vlaneseq
    %v2951 = vshrl.u32 %v2950, 7
    %v2952 = vsub.s32 %v2949, %v2951
    %v2953 = vrot.slane %v2937, %v2952
    %v2955 = vunpack.c.l.s4 1966171168
    %v2956 = vunpack.c.0.s8 %v2955
    %v2957 = vlaneseq
    %v2958 = vshrl.u32 %v2957, 7
    %v2959 = vsub.s32 %v2956, %v2958
    %v2960 = vrot.slane %v2938, %v2959
    %v2962 = vunpack.c.l.s4 1966171168
    %v2963 = vunpack.c.0.s8 %v2962
    %v2964 = vlaneseq
    %v2965 = vshrl.u32 %v2964, 7
    %v2966 = vsub.s32 %v2963, %v2965
    %v2967 = vrot.slane %v2939, %v2966
    %v2968 = vcombine.low %v2946, %v2953
    %v2969 = vcombine.low %v2960, %v2967
    %v2971 = vunpack.c.l.s4 1966171168
    %v2972 = vunpack.c.0.s8 %v2971
    %v2973 = vlaneseq
    %v2974 = vshrl.u32 %v2973, 7
    %v2975 = vsub.s32 %v2972, %v2974
    %v2976 = vrot.slane %v2968, %v2975
    %v2978 = vunpack.c.l.s4 1966171168
    %v2979 = vunpack.c.0.s8 %v2978
    %v2980 = vlaneseq
    %v2981 = vshrl.u32 %v2980, 7
    %v2982 = vsub.s32 %v2979, %v2981
    %v2983 = vrot.slane %v2969, %v2982
    %v2984 = vcombine.low %v2976, %v2983
    %v2985 = vcombine.low %v1982, %v1986
    %v2986 = vcombine.low %v1990, %v1994
    %v2987 = vcombine.low %v1998, %v2002
    %v2988 = vcombine.low %v2006, %v2010
    %v2990 = vunpack.c.l.s4 1966171168
    %v2991 = vunpack.c.0.s8 %v2990
    %v2992 = vlaneseq
    %v2993 = vshrl.u32 %v2992, 7
    %v2994 = vsub.s32 %v2991, %v2993
    %v2995 = vrot.slane %v2985, %v2994
    %v2997 = vunpack.c.l.s4 1966171168
    %v2998 = vunpack.c.0.s8 %v2997
    %v2999 = vlaneseq
    %v3000 = vshrl.u32 %v2999, 7
    %v3001 = vsub.s32 %v2998, %v3000
    %v3002 = vrot.slane %v2986, %v3001
    %v3004 = vunpack.c.l.s4 1966171168
    %v3005 = vunpack.c.0.s8 %v3004
    %v3006 = vlaneseq
    %v3007 = vshrl.u32 %v3006, 7
    %v3008 = vsub.s32 %v3005, %v3007
    %v3009 = vrot.slane %v2987, %v3008
    %v3011 = vunpack.c.l.s4 1966171168
    %v3012 = vunpack.c.0.s8 %v3011
    %v3013 = vlaneseq
    %v3014 = vshrl.u32 %v3013, 7
    %v3015 = vsub.s32 %v3012, %v3014
    %v3016 = vrot.slane %v2988, %v3015
    %v3017 = vcombine.low %v2995, %v3002
    %v3018 = vcombine.low %v3009, %v3016
    %v3020 = vunpack.c.l.s4 1966171168
    %v3021 = vunpack.c.0.s8 %v3020
    %v3022 = vlaneseq
    %v3023 = vshrl.u32 %v3022, 7
    %v3024 = vsub.s32 %v3021, %v3023
    %v3025 = vrot.slane %v3017, %v3024
    %v3027 = vunpack.c.l.s4 1966171168
    %v3028 = vunpack.c.0.s8 %v3027
    %v3029 = vlaneseq
    %v3030 = vshrl.u32 %v3029, 7
    %v3031 = vsub.s32 %v3028, %v3030
    %v3032 = vrot.slane %v3018, %v3031
    %v3033 = vcombine.low %v3025, %v3032
    %v3034 = vcombine.low %v2014, %v2018
    %v3035 = vcombine.low %v2022, %v2026
    %v3036 = vcombine.low %v2030, %v2034
    %v3037 = vcombine.low %v2038, %v2042
    %v3039 = vunpack.c.l.s4 1966171168
    %v3040 = vunpack.c.0.s8 %v3039
    %v3041 = vlaneseq
    %v3042 = vshrl.u32 %v3041, 7
    %v3043 = vsub.s32 %v3040, %v3042
    %v3044 = vrot.slane %v3034, %v3043
    %v3046 = vunpack.c.l.s4 1966171168
    %v3047 = vunpack.c.0.s8 %v3046
    %v3048 = vlaneseq
    %v3049 = vshrl.u32 %v3048, 7
    %v3050 = vsub.s32 %v3047, %v3049
    %v3051 = vrot.slane %v3035, %v3050
    %v3053 = vunpack.c.l.s4 1966171168
    %v3054 = vunpack.c.0.s8 %v3053
    %v3055 = vlaneseq
    %v3056 = vshrl.u32 %v3055, 7
    %v3057 = vsub.s32 %v3054, %v3056
    %v3058 = vrot.slane %v3036, %v3057
    %v3060 = vunpack.c.l.s4 1966171168
    %v3061 = vunpack.c.0.s8 %v3060
    %v3062 = vlaneseq
    %v3063 = vshrl.u32 %v3062, 7
    %v3064 = vsub.s32 %v3061, %v3063
    %v3065 = vrot.slane %v3037, %v3064
    %v3066 = vcombine.low %v3044, %v3051
    %v3067 = vcombine.low %v3058, %v3065
    %v3069 = vunpack.c.l.s4 1966171168
    %v3070 = vunpack.c.0.s8 %v3069
    %v3071 = vlaneseq
    %v3072 = vshrl.u32 %v3071, 7
    %v3073 = vsub.s32 %v3070, %v3072
    %v3074 = vrot.slane %v3066, %v3073
    %v3076 = vunpack.c.l.s4 1966171168
    %v3077 = vunpack.c.0.s8 %v3076
    %v3078 = vlaneseq
    %v3079 = vshrl.u32 %v3078, 7
    %v3080 = vsub.s32 %v3077, %v3079
    %v3081 = vrot.slane %v3067, %v3080
    %v3082 = vcombine.low %v3074, %v3081
    %v3083 = vcombine.low %v2046, %v2050
    %v3084 = vcombine.low %v2054, %v2058
    %v3085 = vcombine.low %v2062, %v2066
    %v3086 = vcombine.low %v2070, %v2074
    %v3088 = vunpack.c.l.s4 1966171168
    %v3089 = vunpack.c.0.s8 %v3088
    %v3090 = vlaneseq
    %v3091 = vshrl.u32 %v3090, 7
    %v3092 = vsub.s32 %v3089, %v3091
    %v3093 = vrot.slane %v3083, %v3092
    %v3095 = vunpack.c.l.s4 1966171168
    %v3096 = vunpack.c.0.s8 %v3095
    %v3097 = vlaneseq
    %v3098 = vshrl.u32 %v3097, 7
    %v3099 = vsub.s32 %v3096, %v3098
    %v3100 = vrot.slane %v3084, %v3099
    %v3102 = vunpack.c.l.s4 1966171168
    %v3103 = vunpack.c.0.s8 %v3102
    %v3104 = vlaneseq
    %v3105 = vshrl.u32 %v3104, 7
    %v3106 = vsub.s32 %v3103, %v3105
    %v3107 = vrot.slane %v3085, %v3106
    %v3109 = vunpack.c.l.s4 1966171168
    %v3110 = vunpack.c.0.s8 %v3109
    %v3111 = vlaneseq
    %v3112 = vshrl.u32 %v3111, 7
    %v3113 = vsub.s32 %v3110, %v3112
    %v3114 = vrot.slane %v3086, %v3113
    %v3115 = vcombine.low %v3093, %v3100
    %v3116 = vcombine.low %v3107, %v3114
    %v3118 = vunpack.c.l.s4 1966171168
    %v3119 = vunpack.c.0.s8 %v3118
    %v3120 = vlaneseq
    %v3121 = vshrl.u32 %v3120, 7
    %v3122 = vsub.s32 %v3119, %v3121
    %v3123 = vrot.slane %v3115, %v3122
    %v3125 = vunpack.c.l.s4 1966171168
    %v3126 = vunpack.c.0.s8 %v3125
    %v3127 = vlaneseq
    %v3128 = vshrl.u32 %v3127, 7
    %v3129 = vsub.s32 %v3126, %v3128
    %v3130 = vrot.slane %v3116, %v3129
    %v3131 = vcombine.low %v3123, %v3130
    %v3132 = vcombine.low %v2078, %v2082
    %v3133 = vcombine.low %v2086, %v2090
    %v3134 = vcombine.low %v2094, %v2098
    %v3135 = vcombine.low %v2102, %v2106
    %v3137 = vunpack.c.l.s4 1966171168
    %v3138 = vunpack.c.0.s8 %v3137
    %v3139 = vlaneseq
    %v3140 = vshrl.u32 %v3139, 7
    %v3141 = vsub.s32 %v3138, %v3140
    %v3142 = vrot.slane %v3132, %v3141
    %v3144 = vunpack.c.l.s4 1966171168
    %v3145 = vunpack.c.0.s8 %v3144
    %v3146 = vlaneseq
    %v3147 = vshrl.u32 %v3146, 7
    %v3148 = vsub.s32 %v3145, %v3147
    %v3149 = vrot.slane %v3133, %v3148
    %v3151 = vunpack.c.l.s4 1966171168
    %v3152 = vunpack.c.0.s8 %v3151
    %v3153 = vlaneseq
    %v3154 = vshrl.u32 %v3153, 7
    %v3155 = vsub.s32 %v3152, %v3154
    %v3156 = vrot.slane %v3134, %v3155
    %v3158 = vunpack.c.l.s4 1966171168
    %v3159 = vunpack.c.0.s8 %v3158
    %v3160 = vlaneseq
    %v3161 = vshrl.u32 %v3160, 7
    %v3162 = vsub.s32 %v3159, %v3161
    %v3163 = vrot.slane %v3135, %v3162
    %v3164 = vcombine.low %v3142, %v3149
    %v3165 = vcombine.low %v3156, %v3163
    %v3167 = vunpack.c.l.s4 1966171168
    %v3168 = vunpack.c.0.s8 %v3167
    %v3169 = vlaneseq
    %v3170 = vshrl.u32 %v3169, 7
    %v3171 = vsub.s32 %v3168, %v3170
    %v3172 = vrot.slane %v3164, %v3171
    %v3174 = vunpack.c.l.s4 1966171168
    %v3175 = vunpack.c.0.s8 %v3174
    %v3176 = vlaneseq
    %v3177 = vshrl.u32 %v3176, 7
    %v3178 = vsub.s32 %v3175, %v3177
    %v3179 = vrot.slane %v3165, %v3178
    %v3180 = vcombine.low %v3172, %v3179
    %v3181 = vcombine.low %v2110, %v2114
    %v3182 = vcombine.low %v2118, %v2122
    %v3183 = vcombine.low %v2126, %v2130
    %v3184 = vcombine.low %v2134, %v2138
    %v3186 = vunpack.c.l.s4 1966171168
    %v3187 = vunpack.c.0.s8 %v3186
    %v3188 = vlaneseq
    %v3189 = vshrl.u32 %v3188, 7
    %v3190 = vsub.s32 %v3187, %v3189
    %v3191 = vrot.slane %v3181, %v3190
    %v3193 = vunpack.c.l.s4 1966171168
    %v3194 = vunpack.c.0.s8 %v3193
    %v3195 = vlaneseq
    %v3196 = vshrl.u32 %v3195, 7
    %v3197 = vsub.s32 %v3194, %v3196
    %v3198 = vrot.slane %v3182, %v3197
    %v3200 = vunpack.c.l.s4 1966171168
    %v3201 = vunpack.c.0.s8 %v3200
    %v3202 = vlaneseq
    %v3203 = vshrl.u32 %v3202, 7
    %v3204 = vsub.s32 %v3201, %v3203
    %v3205 = vrot.slane %v3183, %v3204
    %v3207 = vunpack.c.l.s4 1966171168
    %v3208 = vunpack.c.0.s8 %v3207
    %v3209 = vlaneseq
    %v3210 = vshrl.u32 %v3209, 7
    %v3211 = vsub.s32 %v3208, %v3210
    %v3212 = vrot.slane %v3184, %v3211
    %v3213 = vcombine.low %v3191, %v3198
    %v3214 = vcombine.low %v3205, %v3212
    %v3216 = vunpack.c.l.s4 1966171168
    %v3217 = vunpack.c.0.s8 %v3216
    %v3218 = vlaneseq
    %v3219 = vshrl.u32 %v3218, 7
    %v3220 = vsub.s32 %v3217, %v3219
    %v3221 = vrot.slane %v3213, %v3220
    %v3223 = vunpack.c.l.s4 1966171168
    %v3224 = vunpack.c.0.s8 %v3223
    %v3225 = vlaneseq
    %v3226 = vshrl.u32 %v3225, 7
    %v3227 = vsub.s32 %v3224, %v3226
    %v3228 = vrot.slane %v3214, %v3227
    %v3229 = vcombine.low %v3221, %v3228
    %v3230 = vcombine.low %v2142, %v2146
    %v3231 = vcombine.low %v2150, %v2154
    %v3232 = vcombine.low %v2158, %v2162
    %v3233 = vcombine.low %v2166, %v2170
    %v3235 = vunpack.c.l.s4 1966171168
    %v3236 = vunpack.c.0.s8 %v3235
    %v3237 = vlaneseq
    %v3238 = vshrl.u32 %v3237, 7
    %v3239 = vsub.s32 %v3236, %v3238
    %v3240 = vrot.slane %v3230, %v3239
    %v3242 = vunpack.c.l.s4 1966171168
    %v3243 = vunpack.c.0.s8 %v3242
    %v3244 = vlaneseq
    %v3245 = vshrl.u32 %v3244, 7
    %v3246 = vsub.s32 %v3243, %v3245
    %v3247 = vrot.slane %v3231, %v3246
    %v3249 = vunpack.c.l.s4 1966171168
    %v3250 = vunpack.c.0.s8 %v3249
    %v3251 = vlaneseq
    %v3252 = vshrl.u32 %v3251, 7
    %v3253 = vsub.s32 %v3250, %v3252
    %v3254 = vrot.slane %v3232, %v3253
    %v3256 = vunpack.c.l.s4 1966171168
    %v3257 = vunpack.c.0.s8 %v3256
    %v3258 = vlaneseq
    %v3259 = vshrl.u32 %v3258, 7
    %v3260 = vsub.s32 %v3257, %v3259
    %v3261 = vrot.slane %v3233, %v3260
    %v3262 = vcombine.low %v3240, %v3247
    %v3263 = vcombine.low %v3254, %v3261
    %v3265 = vunpack.c.l.s4 1966171168
    %v3266 = vunpack.c.0.s8 %v3265
    %v3267 = vlaneseq
    %v3268 = vshrl.u32 %v3267, 7
    %v3269 = vsub.s32 %v3266, %v3268
    %v3270 = vrot.slane %v3262, %v3269
    %v3272 = vunpack.c.l.s4 1966171168
    %v3273 = vunpack.c.0.s8 %v3272
    %v3274 = vlaneseq
    %v3275 = vshrl.u32 %v3274, 7
    %v3276 = vsub.s32 %v3273, %v3275
    %v3277 = vrot.slane %v3263, %v3276
    %v3278 = vcombine.low %v3270, %v3277
    %v3279 = vcombine.low %v2174, %v2178
    %v3280 = vcombine.low %v2182, %v2186
    %v3281 = vcombine.low %v2190, %v2194
    %v3282 = vcombine.low %v2198, %v2202
    %v3284 = vunpack.c.l.s4 1966171168
    %v3285 = vunpack.c.0.s8 %v3284
    %v3286 = vlaneseq
    %v3287 = vshrl.u32 %v3286, 7
    %v3288 = vsub.s32 %v3285, %v3287
    %v3289 = vrot.slane %v3279, %v3288
    %v3291 = vunpack.c.l.s4 1966171168
    %v3292 = vunpack.c.0.s8 %v3291
    %v3293 = vlaneseq
    %v3294 = vshrl.u32 %v3293, 7
    %v3295 = vsub.s32 %v3292, %v3294
    %v3296 = vrot.slane %v3280, %v3295
    %v3298 = vunpack.c.l.s4 1966171168
    %v3299 = vunpack.c.0.s8 %v3298
    %v3300 = vlaneseq
    %v3301 = vshrl.u32 %v3300, 7
    %v3302 = vsub.s32 %v3299, %v3301
    %v3303 = vrot.slane %v3281, %v3302
    %v3305 = vunpack.c.l.s4 1966171168
    %v3306 = vunpack.c.0.s8 %v3305
    %v3307 = vlaneseq
    %v3308 = vshrl.u32 %v3307, 7
    %v3309 = vsub.s32 %v3306, %v3308
    %v3310 = vrot.slane %v3282, %v3309
    %v3311 = vcombine.low %v3289, %v3296
    %v3312 = vcombine.low %v3303, %v3310
    %v3314 = vunpack.c.l.s4 1966171168
    %v3315 = vunpack.c.0.s8 %v3314
    %v3316 = vlaneseq
    %v3317 = vshrl.u32 %v3316, 7
    %v3318 = vsub.s32 %v3315, %v3317
    %v3319 = vrot.slane %v3311, %v3318
    %v3321 = vunpack.c.l.s4 1966171168
    %v3322 = vunpack.c.0.s8 %v3321
    %v3323 = vlaneseq
    %v3324 = vshrl.u32 %v3323, 7
    %v3325 = vsub.s32 %v3322, %v3324
    %v3326 = vrot.slane %v3312, %v3325
    %v3327 = vcombine.low %v3319, %v3326
    %v3328 = vcombine.low %v2206, %v2210
    %v3329 = vcombine.low %v2214, %v2218
    %v3330 = vcombine.low %v2222, %v2226
    %v3331 = vcombine.low %v2230, %v2234
    %v3333 = vunpack.c.l.s4 1966171168
    %v3334 = vunpack.c.0.s8 %v3333
    %v3335 = vlaneseq
    %v3336 = vshrl.u32 %v3335, 7
    %v3337 = vsub.s32 %v3334, %v3336
    %v3338 = vrot.slane %v3328, %v3337
    %v3340 = vunpack.c.l.s4 1966171168
    %v3341 = vunpack.c.0.s8 %v3340
    %v3342 = vlaneseq
    %v3343 = vshrl.u32 %v3342, 7
    %v3344 = vsub.s32 %v3341, %v3343
    %v3345 = vrot.slane %v3329, %v3344
    %v3347 = vunpack.c.l.s4 1966171168
    %v3348 = vunpack.c.0.s8 %v3347
    %v3349 = vlaneseq
    %v3350 = vshrl.u32 %v3349, 7
    %v3351 = vsub.s32 %v3348, %v3350
    %v3352 = vrot.slane %v3330, %v3351
    %v3354 = vunpack.c.l.s4 1966171168
    %v3355 = vunpack.c.0.s8 %v3354
    %v3356 = vlaneseq
    %v3357 = vshrl.u32 %v3356, 7
    %v3358 = vsub.s32 %v3355, %v3357
    %v3359 = vrot.slane %v3331, %v3358
    %v3360 = vcombine.low %v3338, %v3345
    %v3361 = vcombine.low %v3352, %v3359
    %v3363 = vunpack.c.l.s4 1966171168
    %v3364 = vunpack.c.0.s8 %v3363
    %v3365 = vlaneseq
    %v3366 = vshrl.u32 %v3365, 7
    %v3367 = vsub.s32 %v3364, %v3366
    %v3368 = vrot.slane %v3360, %v3367
    %v3370 = vunpack.c.l.s4 1966171168
    %v3371 = vunpack.c.0.s8 %v3370
    %v3372 = vlaneseq
    %v3373 = vshrl.u32 %v3372, 7
    %v3374 = vsub.s32 %v3371, %v3373
    %v3375 = vrot.slane %v3361, %v3374
    %v3376 = vcombine.low %v3368, %v3375
    %v3377 = vcombine.low %v2238, %v2242
    %v3378 = vcombine.low %v2246, %v2250
    %v3379 = vcombine.low %v2254, %v2258
    %v3380 = vcombine.low %v2262, %v2266
    %v3382 = vunpack.c.l.s4 1966171168
    %v3383 = vunpack.c.0.s8 %v3382
    %v3384 = vlaneseq
    %v3385 = vshrl.u32 %v3384, 7
    %v3386 = vsub.s32 %v3383, %v3385
    %v3387 = vrot.slane %v3377, %v3386
    %v3389 = vunpack.c.l.s4 1966171168
    %v3390 = vunpack.c.0.s8 %v3389
    %v3391 = vlaneseq
    %v3392 = vshrl.u32 %v3391, 7
    %v3393 = vsub.s32 %v3390, %v3392
    %v3394 = vrot.slane %v3378, %v3393
    %v3396 = vunpack.c.l.s4 1966171168
    %v3397 = vunpack.c.0.s8 %v3396
    %v3398 = vlaneseq
    %v3399 = vshrl.u32 %v3398, 7
    %v3400 = vsub.s32 %v3397, %v3399
    %v3401 = vrot.slane %v3379, %v3400
    %v3403 = vunpack.c.l.s4 1966171168
    %v3404 = vunpack.c.0.s8 %v3403
    %v3405 = vlaneseq
    %v3406 = vshrl.u32 %v3405, 7
    %v3407 = vsub.s32 %v3404, %v3406
    %v3408 = vrot.slane %v3380, %v3407
    %v3409 = vcombine.low %v3387, %v3394
    %v3410 = vcombine.low %v3401, %v3408
    %v3412 = vunpack.c.l.s4 1966171168
    %v3413 = vunpack.c.0.s8 %v3412
    %v3414 = vlaneseq
    %v3415 = vshrl.u32 %v3414, 7
    %v3416 = vsub.s32 %v3413, %v3415
    %v3417 = vrot.slane %v3409, %v3416
    %v3419 = vunpack.c.l.s4 1966171168
    %v3420 = vunpack.c.0.s8 %v3419
    %v3421 = vlaneseq
    %v3422 = vshrl.u32 %v3421, 7
    %v3423 = vsub.s32 %v3420, %v3422
    %v3424 = vrot.slane %v3410, %v3423
    %v3425 = vcombine.low %v3417, %v3424
    %v3426 = vcombine.low %v2270, %v2274
    %v3427 = vcombine.low %v2278, %v2282
    %v3428 = vcombine.low %v2286, %v2290
    %v3429 = vcombine.low %v2294, %v2298
    %v3431 = vunpack.c.l.s4 1966171168
    %v3432 = vunpack.c.0.s8 %v3431
    %v3433 = vlaneseq
    %v3434 = vshrl.u32 %v3433, 7
    %v3435 = vsub.s32 %v3432, %v3434
    %v3436 = vrot.slane %v3426, %v3435
    %v3438 = vunpack.c.l.s4 1966171168
    %v3439 = vunpack.c.0.s8 %v3438
    %v3440 = vlaneseq
    %v3441 = vshrl.u32 %v3440, 7
    %v3442 = vsub.s32 %v3439, %v3441
    %v3443 = vrot.slane %v3427, %v3442
    %v3445 = vunpack.c.l.s4 1966171168
    %v3446 = vunpack.c.0.s8 %v3445
    %v3447 = vlaneseq
    %v3448 = vshrl.u32 %v3447, 7
    %v3449 = vsub.s32 %v3446, %v3448
    %v3450 = vrot.slane %v3428, %v3449
    %v3452 = vunpack.c.l.s4 1966171168
    %v3453 = vunpack.c.0.s8 %v3452
    %v3454 = vlaneseq
    %v3455 = vshrl.u32 %v3454, 7
    %v3456 = vsub.s32 %v3453, %v3455
    %v3457 = vrot.slane %v3429, %v3456
    %v3458 = vcombine.low %v3436, %v3443
    %v3459 = vcombine.low %v3450, %v3457
    %v3461 = vunpack.c.l.s4 1966171168
    %v3462 = vunpack.c.0.s8 %v3461
    %v3463 = vlaneseq
    %v3464 = vshrl.u32 %v3463, 7
    %v3465 = vsub.s32 %v3462, %v3464
    %v3466 = vrot.slane %v3458, %v3465
    %v3468 = vunpack.c.l.s4 1966171168
    %v3469 = vunpack.c.0.s8 %v3468
    %v3470 = vlaneseq
    %v3471 = vshrl.u32 %v3470, 7
    %v3472 = vsub.s32 %v3469, %v3471
    %v3473 = vrot.slane %v3459, %v3472
    %v3474 = vcombine.low %v3466, %v3473
    %3475 = vset.pattern.permute.xlu0 0
    %3476 = vperm.xlu0 %3475, %v2347
    %v3477 = vpop.permute.xlu0 %3476
    %3478 = vset.pattern.permute.xlu0 0
    %3479 = vperm.xlu0 %3478, %v2396
    %v3480 = vpop.permute.xlu0 %3479
    %3481 = vset.pattern.permute.xlu0 0
    %3482 = vperm.xlu0 %3481, %v2445
    %v3483 = vpop.permute.xlu0 %3482
    %3484 = vset.pattern.permute.xlu0 0
    %3485 = vperm.xlu0 %3484, %v2494
    %v3486 = vpop.permute.xlu0 %3485
    %3487 = vset.pattern.permute.xlu0 0
    %3488 = vperm.xlu0 %3487, %v2543
    %v3489 = vpop.permute.xlu0 %3488
    %3490 = vset.pattern.permute.xlu0 0
    %3491 = vperm.xlu0 %3490, %v2592
    %v3492 = vpop.permute.xlu0 %3491
    %3493 = vset.pattern.permute.xlu0 0
    %3494 = vperm.xlu0 %3493, %v2641
    %v3495 = vpop.permute.xlu0 %3494
    %3496 = vset.pattern.permute.xlu0 0
    %3497 = vperm.xlu0 %3496, %v2690
    %v3498 = vpop.permute.xlu0 %3497
    %3499 = vset.pattern.permute.xlu0 0
    %3500 = vperm.xlu0 %3499, %v2739
    %v3501 = vpop.permute.xlu0 %3500
    %3502 = vset.pattern.permute.xlu0 0
    %3503 = vperm.xlu0 %3502, %v2788
    %v3504 = vpop.permute.xlu0 %3503
    %3505 = vset.pattern.permute.xlu0 0
    %3506 = vperm.xlu0 %3505, %v2837
    %v3507 = vpop.permute.xlu0 %3506
    %3508 = vset.pattern.permute.xlu0 0
    %3509 = vperm.xlu0 %3508, %v2886
    %v3510 = vpop.permute.xlu0 %3509
    %3511 = vset.pattern.permute.xlu0 0
    %3512 = vperm.xlu0 %3511, %v2935
    %v3513 = vpop.permute.xlu0 %3512
    %3514 = vset.pattern.permute.xlu0 0
    %3515 = vperm.xlu0 %3514, %v2984
    %v3516 = vpop.permute.xlu0 %3515
    %3517 = vset.pattern.permute.xlu0 0
    %3518 = vperm.xlu0 %3517, %v3033
    %v3519 = vpop.permute.xlu0 %3518
    %3520 = vset.pattern.permute.xlu0 0
    %3521 = vperm.xlu0 %3520, %v3082
    %v3522 = vpop.permute.xlu0 %3521
    %3523 = vset.pattern.permute.xlu0 0
    %3524 = vperm.xlu0 %3523, %v3131
    %v3525 = vpop.permute.xlu0 %3524
    %3526 = vset.pattern.permute.xlu0 0
    %3527 = vperm.xlu0 %3526, %v3180
    %v3528 = vpop.permute.xlu0 %3527
    %3529 = vset.pattern.permute.xlu0 0
    %3530 = vperm.xlu0 %3529, %v3229
    %v3531 = vpop.permute.xlu0 %3530
    %3532 = vset.pattern.permute.xlu0 0
    %3533 = vperm.xlu0 %3532, %v3278
    %v3534 = vpop.permute.xlu0 %3533
    %3535 = vset.pattern.permute.xlu0 0
    %3536 = vperm.xlu0 %3535, %v3327
    %v3537 = vpop.permute.xlu0 %3536
    %3538 = vset.pattern.permute.xlu0 0
    %3539 = vperm.xlu0 %3538, %v3376
    %v3540 = vpop.permute.xlu0 %3539
    %3541 = vset.pattern.permute.xlu0 0
    %3542 = vperm.xlu0 %3541, %v3425
    %v3543 = vpop.permute.xlu0 %3542
    %3544 = vset.pattern.permute.xlu0 0
    %3545 = vperm.xlu0 %3544, %v3474
    %v3546 = vpop.permute.xlu0 %3545
    %v3547 = vlaneseq
    %v3548 = vshrl.u32 %v3547, 7
    %v3549 = vsub.s32 %v112, %v3548
    %v3550 = vrot.slane %v3477, %v3549
    %v3551 = vadd.s32 %v112, 4294967288
    %v3552 = vlaneseq
    %v3553 = vshrl.u32 %v3552, 7
    %v3554 = vsub.s32 %v3551, %v3553
    %v3555 = vrot.slane %v3480, %v3554
    %vm3556 = vcmask 130112
    %v3557 = vsel %vm3556, %v3555, %v3550
    %v3558 = vadd.s32 %v112, 4294967280
    %v3559 = vlaneseq
    %v3560 = vshrl.u32 %v3559, 7
    %v3561 = vsub.s32 %v3558, %v3560
    %v3562 = vrot.slane %v3483, %v3561
    %vm3563 = vcmask 195712
    %v3564 = vsel %vm3563, %v3562, %v3557
    %v3565 = vadd.s32 %v112, 4294967272
    %v3566 = vlaneseq
    %v3567 = vshrl.u32 %v3566, 7
    %v3568 = vsub.s32 %v3565, %v3567
    %v3569 = vrot.slane %v3486, %v3568
    %vm3570 = vcmask 261312
    %v3571 = vsel %vm3570, %v3569, %v3564
    %v3572 = vadd.s32 %v112, 4294967264
    %v3573 = vlaneseq
    %v3574 = vshrl.u32 %v3573, 7
    %v3575 = vsub.s32 %v3572, %v3574
    %v3576 = vrot.slane %v3489, %v3575
    %vm3577 = vcmask 326912
    %v3578 = vsel %vm3577, %v3576, %v3571
    %v3579 = vadd.s32 %v112, 4294967256
    %v3580 = vlaneseq
    %v3581 = vshrl.u32 %v3580, 7
    %v3582 = vsub.s32 %v3579, %v3581
    %v3583 = vrot.slane %v3492, %v3582
    %vm3584 = vcmask 392512
    %v3585 = vsel %vm3584, %v3583, %v3578
    %v3586 = vadd.s32 %v112, 4294967248
    %v3587 = vlaneseq
    %v3588 = vshrl.u32 %v3587, 7
    %v3589 = vsub.s32 %v3586, %v3588
    %v3590 = vrot.slane %v3495, %v3589
    %vm3591 = vcmask 458112
    %v3592 = vsel %vm3591, %v3590, %v3585
    %v3593 = vadd.s32 %v112, 4294967240
    %v3594 = vlaneseq
    %v3595 = vshrl.u32 %v3594, 7
    %v3596 = vsub.s32 %v3593, %v3595
    %v3597 = vrot.slane %v3498, %v3596
    %vm3598 = vcmask 523712
    %v3599 = vsel %vm3598, %v3597, %v3592
    %v3600 = vadd.s32 %v112, 4294967232
    %v3601 = vlaneseq
    %v3602 = vshrl.u32 %v3601, 7
    %v3603 = vsub.s32 %v3600, %v3602
    %v3604 = vrot.slane %v3501, %v3603
    %vm3605 = vcmask 589312
    %v3606 = vsel %vm3605, %v3604, %v3599
    %v3607 = vadd.s32 %v112, 4294967224
    %v3608 = vlaneseq
    %v3609 = vshrl.u32 %v3608, 7
    %v3610 = vsub.s32 %v3607, %v3609
    %v3611 = vrot.slane %v3504, %v3610
    %vm3612 = vcmask 654912
    %v3613 = vsel %vm3612, %v3611, %v3606
    %v3614 = vadd.s32 %v112, 4294967216
    %v3615 = vlaneseq
    %v3616 = vshrl.u32 %v3615, 7
    %v3617 = vsub.s32 %v3614, %v3616
    %v3618 = vrot.slane %v3507, %v3617
    %vm3619 = vcmask 720512
    %v3620 = vsel %vm3619, %v3618, %v3613
    %v3621 = vadd.s32 %v112, 4294967208
    %v3622 = vlaneseq
    %v3623 = vshrl.u32 %v3622, 7
    %v3624 = vsub.s32 %v3621, %v3623
    %v3625 = vrot.slane %v3510, %v3624
    %vm3626 = vcmask 786112
    %v3627 = vsel %vm3626, %v3625, %v3620
    %v3628 = vadd.s32 %v112, 4294967200
    %v3629 = vlaneseq
    %v3630 = vshrl.u32 %v3629, 7
    %v3631 = vsub.s32 %v3628, %v3630
    %v3632 = vrot.slane %v3513, %v3631
    %vm3633 = vcmask 851712
    %v3634 = vsel %vm3633, %v3632, %v3627
    %v3635 = vadd.s32 %v112, 4294967192
    %v3636 = vlaneseq
    %v3637 = vshrl.u32 %v3636, 7
    %v3638 = vsub.s32 %v3635, %v3637
    %v3639 = vrot.slane %v3516, %v3638
    %vm3640 = vcmask 917312
    %v3641 = vsel %vm3640, %v3639, %v3634
    %v3642 = vadd.s32 %v112, 4294967184
    %v3643 = vlaneseq
    %v3644 = vshrl.u32 %v3643, 7
    %v3645 = vsub.s32 %v3642, %v3644
    %v3646 = vrot.slane %v3519, %v3645
    %vm3647 = vcmask 982912
    %v3648 = vsel %vm3647, %v3646, %v3641
    %v3649 = vadd.s32 %v112, 4294967176
    %v3650 = vlaneseq
    %v3651 = vshrl.u32 %v3650, 7
    %v3652 = vsub.s32 %v3649, %v3651
    %v3653 = vrot.slane %v3522, %v3652
    %vm3654 = vcmask 1048512
    %v3655 = vsel %vm3654, %v3653, %v3648
    %v3656 = vlaneseq
    %v3657 = vshrl.u32 %v3656, 7
    %v3658 = vsub.s32 %v112, %v3657
    %v3659 = vrot.slane %v3525, %v3658
    %v3660 = vlaneseq
    %v3661 = vshrl.u32 %v3660, 7
    %v3662 = vsub.s32 %v3551, %v3661
    %v3663 = vrot.slane %v3528, %v3662
    %v3664 = vsel %vm3556, %v3663, %v3659
    %v3665 = vlaneseq
    %v3666 = vshrl.u32 %v3665, 7
    %v3667 = vsub.s32 %v3558, %v3666
    %v3668 = vrot.slane %v3531, %v3667
    %v3669 = vsel %vm3563, %v3668, %v3664
    %v3670 = vlaneseq
    %v3671 = vshrl.u32 %v3670, 7
    %v3672 = vsub.s32 %v3565, %v3671
    %v3673 = vrot.slane %v3534, %v3672
    %v3674 = vsel %vm3570, %v3673, %v3669
    %v3675 = vlaneseq
    %v3676 = vshrl.u32 %v3675, 7
    %v3677 = vsub.s32 %v3572, %v3676
    %v3678 = vrot.slane %v3537, %v3677
    %v3679 = vsel %vm3577, %v3678, %v3674
    %v3680 = vlaneseq
    %v3681 = vshrl.u32 %v3680, 7
    %v3682 = vsub.s32 %v3579, %v3681
    %v3683 = vrot.slane %v3540, %v3682
    %v3684 = vsel %vm3584, %v3683, %v3679
    %v3685 = vlaneseq
    %v3686 = vshrl.u32 %v3685, 7
    %v3687 = vsub.s32 %v3586, %v3686
    %v3688 = vrot.slane %v3543, %v3687
    %v3689 = vsel %vm3591, %v3688, %v3684
    %v3690 = vlaneseq
    %v3691 = vshrl.u32 %v3690, 7
    %v3692 = vsub.s32 %v3593, %v3691
    %v3693 = vrot.slane %v3546, %v3692
    %v3694 = vsel %vm3598, %v3693, %v3689
    %v3695 = vcombine.low %v3655, %v3694
    %v3697 = vunpack.c.l.s4 1966171168
    %v3698 = vunpack.c.0.s8 %v3697
    %v3699 = vlaneseq
    %v3700 = vshrl.u32 %v3699, 7
    %v3701 = vsub.s32 %v3698, %v3700
    %v3702 = vrot.slane %v3695, %v3701
    %v3704 = vunpack.c.l.s4 1966171168
    %v3705 = vunpack.c.0.s8 %v3704
    %v3706 = vlaneseq
    %v3707 = vshrl.u32 %v3706, 7
    %v3708 = vsub.s32 %v3705, %v3707
    %v3709 = vrot.slane %v3702, %v3708
    %v3710 = vlaneseq
    %vm3711 = vcmp.ge.s32.totalorder %v3710, 0
    %vm3712 = vcmp.lt.s32.totalorder %v3710, 192
    %vm3713 = vmand %vm3711, %vm3712
    %3714 = vst.msk [vmem:[#allocation5] sm:$0x3] %vm3713, %v3709
    %v3715 = vld [vmem:[%s3] sm:$0xff]
    %v3716 = vld [vmem:[%s3 + $0x8] sm:$0xff]
    %v3717 = vld [vmem:[%s3 + $0x10] sm:$0xff]
    %v3718 = vld [vmem:[%s3 + $0x18] sm:$0xff]
    %v3719 = vld [vmem:[%s3 + $0x20] sm:$0xff]
    %v3720 = vld [vmem:[%s3 + $0x28] sm:$0xff]
    %v3721 = vld [vmem:[%s3 + $0x30] sm:$0xff]
    %v3722 = vld [vmem:[%s3 + $0x38] sm:$0xff]
    %v3723 = vld [vmem:[%s3 + $0x40] sm:$0xff]
    %v3724 = vld [vmem:[%s3 + $0x48] sm:$0xff]
    %v3725 = vld [vmem:[%s3 + $0x50] sm:$0xff]
    %v3726 = vld [vmem:[%s3 + $0x58] sm:$0xff]
    %v3727 = vld [vmem:[%s3 + $0x60] sm:$0xff]
    %v3728 = vld [vmem:[%s3 + $0x68] sm:$0xff]
    %v3729 = vld [vmem:[%s3 + $0x70] sm:$0xff]
    %v3730 = vld [vmem:[%s3 + $0x78] sm:$0xff]
    %v3731 = vld [vmem:[%s3 + $0x80] sm:$0xff]
    %v3732 = vld [vmem:[%s3 + $0x88] sm:$0xff]
    %v3733 = vld [vmem:[%s3 + $0x90] sm:$0xff]
    %v3734 = vld [vmem:[%s3 + $0x98] sm:$0xff]
    %v3735 = vld [vmem:[%s3 + $0xa0] sm:$0xff]
    %v3736 = vld [vmem:[%s3 + $0xa8] sm:$0xff]
    %v3737 = vld [vmem:[%s3 + $0xb0] sm:$0xff]
    %v3738 = vld [vmem:[%s3 + $0xb8] sm:$0xff]
    %3739 = vset.pattern.permute.xlu0 0
    %3740 = vperm.xlu0 %3739, %v3715
    %v3741 = vpop.permute.xlu0 %3740
    %3742 = vset.pattern.permute.xlu0 0
    %3743 = vperm.xlu0 %3742, %v3716
    %v3744 = vpop.permute.xlu0 %3743
    %3745 = vset.pattern.permute.xlu0 0
    %3746 = vperm.xlu0 %3745, %v3717
    %v3747 = vpop.permute.xlu0 %3746
    %3748 = vset.pattern.permute.xlu0 0
    %3749 = vperm.xlu0 %3748, %v3718
    %v3750 = vpop.permute.xlu0 %3749
    %3751 = vset.pattern.permute.xlu0 0
    %3752 = vperm.xlu0 %3751, %v3719
    %v3753 = vpop.permute.xlu0 %3752
    %3754 = vset.pattern.permute.xlu0 0
    %3755 = vperm.xlu0 %3754, %v3720
    %v3756 = vpop.permute.xlu0 %3755
    %3757 = vset.pattern.permute.xlu0 0
    %3758 = vperm.xlu0 %3757, %v3721
    %v3759 = vpop.permute.xlu0 %3758
    %3760 = vset.pattern.permute.xlu0 0
    %3761 = vperm.xlu0 %3760, %v3722
    %v3762 = vpop.permute.xlu0 %3761
    %3763 = vset.pattern.permute.xlu0 0
    %3764 = vperm.xlu0 %3763, %v3723
    %v3765 = vpop.permute.xlu0 %3764
    %3766 = vset.pattern.permute.xlu0 0
    %3767 = vperm.xlu0 %3766, %v3724
    %v3768 = vpop.permute.xlu0 %3767
    %3769 = vset.pattern.permute.xlu0 0
    %3770 = vperm.xlu0 %3769, %v3725
    %v3771 = vpop.permute.xlu0 %3770
    %3772 = vset.pattern.permute.xlu0 0
    %3773 = vperm.xlu0 %3772, %v3726
    %v3774 = vpop.permute.xlu0 %3773
    %3775 = vset.pattern.permute.xlu0 0
    %3776 = vperm.xlu0 %3775, %v3727
    %v3777 = vpop.permute.xlu0 %3776
    %3778 = vset.pattern.permute.xlu0 0
    %3779 = vperm.xlu0 %3778, %v3728
    %v3780 = vpop.permute.xlu0 %3779
    %3781 = vset.pattern.permute.xlu0 0
    %3782 = vperm.xlu0 %3781, %v3729
    %v3783 = vpop.permute.xlu0 %3782
    %3784 = vset.pattern.permute.xlu0 0
    %3785 = vperm.xlu0 %3784, %v3730
    %v3786 = vpop.permute.xlu0 %3785
    %3787 = vset.pattern.permute.xlu0 0
    %3788 = vperm.xlu0 %3787, %v3731
    %v3789 = vpop.permute.xlu0 %3788
    %3790 = vset.pattern.permute.xlu0 0
    %3791 = vperm.xlu0 %3790, %v3732
    %v3792 = vpop.permute.xlu0 %3791
    %3793 = vset.pattern.permute.xlu0 0
    %3794 = vperm.xlu0 %3793, %v3733
    %v3795 = vpop.permute.xlu0 %3794
    %3796 = vset.pattern.permute.xlu0 0
    %3797 = vperm.xlu0 %3796, %v3734
    %v3798 = vpop.permute.xlu0 %3797
    %3799 = vset.pattern.permute.xlu0 0
    %3800 = vperm.xlu0 %3799, %v3735
    %v3801 = vpop.permute.xlu0 %3800
    %3802 = vset.pattern.permute.xlu0 0
    %3803 = vperm.xlu0 %3802, %v3736
    %v3804 = vpop.permute.xlu0 %3803
    %3805 = vset.pattern.permute.xlu0 0
    %3806 = vperm.xlu0 %3805, %v3737
    %v3807 = vpop.permute.xlu0 %3806
    %3808 = vset.pattern.permute.xlu0 0
    %3809 = vperm.xlu0 %3808, %v3738
    %v3810 = vpop.permute.xlu0 %3809
    %vm3811 = vcmp.eq.s32.totalorder %v112, %v3741
    %vm3812 = vcmp.eq.s32.totalorder %v112, %v3744
    %vm3813 = vcmp.eq.s32.totalorder %v112, %v3747
    %vm3814 = vcmp.eq.s32.totalorder %v112, %v3750
    %vm3815 = vcmp.eq.s32.totalorder %v112, %v3753
    %vm3816 = vcmp.eq.s32.totalorder %v112, %v3756
    %vm3817 = vcmp.eq.s32.totalorder %v112, %v3759
    %vm3818 = vcmp.eq.s32.totalorder %v112, %v3762
    %vm3819 = vcmp.eq.s32.totalorder %v112, %v3765
    %vm3820 = vcmp.eq.s32.totalorder %v112, %v3768
    %vm3821 = vcmp.eq.s32.totalorder %v112, %v3771
    %vm3822 = vcmp.eq.s32.totalorder %v112, %v3774
    %vm3823 = vcmp.eq.s32.totalorder %v112, %v3777
    %vm3824 = vcmp.eq.s32.totalorder %v112, %v3780
    %vm3825 = vcmp.eq.s32.totalorder %v112, %v3783
    %vm3826 = vcmp.eq.s32.totalorder %v112, %v3786
    %vm3827 = vcmp.eq.s32.totalorder %v112, %v3789
    %vm3828 = vcmp.eq.s32.totalorder %v112, %v3792
    %vm3829 = vcmp.eq.s32.totalorder %v112, %v3795
    %vm3830 = vcmp.eq.s32.totalorder %v112, %v3798
    %vm3831 = vcmp.eq.s32.totalorder %v112, %v3801
    %vm3832 = vcmp.eq.s32.totalorder %v112, %v3804
    %vm3833 = vcmp.eq.s32.totalorder %v112, %v3807
    %vm3834 = vcmp.eq.s32.totalorder %v112, %v3810
    %v3835 = vsel %vm3811, 1, 0
    %v3836 = vsel %vm3812, 1, 0
    %v3837 = vsel %vm3813, 1, 0
    %v3838 = vsel %vm3814, 1, 0
    %v3839 = vsel %vm3815, 1, 0
    %v3840 = vsel %vm3816, 1, 0
    %v3841 = vsel %vm3817, 1, 0
    %v3842 = vsel %vm3818, 1, 0
    %v3843 = vsel %vm3819, 1, 0
    %v3844 = vsel %vm3820, 1, 0
    %v3845 = vsel %vm3821, 1, 0
    %v3846 = vsel %vm3822, 1, 0
    %v3847 = vsel %vm3823, 1, 0
    %v3848 = vsel %vm3824, 1, 0
    %v3849 = vsel %vm3825, 1, 0
    %v3850 = vsel %vm3826, 1, 0
    %v3851 = vsel %vm3827, 1, 0
    %v3852 = vsel %vm3828, 1, 0
    %v3853 = vsel %vm3829, 1, 0
    %v3854 = vsel %vm3830, 1, 0
    %v3855 = vsel %vm3831, 1, 0
    %v3856 = vsel %vm3832, 1, 0
    %v3857 = vsel %vm3833, 1, 0
    %v3858 = vsel %vm3834, 1, 0
    %v3859 = vcvt.s32.f32 %v3835
    %v3860 = vcvt.s32.f32 %v3836
    %v3861 = vcvt.s32.f32 %v3837
    %v3862 = vcvt.s32.f32 %v3838
    %v3863 = vcvt.s32.f32 %v3839
    %v3864 = vcvt.s32.f32 %v3840
    %v3865 = vcvt.s32.f32 %v3841
    %v3866 = vcvt.s32.f32 %v3842
    %v3867 = vcvt.s32.f32 %v3843
    %v3868 = vcvt.s32.f32 %v3844
    %v3869 = vcvt.s32.f32 %v3845
    %v3870 = vcvt.s32.f32 %v3846
    %v3871 = vcvt.s32.f32 %v3847
    %v3872 = vcvt.s32.f32 %v3848
    %v3873 = vcvt.s32.f32 %v3849
    %v3874 = vcvt.s32.f32 %v3850
    %v3875 = vcvt.s32.f32 %v3851
    %v3876 = vcvt.s32.f32 %v3852
    %v3877 = vcvt.s32.f32 %v3853
    %v3878 = vcvt.s32.f32 %v3854
    %v3879 = vcvt.s32.f32 %v3855
    %v3880 = vcvt.s32.f32 %v3856
    %v3881 = vcvt.s32.f32 %v3857
    %v3882 = vcvt.s32.f32 %v3858
    %v3883 = vmul.f32 %v956, %v3859
    %v3884 = vmul.f32 %v959, %v3860
    %v3885 = vmul.f32 %v964, %v3861
    %v3886 = vmul.f32 %v967, %v3862
    %v3887 = vmul.f32 %v972, %v3863
    %v3888 = vmul.f32 %v975, %v3864
    %v3889 = vmul.f32 %v980, %v3865
    %v3890 = vmul.f32 %v983, %v3866
    %v3891 = vmul.f32 %v988, %v3867
    %v3892 = vmul.f32 %v991, %v3868
    %v3893 = vmul.f32 %v996, %v3869
    %v3894 = vmul.f32 %v999, %v3870
    %v3895 = vmul.f32 %v1004, %v3871
    %v3896 = vmul.f32 %v1007, %v3872
    %v3897 = vmul.f32 %v1012, %v3873
    %v3898 = vmul.f32 %v1015, %v3874
    %v3899 = vmul.f32 %v1020, %v3875
    %v3900 = vmul.f32 %v1023, %v3876
    %v3901 = vmul.f32 %v1028, %v3877
    %v3902 = vmul.f32 %v1031, %v3878
    %v3903 = vmul.f32 %v1036, %v3879
    %v3904 = vmul.f32 %v1039, %v3880
    %v3905 = vmul.f32 %v1044, %v3881
    %v3906 = vmul.f32 %v1047, %v3882
    %3907 = vadd.xlane.f32.xlu0 %v3883
    %v3908 = vpop.xlane.xlu0 %3907
    %3909 = vadd.xlane.f32.xlu0 %v3884
    %v3910 = vpop.xlane.xlu0 %3909
    %3911 = vadd.xlane.f32.xlu0 %v3885
    %v3912 = vpop.xlane.xlu0 %3911
    %3913 = vadd.xlane.f32.xlu0 %v3886
    %v3914 = vpop.xlane.xlu0 %3913
    %3915 = vadd.xlane.f32.xlu0 %v3887
    %v3916 = vpop.xlane.xlu0 %3915
    %3917 = vadd.xlane.f32.xlu0 %v3888
    %v3918 = vpop.xlane.xlu0 %3917
    %3919 = vadd.xlane.f32.xlu0 %v3889
    %v3920 = vpop.xlane.xlu0 %3919
    %3921 = vadd.xlane.f32.xlu0 %v3890
    %v3922 = vpop.xlane.xlu0 %3921
    %3923 = vadd.xlane.f32.xlu0 %v3891
    %v3924 = vpop.xlane.xlu0 %3923
    %3925 = vadd.xlane.f32.xlu0 %v3892
    %v3926 = vpop.xlane.xlu0 %3925
    %3927 = vadd.xlane.f32.xlu0 %v3893
    %v3928 = vpop.xlane.xlu0 %3927
    %3929 = vadd.xlane.f32.xlu0 %v3894
    %v3930 = vpop.xlane.xlu0 %3929
    %3931 = vadd.xlane.f32.xlu0 %v3895
    %v3932 = vpop.xlane.xlu0 %3931
    %3933 = vadd.xlane.f32.xlu0 %v3896
    %v3934 = vpop.xlane.xlu0 %3933
    %3935 = vadd.xlane.f32.xlu0 %v3897
    %v3936 = vpop.xlane.xlu0 %3935
    %3937 = vadd.xlane.f32.xlu0 %v3898
    %v3938 = vpop.xlane.xlu0 %3937
    %3939 = vadd.xlane.f32.xlu0 %v3899
    %v3940 = vpop.xlane.xlu0 %3939
    %3941 = vadd.xlane.f32.xlu0 %v3900
    %v3942 = vpop.xlane.xlu0 %3941
    %3943 = vadd.xlane.f32.xlu0 %v3901
    %v3944 = vpop.xlane.xlu0 %3943
    %3945 = vadd.xlane.f32.xlu0 %v3902
    %v3946 = vpop.xlane.xlu0 %3945
    %3947 = vadd.xlane.f32.xlu0 %v3903
    %v3948 = vpop.xlane.xlu0 %3947
    %3949 = vadd.xlane.f32.xlu0 %v3904
    %v3950 = vpop.xlane.xlu0 %3949
    %3951 = vadd.xlane.f32.xlu0 %v3905
    %v3952 = vpop.xlane.xlu0 %3951
    %3953 = vadd.xlane.f32.xlu0 %v3906
    %v3954 = vpop.xlane.xlu0 %3953
    %v3955 = vadd.f32 %v956, 1.0
    %v3956 = vadd.f32 %v959, 1.0
    %v3957 = vadd.f32 %v964, 1.0
    %v3958 = vadd.f32 %v967, 1.0
    %v3959 = vadd.f32 %v972, 1.0
    %v3960 = vadd.f32 %v975, 1.0
    %v3961 = vadd.f32 %v980, 1.0
    %v3962 = vadd.f32 %v983, 1.0
    %v3963 = vadd.f32 %v988, 1.0
    %v3964 = vadd.f32 %v991, 1.0
    %v3965 = vadd.f32 %v996, 1.0
    %v3966 = vadd.f32 %v999, 1.0
    %v3967 = vadd.f32 %v1004, 1.0
    %v3968 = vadd.f32 %v1007, 1.0
    %v3969 = vadd.f32 %v1012, 1.0
    %v3970 = vadd.f32 %v1015, 1.0
    %v3971 = vadd.f32 %v1020, 1.0
    %v3972 = vadd.f32 %v1023, 1.0
    %v3973 = vadd.f32 %v1028, 1.0
    %v3974 = vadd.f32 %v1031, 1.0
    %v3975 = vadd.f32 %v1036, 1.0
    %v3976 = vadd.f32 %v1039, 1.0
    %v3977 = vadd.f32 %v1044, 1.0
    %v3978 = vadd.f32 %v1047, 1.0
    %v3979 = vsub.f32 %v3955, %v3908
    %v3980 = vsub.f32 %v3956, %v3910
    %v3981 = vsub.f32 %v3957, %v3912
    %v3982 = vsub.f32 %v3958, %v3914
    %v3983 = vsub.f32 %v3959, %v3916
    %v3984 = vsub.f32 %v3960, %v3918
    %v3985 = vsub.f32 %v3961, %v3920
    %v3986 = vsub.f32 %v3962, %v3922
    %v3987 = vsub.f32 %v3963, %v3924
    %v3988 = vsub.f32 %v3964, %v3926
    %v3989 = vsub.f32 %v3965, %v3928
    %v3990 = vsub.f32 %v3966, %v3930
    %v3991 = vsub.f32 %v3967, %v3932
    %v3992 = vsub.f32 %v3968, %v3934
    %v3993 = vsub.f32 %v3969, %v3936
    %v3994 = vsub.f32 %v3970, %v3938
    %v3995 = vsub.f32 %v3971, %v3940
    %v3996 = vsub.f32 %v3972, %v3942
    %v3997 = vsub.f32 %v3973, %v3944
    %v3998 = vsub.f32 %v3974, %v3946
    %v3999 = vsub.f32 %v3975, %v3948
    %v4000 = vsub.f32 %v3976, %v3950
    %v4001 = vsub.f32 %v3977, %v3952
    %v4002 = vsub.f32 %v3978, %v3954
    %v4003 = vmax.f32 %v3979, 0.0
    %v4004 = vmax.f32 %v3980, 0.0
    %v4005 = vmax.f32 %v3981, 0.0
    %v4006 = vmax.f32 %v3982, 0.0
    %v4007 = vmax.f32 %v3983, 0.0
    %v4008 = vmax.f32 %v3984, 0.0
    %v4009 = vmax.f32 %v3985, 0.0
    %v4010 = vmax.f32 %v3986, 0.0
    %v4011 = vmax.f32 %v3987, 0.0
    %v4012 = vmax.f32 %v3988, 0.0
    %v4013 = vmax.f32 %v3989, 0.0
    %v4014 = vmax.f32 %v3990, 0.0
    %v4015 = vmax.f32 %v3991, 0.0
    %v4016 = vmax.f32 %v3992, 0.0
    %v4017 = vmax.f32 %v3993, 0.0
    %v4018 = vmax.f32 %v3994, 0.0
    %v4019 = vmax.f32 %v3995, 0.0
    %v4020 = vmax.f32 %v3996, 0.0
    %v4021 = vmax.f32 %v3997, 0.0
    %v4022 = vmax.f32 %v3998, 0.0
    %v4023 = vmax.f32 %v3999, 0.0
    %v4024 = vmax.f32 %v4000, 0.0
    %v4025 = vmax.f32 %v4001, 0.0
    %v4026 = vmax.f32 %v4002, 0.0
    %vm4027 = vmand %vm1050, %vm1051
    %vm4028 = vmand %vm1050, %vm1052
    %vm4029 = vmand %vm1050, %vm1053
    %vm4030 = vmand %vm1050, %vm1054
    %vm4031 = vmand %vm1050, %vm1055
    %vm4032 = vmand %vm1050, %vm1056
    %vm4033 = vmand %vm1050, %vm1057
    %vm4034 = vmand %vm1050, %vm1058
    %vm4035 = vmand %vm1050, %vm1059
    %vm4036 = vmand %vm1050, %vm1060
    %vm4037 = vmand %vm1050, %vm1061
    %vm4038 = vmand %vm1050, %vm1062
    %vm4039 = vmand %vm1050, %vm1063
    %vm4040 = vmand %vm1050, %vm1064
    %vm4041 = vmand %vm1050, %vm1065
    %vm4042 = vmand %vm1050, %vm1066
    %vm4043 = vmand %vm1050, %vm1067
    %vm4044 = vmand %vm1050, %vm1068
    %vm4045 = vmand %vm1050, %vm1069
    %vm4046 = vmand %vm1050, %vm1070
    %vm4047 = vmand %vm1050, %vm1071
    %vm4048 = vmand %vm1050, %vm1072
    %vm4049 = vmand %vm1050, %vm1073
    %vm4050 = vmand %vm1050, %vm1074
    %vm4051 = vcmp.ne.s32.totalorder %v112, %v3741
    %vm4052 = vcmp.ne.s32.totalorder %v112, %v3744
    %vm4053 = vcmp.ne.s32.totalorder %v112, %v3747
    %vm4054 = vcmp.ne.s32.totalorder %v112, %v3750
    %vm4055 = vcmp.ne.s32.totalorder %v112, %v3753
    %vm4056 = vcmp.ne.s32.totalorder %v112, %v3756
    %vm4057 = vcmp.ne.s32.totalorder %v112, %v3759
    %vm4058 = vcmp.ne.s32.totalorder %v112, %v3762
    %vm4059 = vcmp.ne.s32.totalorder %v112, %v3765
    %vm4060 = vcmp.ne.s32.totalorder %v112, %v3768
    %vm4061 = vcmp.ne.s32.totalorder %v112, %v3771
    %vm4062 = vcmp.ne.s32.totalorder %v112, %v3774
    %vm4063 = vcmp.ne.s32.totalorder %v112, %v3777
    %vm4064 = vcmp.ne.s32.totalorder %v112, %v3780
    %vm4065 = vcmp.ne.s32.totalorder %v112, %v3783
    %vm4066 = vcmp.ne.s32.totalorder %v112, %v3786
    %vm4067 = vcmp.ne.s32.totalorder %v112, %v3789
    %vm4068 = vcmp.ne.s32.totalorder %v112, %v3792
    %vm4069 = vcmp.ne.s32.totalorder %v112, %v3795
    %vm4070 = vcmp.ne.s32.totalorder %v112, %v3798
    %vm4071 = vcmp.ne.s32.totalorder %v112, %v3801
    %vm4072 = vcmp.ne.s32.totalorder %v112, %v3804
    %vm4073 = vcmp.ne.s32.totalorder %v112, %v3807
    %vm4074 = vcmp.ne.s32.totalorder %v112, %v3810
    %vm4075 = vmand %vm4027, %vm4051
    %vm4076 = vmand %vm4028, %vm4052
    %vm4077 = vmand %vm4029, %vm4053
    %vm4078 = vmand %vm4030, %vm4054
    %vm4079 = vmand %vm4031, %vm4055
    %vm4080 = vmand %vm4032, %vm4056
    %vm4081 = vmand %vm4033, %vm4057
    %vm4082 = vmand %vm4034, %vm4058
    %vm4083 = vmand %vm4035, %vm4059
    %vm4084 = vmand %vm4036, %vm4060
    %vm4085 = vmand %vm4037, %vm4061
    %vm4086 = vmand %vm4038, %vm4062
    %vm4087 = vmand %vm4039, %vm4063
    %vm4088 = vmand %vm4040, %vm4064
    %vm4089 = vmand %vm4041, %vm4065
    %vm4090 = vmand %vm4042, %vm4066
    %vm4091 = vmand %vm4043, %vm4067
    %vm4092 = vmand %vm4044, %vm4068
    %vm4093 = vmand %vm4045, %vm4069
    %vm4094 = vmand %vm4046, %vm4070
    %vm4095 = vmand %vm4047, %vm4071
    %vm4096 = vmand %vm4048, %vm4072
    %vm4097 = vmand %vm4049, %vm4073
    %vm4098 = vmand %vm4050, %vm4074
    %v4099 = vsel %vm4075, %v4003, 0.0
    %v4100 = vsel %vm4076, %v4004, 0.0
    %v4101 = vsel %vm4077, %v4005, 0.0
    %v4102 = vsel %vm4078, %v4006, 0.0
    %v4103 = vsel %vm4079, %v4007, 0.0
    %v4104 = vsel %vm4080, %v4008, 0.0
    %v4105 = vsel %vm4081, %v4009, 0.0
    %v4106 = vsel %vm4082, %v4010, 0.0
    %v4107 = vsel %vm4083, %v4011, 0.0
    %v4108 = vsel %vm4084, %v4012, 0.0
    %v4109 = vsel %vm4085, %v4013, 0.0
    %v4110 = vsel %vm4086, %v4014, 0.0
    %v4111 = vsel %vm4087, %v4015, 0.0
    %v4112 = vsel %vm4088, %v4016, 0.0
    %v4113 = vsel %vm4089, %v4017, 0.0
    %v4114 = vsel %vm4090, %v4018, 0.0
    %v4115 = vsel %vm4091, %v4019, 0.0
    %v4116 = vsel %vm4092, %v4020, 0.0
    %v4117 = vsel %vm4093, %v4021, 0.0
    %v4118 = vsel %vm4094, %v4022, 0.0
    %v4119 = vsel %vm4095, %v4023, 0.0
    %v4120 = vsel %vm4096, %v4024, 0.0
    %v4121 = vsel %vm4097, %v4025, 0.0
    %v4122 = vsel %vm4098, %v4026, 0.0
    %v4123 = vadd.f32 %v4099, %v4100
    %v4124 = vadd.f32 %v4123, %v4101
    %v4125 = vadd.f32 %v4124, %v4102
    %v4126 = vadd.f32 %v4125, %v4103
    %v4127 = vadd.f32 %v4126, %v4104
    %v4128 = vadd.f32 %v4127, %v4105
    %v4129 = vadd.f32 %v4128, %v4106
    %v4130 = vadd.f32 %v4129, %v4107
    %v4131 = vadd.f32 %v4130, %v4108
    %v4132 = vadd.f32 %v4131, %v4109
    %v4133 = vadd.f32 %v4132, %v4110
    %v4134 = vadd.f32 %v4133, %v4111
    %v4135 = vadd.f32 %v4134, %v4112
    %v4136 = vadd.f32 %v4135, %v4113
    %v4137 = vadd.f32 %v4136, %v4114
    %v4138 = vadd.f32 %v4137, %v4115
    %v4139 = vadd.f32 %v4138, %v4116
    %v4140 = vadd.f32 %v4139, %v4117
    %v4141 = vadd.f32 %v4140, %v4118
    %v4142 = vadd.f32 %v4141, %v4119
    %v4143 = vadd.f32 %v4142, %v4120
    %v4144 = vadd.f32 %v4143, %v4121
    %v4145 = vadd.f32 %v4144, %v4122
    %v4146 = vrot.slane %v4145, 4
    %v4147 = vadd.f32 %v4145, %v4146
    %v4148 = vrot.slane %v4147, 2
    %v4149 = vadd.f32 %v4147, %v4148
    %v4150 = vrot.slane %v4149, 1
    %v4151 = vadd.f32 %v4149, %v4150
    %4152 = vst [vmem:[#allocation6] sm:$0x1] %v4151
    // Predicated region
    $region22: #{tpu_custom_call.1} parent=1 // pred_check
      _
    $region23: #{tpu_custom_call.1} parent=1 // pred_check_branch
      %4154 = sbr.rel (0) target = $region25
    $region24: #{tpu_custom_call.1} parent=1 // pred_region
      %s4156 = ssub.s32 32, 32
      %4157 = vsyncadd [#allocation4], %s4156
      %s4159 = sshll.u32 [#allocation5], 4
      %s4160 = int_to_ptr.vmem [resolvable:$true] %s4159
      %4162 = dma.vmem_to_hbm [thread:$0]  %s4160, 32, %s4, [#allocation4]
    $region25: #{tpu_custom_call.1} parent=1 // pred_fallthru
      _
    // Predicated region
    $region26: #{tpu_custom_call.1} parent=1 // pred_check
      _
    $region27: #{tpu_custom_call.1} parent=1 // pred_check_branch
      %4164 = sbr.rel (0) target = $region29
    $region28: #{tpu_custom_call.1} parent=1 // pred_region
      %s4166 = ssub.s32 16, 16
      %4167 = vsyncadd [#allocation7], %s4166
      %s4169 = sshll.u32 [#allocation6], 4
      %s4170 = int_to_ptr.vmem [resolvable:$true] %s4169
      %4172 = dma.vmem_to_hbm [thread:$0]  %s4170, 16, %s5, [#allocation7]
    $region29: #{tpu_custom_call.1} parent=1 // pred_fallthru
      _
    // Predicated region
    $region30: #{tpu_custom_call.1} parent=1 // pred_check
      _
    $region31: #{tpu_custom_call.1} parent=1 // pred_check_branch
      %4174 = sbr.rel (0) target = $region33
    $region32: #{tpu_custom_call.1} parent=1 // pred_region
      %4175 = dma.done [#allocation4], 32
    $region33: #{tpu_custom_call.1} parent=1 // pred_fallthru
      _
    // Predicated region
    $region34: #{tpu_custom_call.1} parent=1 // pred_check
      _
    $region35: #{tpu_custom_call.1} parent=1 // pred_check_branch
      %4177 = sbr.rel (0) target = $region37
    $region36: #{tpu_custom_call.1} parent=1 // pred_region
      %4178 = dma.done [#allocation7], 16
    $region37: #{tpu_custom_call.1} parent=1 // pred_fallthru
      _
    %4179 = vsyncpa [#allocation3], 1
    %4180 = vsyncpa [#allocation4], 1
    %4181 = vsyncpa [#allocation7], 1

</llo_original>
